<compile_context>
chip_gen: v7x
topology: tpu7x:2x2x1
jax: 0.10.0
libtpu: 0.0.40
codegen_flags: <defaults>
</compile_context>

<pallas_src>
import functools
import math

import jax
import jax.numpy as jnp
from jax import lax
from jax.experimental import pallas as pl
from jax.experimental.pallas import tpu as pltpu


# ---------------------------------------------------------------------------
# Small helpers
# ---------------------------------------------------------------------------
def _round_up(x, m):
    return -(-x // m) * m


def _vmem_capacity_bytes():
    """Physical VMEM per TensorCore (64 MiB fallback keeps v7x safe)."""
    try:
        info = pltpu.get_tpu_info()
        cap = getattr(info, "vmem_capacity_bytes", None)
        if cap:
            return int(cap)
    except Exception:
        pass
    return 64 * 1024 * 1024


def _vmem_bytes(ct, n, src_dims, hp, cdt_bytes):
    """Conservative VMEM estimate: lane/sublane padding + double-buffering included."""
    sub_c = 8 if cdt_bytes >= 4 else 16   # sublane packing of the compute dtype

    def arr(rows, cols, nbytes, sub=8):
        return _round_up(max(rows, 1), sub) * _round_up(cols, 128) * nbytes

    xb = sum(2 * 2 * arr(ct * n, d, cdt_bytes, sub_c) for d in src_dims)   # fwd+bwd streams, 2 bufs
    ob = 2 * 2 * arr(ct * n, hp, 4)                                        # two f32 outputs, 2 bufs
    gx = 2 * arr(ct * n, 3 * hp, 4)                                        # f32 gate scratch
    wih = 2 * sum(2 * arr(d, 3 * hp, cdt_bytes, sub_c) for d in src_dims)  # counted 2x for headroom
    whh = 2 * arr(2 * hp, 6 * hp, cdt_bytes, sub_c)
    bias = 2 * (2 * arr(1, 3 * hp, 4) + 2 * arr(1, hp, 4))
    hsc = arr(n, 2 * hp, 4)
    return xb + ob + gx + wih + whh + bias + hsc


def _pick_chunk(T, n, src_dims, hp, budget, cdt_bytes, chunk_t, need_align16):
    """Pick time-chunk CT; returns (CT, pad, num_chunks). Pads T instead of CT=1 cliff."""
    if chunk_t is not None:
        ct = max(1, min(int(chunk_t), T))
    else:
        b1 = _vmem_bytes(1, n, src_dims, hp, cdt_bytes)
        b2 = _vmem_bytes(2, n, src_dims, hp, cdt_bytes)
        per = max(b2 - b1, 1)
        fixed = b1 - per
        ct = int(max(1, min(T, (budget - fixed) // per)))
        # Prefer a divisor of T close to the budget-derived chunk -> avoids tail padding.
        for d in range(ct, max(1, (ct * 3) // 4) - 1, -1):
            if T % d == 0:
                ct = d
                break
    pad = (-T) % ct
    C = (T + pad) // ct
    if C > 1 and need_align16 and (ct * n) % 16:
        ct = min(ct + 1, T)          # make bf16 chunk rows a multiple of 16
        pad = (-T) % ct
        C = (T + pad) // ct
    return ct, pad, C


# ---------------------------------------------------------------------------
# Kernel: one bidirectional GRU layer, grid over time chunks.
# ---------------------------------------------------------------------------
def _bigru_layer_kernel(*refs, num_srcs, chunk_t, batch, hidden_p, compute_dtype):
    """Refs layout (inputs, then outputs, then scratch):

      inputs : [for each source s: x_s(fwd-stream chunk), x_s(bwd-stream chunk)]  2*num_srcs
               [for each source s: W_ih_fwd_s, W_ih_bwd_s]                        2*num_srcs
               W_hh_blockdiag, bi_fwd, bi_bwd, bhn_fwd, bhn_bwd                   5
      outputs: out_fwd (chunk i), out_bwd (chunk C-1-i)                           2
      scratch: gx_fwd, gx_bwd, h_cat                                              3
    """
    Hp, N, CT = hidden_p, batch, chunk_t
    nx = 2 * num_srcs
    x_refs = refs[:nx]
    wih_refs = refs[nx:2 * nx]
    whh_ref, bi_f_ref, bi_b_ref, bhn_f_ref, bhn_b_ref = refs[2 * nx:2 * nx + 5]
    out_f_ref, out_b_ref = refs[2 * nx + 5:2 * nx + 7]
    gxf_scr, gxb_scr, h_scr = refs[2 * nx + 7:2 * nx + 10]

    i = pl.program_id(0)

    # Cross-chunk hidden state (fwd | bwd concatenated) lives in VMEM scratch.
    @pl.when(i == 0)
    def _():
        h_scr[...] = jnp.zeros_like(h_scr)

    # ---- Chunk-wide input projections: one fused (CT*N, D) @ (D, 3Hp) matmul per
    # direction per source (bf16 operands, f32 accumulation).  The recurrent r/z
    # biases were folded into bi_* at prep time.
    gf = jnp.dot(x_refs[0][...], wih_refs[0][...], preferred_element_type=jnp.float32)
    gb = jnp.dot(x_refs[1][...], wih_refs[1][...], preferred_element_type=jnp.float32)
    for s in range(1, num_srcs):
        gf = gf + jnp.dot(x_refs[2 * s][...], wih_refs[2 * s][...],
                          preferred_element_type=jnp.float32)
        gb = gb + jnp.dot(x_refs[2 * s + 1][...], wih_refs[2 * s + 1][...],
                          preferred_element_type=jnp.float32)
    gxf_scr[...] = gf + bi_f_ref[...]
    gxb_scr[...] = gb + bi_b_ref[...]

    # Hoist loop-invariant loads / broadcasts out of the serial recurrence.
    whh = whh_ref[...]                                   # (2Hp, 6Hp) block-diagonal
    bhn_f = jnp.broadcast_to(bhn_f_ref[...], (N, Hp))
    bhn_b = jnp.broadcast_to(bhn_b_ref[...], (N, Hp))

    def sigmoid(v):                                      # one tanh (EUP) per gate
        return 0.5 * (jnp.tanh(0.5 * v) + 1.0)

    def step(s, h):                                      # h: (N, 2Hp) f32, vreg-resident
        rowf = pl.multiple_of(s * N, N)                  # fwd: in-chunk time s
        rowb = pl.multiple_of((CT - 1 - s) * N, N)       # bwd: reversed in chunk

        gf_t = gxf_scr[pl.ds(rowf, N), :]                # (N, 3Hp) [r|z|n]
        gb_t = gxb_scr[pl.ds(rowb, N), :]

        # ONE fused block-diagonal recurrent matmul for both directions.
        rec = jnp.dot(h.astype(compute_dtype), whh, preferred_element_type=jnp.float32)
        hf, hb = h[:, :Hp], h[:, Hp:]
        rec_f, rec_b = rec[:, :3 * Hp], rec[:, 3 * Hp:]

        # PyTorch GRU equations (r, z, n gate order); all slices 128-lane aligned.
        rz_f = sigmoid(gf_t[:, :2 * Hp] + rec_f[:, :2 * Hp])
        n_f = jnp.tanh(gf_t[:, 2 * Hp:] + rz_f[:, :Hp] * (rec_f[:, 2 * Hp:] + bhn_f))
        hf_new = n_f + rz_f[:, Hp:] * (hf - n_f)         # == (1-z)*n + z*h

        rz_b = sigmoid(gb_t[:, :2 * Hp] + rec_b[:, :2 * Hp])
        n_b = jnp.tanh(gb_t[:, 2 * Hp:] + rz_b[:, :Hp] * (rec_b[:, 2 * Hp:] + bhn_b))
        hb_new = n_b + rz_b[:, Hp:] * (hb - n_b)

        out_f_ref[pl.ds(rowf, N), :] = hf_new            # lane-dense (N, Hp) stores
        out_b_ref[pl.ds(rowb, N), :] = hb_new
        return jnp.concatenate([hf_new, hb_new], axis=-1)

    # unroll=2 was the best measured point; sweep 2->4 only after checking spills.
    h_scr[...] = lax.fori_loop(0, CT, step, h_scr[...], unroll=2)


# ---------------------------------------------------------------------------
# Parameter prep (PyTorch nn.GRU layout -> kernel layout, lane-padded to Hp)
# ---------------------------------------------------------------------------
def _prep_layer_params(raw_f, raw_b, num_srcs, hidden, hidden_p, compute_dtype):
    H, Hp = hidden, hidden_p

    def pad_gate_cols(w):                                # (..., 3H) -> (..., 3Hp)
        if Hp == H:
            return w
        pz = jnp.zeros(w.shape[:-1] + (Hp - H,), w.dtype)
        return jnp.concatenate([w[..., :H], pz, w[..., H:2 * H], pz, w[..., 2 * H:], pz],
                               axis=-1)

    def pad_rows(w, rows):
        if w.shape[0] == rows:
            return w
        return jnp.concatenate(
            [w, jnp.zeros((rows - w.shape[0],) + w.shape[1:], w.dtype)], axis=0)

    def prep(raw):
        w_ih, w_hh, b_ih, b_hh = raw
        wih = pad_gate_cols(w_ih.T)                      # (Din, 3Hp), cols [r|z|n]
        whh = pad_gate_cols(pad_rows(w_hh.T, Hp))        # (Hp, 3Hp)
        # Fold recurrent r/z biases into the input-side bias (added once per chunk).
        bi = pad_gate_cols((b_ih.at[:2 * H].add(b_hh[:2 * H])).reshape(1, 3 * H))
        bhn = b_hh[2 * H:].reshape(1, H)
        if Hp != H:
            bhn = jnp.concatenate([bhn, jnp.zeros((1, Hp - H), bhn.dtype)], axis=-1)
        if num_srcs == 1:
            wih_srcs = [wih]
        else:
            # Previous layer output is [out_fwd | out_bwd]; split rows so the concat
            # never has to be materialized in HBM.
            wih_srcs = [pad_rows(wih[:H], Hp), pad_rows(wih[H:], Hp)]
        wih_srcs = [w.astype(compute_dtype) for w in wih_srcs]
        return wih_srcs, whh, bi, bhn

    wihs_f, whh_f, bi_f, bhn_f = prep(raw_f)
    wihs_b, whh_b, bi_b, bhn_b = prep(raw_b)
    z = jnp.zeros((Hp, 3 * Hp), whh_f.dtype)
    whh_blk = jnp.concatenate(                            # block-diag (2Hp, 6Hp)
        [jnp.concatenate([whh_f, z], axis=-1),
         jnp.concatenate([z, whh_b], axis=-1)], axis=0).astype(compute_dtype)
    return wihs_f, wihs_b, whh_blk, bi_f, bi_b, bhn_f, bhn_b


# ---------------------------------------------------------------------------
# One bidirectional GRU layer (both directions in a single pallas_call)
# ---------------------------------------------------------------------------
_WEIGHT_SINGLE_BUFFER = None     # one-time probe: does this jax accept pl.Buffered(1)?


def bigru_layer_pallas(x_srcs, raw_f, raw_b, hidden, chunk_t=None,
                       vmem_budget_bytes=None, compute_dtype=jnp.bfloat16):
    global _WEIGHT_SINGLE_BUFFER

    T, N = int(x_srcs[0].shape[0]), int(x_srcs[0].shape[1])
    assert N % 8 == 0, "batch must be a multiple of 8 (f32 sublane alignment)"
    H = int(hidden)
    Hp = _round_up(H, 128)                               # lane-aligned gate width
    num_srcs = len(x_srcs)
    src_dims = [int(xs.shape[-1]) for xs in x_srcs]
    cdt_bytes = jnp.dtype(compute_dtype).itemsize

    cap = _vmem_capacity_bytes()
    budget = (int(cap * 3) // 4) if vmem_budget_bytes is None else int(vmem_budget_bytes)

    need_align16 = (cdt_bytes == 2) and (N % 16 != 0)
    CT, pad, C = _pick_chunk(T, N, src_dims, Hp, budget, cdt_bytes, chunk_t, need_align16)
    T_pad = T + pad

    (wihs_f, wihs_b, whh_blk, bi_f, bi_b, bhn_f, bhn_b) = _prep_layer_params(
        raw_f, raw_b, num_srcs, H, Hp, compute_dtype)

    # Fwd stream: pad at the END.  Bwd stream: pad at the FRONT so its recurrence
    # starts exactly at the true last timestep (pad steps are processed after all
    # real data and the corresponding output rows are sliced off).
    x_f_flats, x_b_flats = [], []
    for xs, d in zip(x_srcs, src_dims):
        xc = xs.astype(compute_dtype)
        if pad:
            z = jnp.zeros((pad, N, d), xc.dtype)
            xf = jnp.concatenate([xc, z], axis=0)
            xb = jnp.concatenate([z, xc], axis=0)
        else:
            xf = xb = xc
        x_f_flats.append(xf.reshape(T_pad * N, d))
        x_b_flats.append(xb.reshape(T_pad * N, d))

    est = _vmem_bytes(CT, N, src_dims, Hp, cdt_bytes)
    vmem_limit = min(int(cap * 7) // 8, max(est + est // 4 + (8 << 20), 16 << 20))

    kernel = functools.partial(_bigru_layer_kernel, num_srcs=num_srcs, chunk_t=CT,
                               batch=N, hidden_p=Hp, compute_dtype=compute_dtype)

    def build_and_call(single_buffer):
        def const_spec(shape):
            if single_buffer:
                # Loop-invariant weights/biases: single VMEM buffer (no double-buffer).
                return pl.BlockSpec(shape, lambda i: (0, 0), pipeline_mode=pl.Buffered(1))
            return pl.BlockSpec(shape, lambda i: (0, 0))

        inputs, in_specs = [], []
        for xf, xb, d in zip(x_f_flats, x_b_flats, src_dims):
            inputs += [xf, xb]
            in_specs += [pl.BlockSpec((CT * N, d), lambda i: (i, 0)),
                         pl.BlockSpec((CT * N, d), lambda i: (C - 1 - i, 0))]
        for s in range(num_srcs):
            inputs += [wihs_f[s], wihs_b[s]]
            in_specs += [const_spec(wihs_f[s].shape), const_spec(wihs_b[s].shape)]
        for a in (whh_blk, bi_f, bi_b, bhn_f, bhn_b):
            inputs.append(a)
            in_specs.append(const_spec(a.shape))

        out_shape = (jax.ShapeDtypeStruct((T_pad * N, Hp), jnp.float32),
                     jax.ShapeDtypeStruct((T_pad * N, Hp), jnp.float32))
        out_specs = (pl.BlockSpec((CT * N, Hp), lambda i: (i, 0)),
                     pl.BlockSpec((CT * N, Hp), lambda i: (C - 1 - i, 0)))
        scratch_shapes = [
            pltpu.VMEM((CT * N, 3 * Hp), jnp.float32),   # gx fwd chunk
            pltpu.VMEM((CT * N, 3 * Hp), jnp.float32),   # gx bwd chunk
            pltpu.VMEM((N, 2 * Hp), jnp.float32),        # h (fwd|bwd), cross-chunk carry
        ]
        return pl.pallas_call(
            kernel,
            grid=(C,),
            out_shape=out_shape,
            in_specs=in_specs,
            out_specs=out_specs,
            scratch_shapes=scratch_shapes,
            compiler_params=pltpu.CompilerParams(
                dimension_semantics=("arbitrary",),       # sequential recurrence over chunks
                vmem_limit_bytes=int(vmem_limit)),
        )(*inputs)

    modes = [True, False] if _WEIGHT_SINGLE_BUFFER is None else [_WEIGHT_SINGLE_BUFFER]
    last_err = None
    for sb in modes:
        try:
            out_f, out_b = build_and_call(sb)
            if _WEIGHT_SINGLE_BUFFER is None:
                jax.block_until_ready((out_f, out_b))     # probe compile+run once
                _WEIGHT_SINGLE_BUFFER = sb
            out_f = out_f.reshape(T_pad, N, Hp)[:T]       # drop fwd tail padding
            out_b = out_b.reshape(T_pad, N, Hp)[pad:]     # drop bwd front padding
            return out_f, out_b
        except Exception as e:                            # fall back to default buffering
            last_err = e
    raise last_err


def tds_gru_encoder_forward(x, raw_params, hidden, chunk_t=None,
                            compute_dtype=jnp.bfloat16):
    """Bidirectional multi-layer GRU; returns last layer's output (T, N, 2H)."""
    srcs = [x]
    for raw_f, raw_b in raw_params:
        out_f, out_b = bigru_layer_pallas(srcs, raw_f, raw_b, hidden,
                                          chunk_t=chunk_t, compute_dtype=compute_dtype)
        srcs = [out_f, out_b]        # next layer consumes the two (lane-padded) halves
    H = int(hidden)
    return jnp.concatenate([srcs[0][..., :H], srcs[1][..., :H]], axis=-1)


# ---------------------------------------------------------------------------
# Deterministic parameter init (nn.GRU shapes; U(-1/sqrt(H), 1/sqrt(H)))
# ---------------------------------------------------------------------------
def init_gru_params(key, num_features, hidden, num_layers):
    k = 1.0 / math.sqrt(hidden)
    params = []
    for layer in range(num_layers):
        in_size = num_features if layer == 0 else 2 * hidden
        dirs = []
        for _ in range(2):
            key, k1, k2, k3, k4 = jax.random.split(key, 5)
            w_ih = jax.random.uniform(k1, (3 * hidden, in_size), jnp.float32, -k, k)
            w_hh = jax.random.uniform(k2, (3 * hidden, hidden), jnp.float32, -k, k)
            b_ih = jax.random.uniform(k3, (3 * hidden,), jnp.float32, -k, k)
            b_hh = jax.random.uniform(k4, (3 * hidden,), jnp.float32, -k, k)
            dirs.append((w_ih, w_hh, b_ih, b_hh))
        params.append(tuple(dirs))
    return params


# ---------------------------------------------------------------------------
# Pure-JAX reference (mirrors torch.nn.GRU forward) for correctness checking
# ---------------------------------------------------------------------------
def _gru_dir_ref(x, raw, hidden):
    w_ih, w_hh, b_ih, b_hh = raw
    wir, wiz, win = [w.T for w in jnp.split(w_ih, 3, axis=0)]
    whr, whz, whn = [w.T for w in jnp.split(w_hh, 3, axis=0)]
    bir, biz, bin_ = jnp.split(b_ih, 3)
    bhr, bhz, bhn = jnp.split(b_hh, 3)
    N = x.shape[1]

    def step(h, xt):
        r = jax.nn.sigmoid(xt @ wir + bir + h @ whr + bhr)
        z = jax.nn.sigmoid(xt @ wiz + biz + h @ whz + bhz)
        n = jnp.tanh(xt @ win + bin_ + r * (h @ whn + bhn))
        h_new = (1.0 - z) * n + z * h
        return h_new, h_new

    h0 = jnp.zeros((N, hidden), jnp.float32)
    _, ys = lax.scan(step, h0, x)
    return ys


def tds_gru_encoder_ref(x, raw_params, hidden):
    h = x
    for raw_f, raw_b in raw_params:
        out_f = _gru_dir_ref(h, raw_f, hidden)
        out_b = _gru_dir_ref(h[::-1], raw_b, hidden)[::-1]
        h = jnp.concatenate([out_f, out_b], axis=-1)
    return h


if __name__ == "__main__":
    # Small shapes: seq=8, batch=8, num_features=16, gru_hidden_size=32, 2 layers.
    T, N, F, H, L = 8, 8, 16, 32, 2
    key = jax.random.PRNGKey(0)
    key, xk = jax.random.split(key)
    x = jax.random.normal(xk, (T, N, F), dtype=jnp.float32)
    params = init_gru_params(key, F, H, L)

    ref = tds_gru_encoder_ref(x, params, H)

    # (1) f32 path, CT=2: exercises the chunked pipeline + cross-chunk hidden carry.
    out = jax.block_until_ready(
        tds_gru_encoder_forward(x, params, H, chunk_t=2, compute_dtype=jnp.float32))
    assert out.shape == (T, N, 2 * H), out.shape
    err = float(jnp.max(jnp.abs(out - ref)))
    assert err < 2e-4, f"f32/chunk=2 mismatch vs reference: {err}"

    # (2) f32 path, CT=3 (does not divide T=8): exercises the pad/tail path.
    out = jax.block_until_ready(
        tds_gru_encoder_forward(x, params, H, chunk_t=3, compute_dtype=jnp.float32))
    err = float(jnp.max(jnp.abs(out - ref)))
    assert err < 2e-4, f"f32/chunk=3 (padded) mismatch vs reference: {err}"

    # (3) bf16 MXU-operand path (default), auto chunk sizing from VMEM capacity.
    out = jax.block_until_ready(tds_gru_encoder_forward(x, params, H))
    err = float(jnp.max(jnp.abs(out - ref)))
    assert err < 5e-2, f"bf16 mismatch vs reference: {err}"

    print("KERNEL_OK")
</pallas_src>

<mosaic_0001>
module attributes {stable_mosaic.version = 11 : i64} {
  func.func @_bigru_layer_kernel(%arg0: i32, %arg1: memref<16x16xf32, #tpu.memory_space<vmem>>, %arg2: memref<16x16xf32, #tpu.memory_space<vmem>>, %arg3: memref<16x384xf32, #tpu.memory_space<vmem>>, %arg4: memref<16x384xf32, #tpu.memory_space<vmem>>, %arg5: memref<256x768xf32, #tpu.memory_space<vmem>>, %arg6: memref<1x384xf32, #tpu.memory_space<vmem>>, %arg7: memref<1x384xf32, #tpu.memory_space<vmem>>, %arg8: memref<1x128xf32, #tpu.memory_space<vmem>>, %arg9: memref<1x128xf32, #tpu.memory_space<vmem>>, %arg10: memref<16x128xf32, #tpu.memory_space<vmem>>, %arg11: memref<16x128xf32, #tpu.memory_space<vmem>>, %arg12: memref<16x384xf32, #tpu.memory_space<vmem>>, %arg13: memref<16x384xf32, #tpu.memory_space<vmem>>, %arg14: memref<8x256xf32, #tpu.memory_space<vmem>>) attributes {dimension_semantics = [#tpu.dimension_semantics<arbitrary>], iteration_bounds = array<i64: 4>, scalar_prefetch = 0 : i64, scratch_operands = 3 : i64, tpu.core_type = #tpu.core_type<tc>, window_params = [{transform_indices = @transform_0, window_bounds = array<i64: 16, 16>}, {transform_indices = @transform_1, window_bounds = array<i64: 16, 16>}, {pipeline_mode = #tpu.pipeline_mode<synchronous>, transform_indices = @transform_2, window_bounds = array<i64: 16, 384>}, {pipeline_mode = #tpu.pipeline_mode<synchronous>, transform_indices = @transform_3, window_bounds = array<i64: 16, 384>}, {pipeline_mode = #tpu.pipeline_mode<synchronous>, transform_indices = @transform_4, window_bounds = array<i64: 256, 768>}, {pipeline_mode = #tpu.pipeline_mode<synchronous>, transform_indices = @transform_5, window_bounds = array<i64: 1, 384>}, {pipeline_mode = #tpu.pipeline_mode<synchronous>, transform_indices = @transform_6, window_bounds = array<i64: 1, 384>}, {pipeline_mode = #tpu.pipeline_mode<synchronous>, transform_indices = @transform_7, window_bounds = array<i64: 1, 128>}, {pipeline_mode = #tpu.pipeline_mode<synchronous>, transform_indices = @transform_8, window_bounds = array<i64: 1, 128>}, {transform_indices = @transform_9, window_bounds = array<i64: 16, 128>}, {transform_indices = @transform_10, window_bounds = array<i64: 16, 128>}]} {
    %c0_i32 = arith.constant 0 : i32
    %0 = arith.cmpi eq, %arg0, %c0_i32 : i32
    %1 = arith.extui %0 : i1 to i32
    %c0_i32_0 = arith.constant 0 : i32
    %2 = arith.cmpi ne, %1, %c0_i32_0 : i32
    scf.if %2 {
      %cst_55 = arith.constant 0.000000e+00 : f32
      %148 = vector.broadcast %cst_55 : f32 to vector<8x256xf32>
      %c0_56 = arith.constant 0 : index
      %c0_57 = arith.constant 0 : index
      %149 = vector.load %arg14[%c0_56, %c0_57] : memref<8x256xf32, #tpu.memory_space<vmem>>, vector<8x256xf32>
      tpu.vector_store %arg14[%c0_56, %c0_57], %148 {strides = array<i32>} : memref<8x256xf32, #tpu.memory_space<vmem>>, vector<8x256xf32>,
    } else {
    }
    %c0 = arith.constant 0 : index
    %c0_1 = arith.constant 0 : index
    %3 = vector.load %arg1[%c0, %c0_1] : memref<16x16xf32, #tpu.memory_space<vmem>>, vector<16x16xf32>
    %c0_2 = arith.constant 0 : index
    %c0_3 = arith.constant 0 : index
    %4 = vector.load %arg3[%c0_2, %c0_3] : memref<16x384xf32, #tpu.memory_space<vmem>>, vector<16x384xf32>
    %cst = arith.constant dense<0.000000e+00> : vector<16x384xf32>
    %5 = tpu.matmul %3, %4, %cst {dimension_numbers = #tpu.dot_dimension_numbers<[1], [0], [0], [1], [0, 0, 1, 1], [], []>} : vector<16x16xf32>, vector<16x384xf32>, vector<16x384xf32> -> vector<16x384xf32>
    %c0_4 = arith.constant 0 : index
    %c0_5 = arith.constant 0 : index
    %6 = vector.load %arg2[%c0_4, %c0_5] : memref<16x16xf32, #tpu.memory_space<vmem>>, vector<16x16xf32>
    %c0_6 = arith.constant 0 : index
    %c0_7 = arith.constant 0 : index
    %7 = vector.load %arg4[%c0_6, %c0_7] : memref<16x384xf32, #tpu.memory_space<vmem>>, vector<16x384xf32>
    %cst_8 = arith.constant dense<0.000000e+00> : vector<16x384xf32>
    %8 = tpu.matmul %6, %7, %cst_8 {dimension_numbers = #tpu.dot_dimension_numbers<[1], [0], [0], [1], [0, 0, 1, 1], [], []>} : vector<16x16xf32>, vector<16x384xf32>, vector<16x384xf32> -> vector<16x384xf32>
    %c0_9 = arith.constant 0 : index
    %c0_10 = arith.constant 0 : index
    %9 = vector.load %arg6[%c0_9, %c0_10] : memref<1x384xf32, #tpu.memory_space<vmem>>, vector<1x384xf32>
    %10 = vector.broadcast %9 : vector<1x384xf32> to vector<16x384xf32>
    %11 = arith.addf %5, %10 : vector<16x384xf32>
    %c0_11 = arith.constant 0 : index
    %c0_12 = arith.constant 0 : index
    %12 = vector.load %arg12[%c0_11, %c0_12] : memref<16x384xf32, #tpu.memory_space<vmem>>, vector<16x384xf32>
    tpu.vector_store %arg12[%c0_11, %c0_12], %11 {strides = array<i32>} : memref<16x384xf32, #tpu.memory_space<vmem>>, vector<16x384xf32>,
    %c0_13 = arith.constant 0 : index
    %c0_14 = arith.constant 0 : index
    %13 = vector.load %arg7[%c0_13, %c0_14] : memref<1x384xf32, #tpu.memory_space<vmem>>, vector<1x384xf32>
    %14 = vector.broadcast %13 : vector<1x384xf32> to vector<16x384xf32>
    %15 = arith.addf %8, %14 : vector<16x384xf32>
    %c0_15 = arith.constant 0 : index
    %c0_16 = arith.constant 0 : index
    %16 = vector.load %arg13[%c0_15, %c0_16] : memref<16x384xf32, #tpu.memory_space<vmem>>, vector<16x384xf32>
    tpu.vector_store %arg13[%c0_15, %c0_16], %15 {strides = array<i32>} : memref<16x384xf32, #tpu.memory_space<vmem>>, vector<16x384xf32>,
    %c0_17 = arith.constant 0 : index
    %c0_18 = arith.constant 0 : index
    %17 = vector.load %arg5[%c0_17, %c0_18] : memref<256x768xf32, #tpu.memory_space<vmem>>, vector<256x768xf32>
    %c0_19 = arith.constant 0 : index
    %c0_20 = arith.constant 0 : index
    %18 = vector.load %arg8[%c0_19, %c0_20] : memref<1x128xf32, #tpu.memory_space<vmem>>, vector<1x128xf32>
    %19 = vector.shape_cast %18 : vector<1x128xf32> to vector<1x128xf32>
    %20 = vector.broadcast %19 : vector<1x128xf32> to vector<8x128xf32>
    %c0_21 = arith.constant 0 : index
    %c0_22 = arith.constant 0 : index
    %21 = vector.load %arg9[%c0_21, %c0_22] : memref<1x128xf32, #tpu.memory_space<vmem>>, vector<1x128xf32>
    %22 = vector.shape_cast %21 : vector<1x128xf32> to vector<1x128xf32>
    %23 = vector.broadcast %22 : vector<1x128xf32> to vector<8x128xf32>
    %c0_23 = arith.constant 0 : index
    %c0_24 = arith.constant 0 : index
    %24 = vector.load %arg14[%c0_23, %c0_24] : memref<8x256xf32, #tpu.memory_space<vmem>>, vector<8x256xf32>
    %c0_i32_25 = arith.constant 0 : i32
    %c8_i32 = arith.constant 8 : i32
    %25 = arith.muli %c0_i32_25, %c8_i32 : i32
    %26 = tpu.assume_multiple %25, 8 : i32
    %c1_i32 = arith.constant 1 : i32
    %27 = arith.subi %c1_i32, %c0_i32_25 : i32
    %c8_i32_26 = arith.constant 8 : i32
    %28 = arith.muli %27, %c8_i32_26 : i32
    %29 = tpu.assume_multiple %28, 8 : i32
    %30 = arith.index_cast %26 : i32 to index
    %c0_27 = arith.constant 0 : index
    %31 = vector.load %arg12[%30, %c0_27] : memref<16x384xf32, #tpu.memory_space<vmem>>, vector<8x384xf32>
    %32 = arith.index_cast %29 : i32 to index
    %c0_28 = arith.constant 0 : index
    %33 = vector.load %arg13[%32, %c0_28] : memref<16x384xf32, #tpu.memory_space<vmem>>, vector<8x384xf32>
    %cst_29 = arith.constant dense<0.000000e+00> : vector<8x768xf32>
    %34 = tpu.matmul %24, %17, %cst_29 {dimension_numbers = #tpu.dot_dimension_numbers<[1], [0], [0], [1], [0, 0, 1, 1], [], []>} : vector<8x256xf32>, vector<256x768xf32>, vector<8x768xf32> -> vector<8x768xf32>
    %35 = vector.extract_strided_slice %24 {offsets = [0, 0], sizes = [8, 128], strides = [1, 1]} : vector<8x256xf32> to vector<8x128xf32>
    %36 = vector.extract_strided_slice %24 {offsets = [0, 128], sizes = [8, 128], strides = [1, 1]} : vector<8x256xf32> to vector<8x128xf32>
    %37 = vector.extract_strided_slice %34 {offsets = [0, 0], sizes = [8, 384], strides = [1, 1]} : vector<8x768xf32> to vector<8x384xf32>
    %38 = vector.extract_strided_slice %34 {offsets = [0, 384], sizes = [8, 384], strides = [1, 1]} : vector<8x768xf32> to vector<8x384xf32>
    %39 = vector.extract_strided_slice %31 {offsets = [0, 0], sizes = [8, 256], strides = [1, 1]} : vector<8x384xf32> to vector<8x256xf32>
    %40 = vector.extract_strided_slice %37 {offsets = [0, 0], sizes = [8, 256], strides = [1, 1]} : vector<8x384xf32> to vector<8x256xf32>
    %41 = arith.addf %39, %40 : vector<8x256xf32>
    %cst_30 = arith.constant 5.000000e-01 : f32
    %42 = vector.broadcast %cst_30 : f32 to vector<8x256xf32>
    %43 = arith.mulf %42, %41 : vector<8x256xf32>
    %44 = math.tanh %43 : vector<8x256xf32>
    %cst_31 = arith.constant 1.000000e+00 : f32
    %45 = vector.broadcast %cst_31 : f32 to vector<8x256xf32>
    %46 = arith.addf %44, %45 : vector<8x256xf32>
    %cst_32 = arith.constant 5.000000e-01 : f32
    %47 = vector.broadcast %cst_32 : f32 to vector<8x256xf32>
    %48 = arith.mulf %47, %46 : vector<8x256xf32>
    %49 = vector.extract_strided_slice %31 {offsets = [0, 256], sizes = [8, 128], strides = [1, 1]} : vector<8x384xf32> to vector<8x128xf32>
    %50 = vector.extract_strided_slice %48 {offsets = [0, 0], sizes = [8, 128], strides = [1, 1]} : vector<8x256xf32> to vector<8x128xf32>
    %51 = vector.extract_strided_slice %37 {offsets = [0, 256], sizes = [8, 128], strides = [1, 1]} : vector<8x384xf32> to vector<8x128xf32>
    %52 = arith.addf %51, %20 : vector<8x128xf32>
    %53 = arith.mulf %50, %52 : vector<8x128xf32>
    %54 = arith.addf %49, %53 : vector<8x128xf32>
    %55 = math.tanh %54 : vector<8x128xf32>
    %56 = vector.extract_strided_slice %48 {offsets = [0, 128], sizes = [8, 128], strides = [1, 1]} : vector<8x256xf32> to vector<8x128xf32>
    %57 = arith.subf %35, %55 : vector<8x128xf32>
    %58 = arith.mulf %56, %57 : vector<8x128xf32>
    %59 = arith.addf %55, %58 : vector<8x128xf32>
    %60 = vector.extract_strided_slice %33 {offsets = [0, 0], sizes = [8, 256], strides = [1, 1]} : vector<8x384xf32> to vector<8x256xf32>
    %61 = vector.extract_strided_slice %38 {offsets = [0, 0], sizes = [8, 256], strides = [1, 1]} : vector<8x384xf32> to vector<8x256xf32>
    %62 = arith.addf %60, %61 : vector<8x256xf32>
    %cst_33 = arith.constant 5.000000e-01 : f32
    %63 = vector.broadcast %cst_33 : f32 to vector<8x256xf32>
    %64 = arith.mulf %63, %62 : vector<8x256xf32>
    %65 = math.tanh %64 : vector<8x256xf32>
    %cst_34 = arith.constant 1.000000e+00 : f32
    %66 = vector.broadcast %cst_34 : f32 to vector<8x256xf32>
    %67 = arith.addf %65, %66 : vector<8x256xf32>
    %cst_35 = arith.constant 5.000000e-01 : f32
    %68 = vector.broadcast %cst_35 : f32 to vector<8x256xf32>
    %69 = arith.mulf %68, %67 : vector<8x256xf32>
    %70 = vector.extract_strided_slice %33 {offsets = [0, 256], sizes = [8, 128], strides = [1, 1]} : vector<8x384xf32> to vector<8x128xf32>
    %71 = vector.extract_strided_slice %69 {offsets = [0, 0], sizes = [8, 128], strides = [1, 1]} : vector<8x256xf32> to vector<8x128xf32>
    %72 = vector.extract_strided_slice %38 {offsets = [0, 256], sizes = [8, 128], strides = [1, 1]} : vector<8x384xf32> to vector<8x128xf32>
    %73 = arith.addf %72, %23 : vector<8x128xf32>
    %74 = arith.mulf %71, %73 : vector<8x128xf32>
    %75 = arith.addf %70, %74 : vector<8x128xf32>
    %76 = math.tanh %75 : vector<8x128xf32>
    %77 = vector.extract_strided_slice %69 {offsets = [0, 128], sizes = [8, 128], strides = [1, 1]} : vector<8x256xf32> to vector<8x128xf32>
    %78 = arith.subf %36, %76 : vector<8x128xf32>
    %79 = arith.mulf %77, %78 : vector<8x128xf32>
    %80 = arith.addf %76, %79 : vector<8x128xf32>
    %81 = arith.index_cast %26 : i32 to index
    %c0_36 = arith.constant 0 : index
    %82 = vector.load %arg10[%81, %c0_36] : memref<16x128xf32, #tpu.memory_space<vmem>>, vector<8x128xf32>
    tpu.vector_store %arg10[%81, %c0_36], %59 {strides = array<i32>} : memref<16x128xf32, #tpu.memory_space<vmem>>, vector<8x128xf32>,
    %83 = arith.index_cast %29 : i32 to index
    %c0_37 = arith.constant 0 : index
    %84 = vector.load %arg11[%83, %c0_37] : memref<16x128xf32, #tpu.memory_space<vmem>>, vector<8x128xf32>
    tpu.vector_store %arg11[%83, %c0_37], %80 {strides = array<i32>} : memref<16x128xf32, #tpu.memory_space<vmem>>, vector<8x128xf32>,
    %85 = tpu.concatenate %59, %80 in 1 : vector<8x128xf32>, vector<8x128xf32> -> vector<8x256xf32>
    %c1_i32_38 = arith.constant 1 : i32
    %c8_i32_39 = arith.constant 8 : i32
    %86 = arith.muli %c1_i32_38, %c8_i32_39 : i32
    %87 = tpu.assume_multiple %86, 8 : i32
    %c1_i32_40 = arith.constant 1 : i32
    %88 = arith.subi %c1_i32_40, %c1_i32_38 : i32
    %c8_i32_41 = arith.constant 8 : i32
    %89 = arith.muli %88, %c8_i32_41 : i32
    %90 = tpu.assume_multiple %89, 8 : i32
    %91 = arith.index_cast %87 : i32 to index
    %c0_42 = arith.constant 0 : index
    %92 = vector.load %arg12[%91, %c0_42] : memref<16x384xf32, #tpu.memory_space<vmem>>, vector<8x384xf32>
    %93 = arith.index_cast %90 : i32 to index
    %c0_43 = arith.constant 0 : index
    %94 = vector.load %arg13[%93, %c0_43] : memref<16x384xf32, #tpu.memory_space<vmem>>, vector<8x384xf32>
    %cst_44 = arith.constant dense<0.000000e+00> : vector<8x768xf32>
    %95 = tpu.matmul %85, %17, %cst_44 {dimension_numbers = #tpu.dot_dimension_numbers<[1], [0], [0], [1], [0, 0, 1, 1], [], []>} : vector<8x256xf32>, vector<256x768xf32>, vector<8x768xf32> -> vector<8x768xf32>
    %96 = vector.extract_strided_slice %85 {offsets = [0, 0], sizes = [8, 128], strides = [1, 1]} : vector<8x256xf32> to vector<8x128xf32>
    %97 = vector.extract_strided_slice %85 {offsets = [0, 128], sizes = [8, 128], strides = [1, 1]} : vector<8x256xf32> to vector<8x128xf32>
    %98 = vector.extract_strided_slice %95 {offsets = [0, 0], sizes = [8, 384], strides = [1, 1]} : vector<8x768xf32> to vector<8x384xf32>
    %99 = vector.extract_strided_slice %95 {offsets = [0, 384], sizes = [8, 384], strides = [1, 1]} : vector<8x768xf32> to vector<8x384xf32>
    %100 = vector.extract_strided_slice %92 {offsets = [0, 0], sizes = [8, 256], strides = [1, 1]} : vector<8x384xf32> to vector<8x256xf32>
    %101 = vector.extract_strided_slice %98 {offsets = [0, 0], sizes = [8, 256], strides = [1, 1]} : vector<8x384xf32> to vector<8x256xf32>
    %102 = arith.addf %100, %101 : vector<8x256xf32>
    %cst_45 = arith.constant 5.000000e-01 : f32
    %103 = vector.broadcast %cst_45 : f32 to vector<8x256xf32>
    %104 = arith.mulf %103, %102 : vector<8x256xf32>
    %105 = math.tanh %104 : vector<8x256xf32>
    %cst_46 = arith.constant 1.000000e+00 : f32
    %106 = vector.broadcast %cst_46 : f32 to vector<8x256xf32>
    %107 = arith.addf %105, %106 : vector<8x256xf32>
    %cst_47 = arith.constant 5.000000e-01 : f32
    %108 = vector.broadcast %cst_47 : f32 to vector<8x256xf32>
    %109 = arith.mulf %108, %107 : vector<8x256xf32>
    %110 = vector.extract_strided_slice %92 {offsets = [0, 256], sizes = [8, 128], strides = [1, 1]} : vector<8x384xf32> to vector<8x128xf32>
    %111 = vector.extract_strided_slice %109 {offsets = [0, 0], sizes = [8, 128], strides = [1, 1]} : vector<8x256xf32> to vector<8x128xf32>
    %112 = vector.extract_strided_slice %98 {offsets = [0, 256], sizes = [8, 128], strides = [1, 1]} : vector<8x384xf32> to vector<8x128xf32>
    %113 = arith.addf %112, %20 : vector<8x128xf32>
    %114 = arith.mulf %111, %113 : vector<8x128xf32>
    %115 = arith.addf %110, %114 : vector<8x128xf32>
    %116 = math.tanh %115 : vector<8x128xf32>
    %117 = vector.extract_strided_slice %109 {offsets = [0, 128], sizes = [8, 128], strides = [1, 1]} : vector<8x256xf32> to vector<8x128xf32>
    %118 = arith.subf %96, %116 : vector<8x128xf32>
    %119 = arith.mulf %117, %118 : vector<8x128xf32>
    %120 = arith.addf %116, %119 : vector<8x128xf32>
    %121 = vector.extract_strided_slice %94 {offsets = [0, 0], sizes = [8, 256], strides = [1, 1]} : vector<8x384xf32> to vector<8x256xf32>
    %122 = vector.extract_strided_slice %99 {offsets = [0, 0], sizes = [8, 256], strides = [1, 1]} : vector<8x384xf32> to vector<8x256xf32>
    %123 = arith.addf %121, %122 : vector<8x256xf32>
    %cst_48 = arith.constant 5.000000e-01 : f32
    %124 = vector.broadcast %cst_48 : f32 to vector<8x256xf32>
    %125 = arith.mulf %124, %123 : vector<8x256xf32>
    %126 = math.tanh %125 : vector<8x256xf32>
    %cst_49 = arith.constant 1.000000e+00 : f32
    %127 = vector.broadcast %cst_49 : f32 to vector<8x256xf32>
    %128 = arith.addf %126, %127 : vector<8x256xf32>
    %cst_50 = arith.constant 5.000000e-01 : f32
    %129 = vector.broadcast %cst_50 : f32 to vector<8x256xf32>
    %130 = arith.mulf %129, %128 : vector<8x256xf32>
    %131 = vector.extract_strided_slice %94 {offsets = [0, 256], sizes = [8, 128], strides = [1, 1]} : vector<8x384xf32> to vector<8x128xf32>
    %132 = vector.extract_strided_slice %130 {offsets = [0, 0], sizes = [8, 128], strides = [1, 1]} : vector<8x256xf32> to vector<8x128xf32>
    %133 = vector.extract_strided_slice %99 {offsets = [0, 256], sizes = [8, 128], strides = [1, 1]} : vector<8x384xf32> to vector<8x128xf32>
    %134 = arith.addf %133, %23 : vector<8x128xf32>
    %135 = arith.mulf %132, %134 : vector<8x128xf32>
    %136 = arith.addf %131, %135 : vector<8x128xf32>
    %137 = math.tanh %136 : vector<8x128xf32>
    %138 = vector.extract_strided_slice %130 {offsets = [0, 128], sizes = [8, 128], strides = [1, 1]} : vector<8x256xf32> to vector<8x128xf32>
    %139 = arith.subf %97, %137 : vector<8x128xf32>
    %140 = arith.mulf %138, %139 : vector<8x128xf32>
    %141 = arith.addf %137, %140 : vector<8x128xf32>
    %142 = arith.index_cast %87 : i32 to index
    %c0_51 = arith.constant 0 : index
    %143 = vector.load %arg10[%142, %c0_51] : memref<16x128xf32, #tpu.memory_space<vmem>>, vector<8x128xf32>
    tpu.vector_store %arg10[%142, %c0_51], %120 {strides = array<i32>} : memref<16x128xf32, #tpu.memory_space<vmem>>, vector<8x128xf32>,
    %144 = arith.index_cast %90 : i32 to index
    %c0_52 = arith.constant 0 : index
    %145 = vector.load %arg11[%144, %c0_52] : memref<16x128xf32, #tpu.memory_space<vmem>>, vector<8x128xf32>
    tpu.vector_store %arg11[%144, %c0_52], %141 {strides = array<i32>} : memref<16x128xf32, #tpu.memory_space<vmem>>, vector<8x128xf32>,
    %146 = tpu.concatenate %120, %141 in 1 : vector<8x128xf32>, vector<8x128xf32> -> vector<8x256xf32>
    %c2_i32 = arith.constant 2 : i32
    %c0_53 = arith.constant 0 : index
    %c0_54 = arith.constant 0 : index
    %147 = vector.load %arg14[%c0_53, %c0_54] : memref<8x256xf32, #tpu.memory_space<vmem>>, vector<8x256xf32>
    tpu.vector_store %arg14[%c0_53, %c0_54], %146 {strides = array<i32>} : memref<8x256xf32, #tpu.memory_space<vmem>>, vector<8x256xf32>,
    return
  }
  func.func @transform_0(%arg0: i32) -> (i32, i32) {
    %c0_i32 = arith.constant 0 : i32
    %c0_i32_0 = arith.constant 0 : i32
    return %arg0, %c0_i32 : i32, i32
  }
  func.func @transform_1(%arg0: i32) -> (i32, i32) {
    %c3_i32 = arith.constant 3 : i32
    %0 = arith.subi %c3_i32, %arg0 : i32
    %c0_i32 = arith.constant 0 : i32
    %c0_i32_0 = arith.constant 0 : i32
    return %0, %c0_i32 : i32, i32
  }
  func.func @transform_2(%arg0: i32) -> (i32, i32) {
    %c0_i32 = arith.constant 0 : i32
    %c0_i32_0 = arith.constant 0 : i32
    %c0_i32_1 = arith.constant 0 : i32
    return %c0_i32, %c0_i32_0 : i32, i32
  }
  func.func @transform_3(%arg0: i32) -> (i32, i32) {
    %c0_i32 = arith.constant 0 : i32
    %c0_i32_0 = arith.constant 0 : i32
    %c0_i32_1 = arith.constant 0 : i32
    return %c0_i32, %c0_i32_0 : i32, i32
  }
  func.func @transform_4(%arg0: i32) -> (i32, i32) {
    %c0_i32 = arith.constant 0 : i32
    %c0_i32_0 = arith.constant 0 : i32
    %c0_i32_1 = arith.constant 0 : i32
    return %c0_i32, %c0_i32_0 : i32, i32
  }
  func.func @transform_5(%arg0: i32) -> (i32, i32) {
    %c0_i32 = arith.constant 0 : i32
    %c0_i32_0 = arith.constant 0 : i32
    %c0_i32_1 = arith.constant 0 : i32
    return %c0_i32, %c0_i32_0 : i32, i32
  }
  func.func @transform_6(%arg0: i32) -> (i32, i32) {
    %c0_i32 = arith.constant 0 : i32
    %c0_i32_0 = arith.constant 0 : i32
    %c0_i32_1 = arith.constant 0 : i32
    return %c0_i32, %c0_i32_0 : i32, i32
  }
  func.func @transform_7(%arg0: i32) -> (i32, i32) {
    %c0_i32 = arith.constant 0 : i32
    %c0_i32_0 = arith.constant 0 : i32
    %c0_i32_1 = arith.constant 0 : i32
    return %c0_i32, %c0_i32_0 : i32, i32
  }
  func.func @transform_8(%arg0: i32) -> (i32, i32) {
    %c0_i32 = arith.constant 0 : i32
    %c0_i32_0 = arith.constant 0 : i32
    %c0_i32_1 = arith.constant 0 : i32
    return %c0_i32, %c0_i32_0 : i32, i32
  }
  func.func @transform_9(%arg0: i32) -> (i32, i32) {
    %c0_i32 = arith.constant 0 : i32
    %c0_i32_0 = arith.constant 0 : i32
    return %arg0, %c0_i32 : i32, i32
  }
  func.func @transform_10(%arg0: i32) -> (i32, i32) {
    %c3_i32 = arith.constant 3 : i32
    %0 = arith.subi %c3_i32, %arg0 : i32
    %c0_i32 = arith.constant 0 : i32
    %c0_i32_0 = arith.constant 0 : i32
    return %0, %c0_i32 : i32, i32
  }
}

module attributes {stable_mosaic.version = 11 : i64} {
  func.func @_bigru_layer_kernel(%arg0: i32, %arg1: memref<16x16xf32, #tpu.memory_space<vmem>>, %arg2: memref<16x16xf32, #tpu.memory_space<vmem>>, %arg3: memref<16x384xf32, #tpu.memory_space<vmem>>, %arg4: memref<16x384xf32, #tpu.memory_space<vmem>>, %arg5: memref<256x768xf32, #tpu.memory_space<vmem>>, %arg6: memref<1x384xf32, #tpu.memory_space<vmem>>, %arg7: memref<1x384xf32, #tpu.memory_space<vmem>>, %arg8: memref<1x128xf32, #tpu.memory_space<vmem>>, %arg9: memref<1x128xf32, #tpu.memory_space<vmem>>, %arg10: memref<16x128xf32, #tpu.memory_space<vmem>>, %arg11: memref<16x128xf32, #tpu.memory_space<vmem>>, %arg12: memref<16x384xf32, #tpu.memory_space<vmem>>, %arg13: memref<16x384xf32, #tpu.memory_space<vmem>>, %arg14: memref<8x256xf32, #tpu.memory_space<vmem>>) attributes {dimension_semantics = [#tpu.dimension_semantics<arbitrary>], iteration_bounds = array<i64: 4>, scalar_prefetch = 0 : i64, scratch_operands = 3 : i64, tpu.core_type = #tpu.core_type<tc>, window_params = [{transform_indices = @transform_0, window_bounds = array<i64: 16, 16>}, {transform_indices = @transform_1, window_bounds = array<i64: 16, 16>}, {pipeline_mode = #tpu.pipeline_mode<synchronous>, transform_indices = @transform_2, window_bounds = array<i64: 16, 384>}, {pipeline_mode = #tpu.pipeline_mode<synchronous>, transform_indices = @transform_3, window_bounds = array<i64: 16, 384>}, {pipeline_mode = #tpu.pipeline_mode<synchronous>, transform_indices = @transform_4, window_bounds = array<i64: 256, 768>}, {pipeline_mode = #tpu.pipeline_mode<synchronous>, transform_indices = @transform_5, window_bounds = array<i64: 1, 384>}, {pipeline_mode = #tpu.pipeline_mode<synchronous>, transform_indices = @transform_6, window_bounds = array<i64: 1, 384>}, {pipeline_mode = #tpu.pipeline_mode<synchronous>, transform_indices = @transform_7, window_bounds = array<i64: 1, 128>}, {pipeline_mode = #tpu.pipeline_mode<synchronous>, transform_indices = @transform_8, window_bounds = array<i64: 1, 128>}, {transform_indices = @transform_9, window_bounds = array<i64: 16, 128>}, {transform_indices = @transform_10, window_bounds = array<i64: 16, 128>}]} {
    %c0_i32 = arith.constant 0 : i32
    %0 = arith.cmpi eq, %arg0, %c0_i32 : i32
    %1 = arith.extui %0 : i1 to i32
    %c0_i32_0 = arith.constant 0 : i32
    %2 = arith.cmpi ne, %1, %c0_i32_0 : i32
    scf.if %2 {
      %cst_55 = arith.constant 0.000000e+00 : f32
      %148 = vector.broadcast %cst_55 : f32 to vector<8x256xf32>
      %c0_56 = arith.constant 0 : index
      %c0_57 = arith.constant 0 : index
      %149 = vector.load %arg14[%c0_56, %c0_57] : memref<8x256xf32, #tpu.memory_space<vmem>>, vector<8x256xf32>
      tpu.vector_store %arg14[%c0_56, %c0_57], %148 {strides = array<i32>} : memref<8x256xf32, #tpu.memory_space<vmem>>, vector<8x256xf32>,
    } else {
    }
    %c0 = arith.constant 0 : index
    %c0_1 = arith.constant 0 : index
    %3 = vector.load %arg1[%c0, %c0_1] : memref<16x16xf32, #tpu.memory_space<vmem>>, vector<16x16xf32>
    %c0_2 = arith.constant 0 : index
    %c0_3 = arith.constant 0 : index
    %4 = vector.load %arg3[%c0_2, %c0_3] : memref<16x384xf32, #tpu.memory_space<vmem>>, vector<16x384xf32>
    %cst = arith.constant dense<0.000000e+00> : vector<16x384xf32>
    %5 = tpu.matmul %3, %4, %cst {dimension_numbers = #tpu.dot_dimension_numbers<[1], [0], [0], [1], [0, 0, 1, 1], [], []>} : vector<16x16xf32>, vector<16x384xf32>, vector<16x384xf32> -> vector<16x384xf32>
    %c0_4 = arith.constant 0 : index
    %c0_5 = arith.constant 0 : index
    %6 = vector.load %arg2[%c0_4, %c0_5] : memref<16x16xf32, #tpu.memory_space<vmem>>, vector<16x16xf32>
    %c0_6 = arith.constant 0 : index
    %c0_7 = arith.constant 0 : index
    %7 = vector.load %arg4[%c0_6, %c0_7] : memref<16x384xf32, #tpu.memory_space<vmem>>, vector<16x384xf32>
    %cst_8 = arith.constant dense<0.000000e+00> : vector<16x384xf32>
    %8 = tpu.matmul %6, %7, %cst_8 {dimension_numbers = #tpu.dot_dimension_numbers<[1], [0], [0], [1], [0, 0, 1, 1], [], []>} : vector<16x16xf32>, vector<16x384xf32>, vector<16x384xf32> -> vector<16x384xf32>
    %c0_9 = arith.constant 0 : index
    %c0_10 = arith.constant 0 : index
    %9 = vector.load %arg6[%c0_9, %c0_10] : memref<1x384xf32, #tpu.memory_space<vmem>>, vector<1x384xf32>
    %10 = vector.broadcast %9 : vector<1x384xf32> to vector<16x384xf32>
    %11 = arith.addf %5, %10 : vector<16x384xf32>
    %c0_11 = arith.constant 0 : index
    %c0_12 = arith.constant 0 : index
    %12 = vector.load %arg12[%c0_11, %c0_12] : memref<16x384xf32, #tpu.memory_space<vmem>>, vector<16x384xf32>
    tpu.vector_store %arg12[%c0_11, %c0_12], %11 {strides = array<i32>} : memref<16x384xf32, #tpu.memory_space<vmem>>, vector<16x384xf32>,
    %c0_13 = arith.constant 0 : index
    %c0_14 = arith.constant 0 : index
    %13 = vector.load %arg7[%c0_13, %c0_14] : memref<1x384xf32, #tpu.memory_space<vmem>>, vector<1x384xf32>
    %14 = vector.broadcast %13 : vector<1x384xf32> to vector<16x384xf32>
    %15 = arith.addf %8, %14 : vector<16x384xf32>
    %c0_15 = arith.constant 0 : index
    %c0_16 = arith.constant 0 : index
    %16 = vector.load %arg13[%c0_15, %c0_16] : memref<16x384xf32, #tpu.memory_space<vmem>>, vector<16x384xf32>
    tpu.vector_store %arg13[%c0_15, %c0_16], %15 {strides = array<i32>} : memref<16x384xf32, #tpu.memory_space<vmem>>, vector<16x384xf32>,
    %c0_17 = arith.constant 0 : index
    %c0_18 = arith.constant 0 : index
    %17 = vector.load %arg5[%c0_17, %c0_18] : memref<256x768xf32, #tpu.memory_space<vmem>>, vector<256x768xf32>
    %c0_19 = arith.constant 0 : index
    %c0_20 = arith.constant 0 : index
    %18 = vector.load %arg8[%c0_19, %c0_20] : memref<1x128xf32, #tpu.memory_space<vmem>>, vector<1x128xf32>
    %19 = vector.shape_cast %18 : vector<1x128xf32> to vector<1x128xf32>
    %20 = vector.broadcast %19 : vector<1x128xf32> to vector<8x128xf32>
    %c0_21 = arith.constant 0 : index
    %c0_22 = arith.constant 0 : index
    %21 = vector.load %arg9[%c0_21, %c0_22] : memref<1x128xf32, #tpu.memory_space<vmem>>, vector<1x128xf32>
    %22 = vector.shape_cast %21 : vector<1x128xf32> to vector<1x128xf32>
    %23 = vector.broadcast %22 : vector<1x128xf32> to vector<8x128xf32>
    %c0_23 = arith.constant 0 : index
    %c0_24 = arith.constant 0 : index
    %24 = vector.load %arg14[%c0_23, %c0_24] : memref<8x256xf32, #tpu.memory_space<vmem>>, vector<8x256xf32>
    %c0_i32_25 = arith.constant 0 : i32
    %c8_i32 = arith.constant 8 : i32
    %25 = arith.muli %c0_i32_25, %c8_i32 : i32
    %26 = tpu.assume_multiple %25, 8 : i32
    %c1_i32 = arith.constant 1 : i32
    %27 = arith.subi %c1_i32, %c0_i32_25 : i32
    %c8_i32_26 = arith.constant 8 : i32
    %28 = arith.muli %27, %c8_i32_26 : i32
    %29 = tpu.assume_multiple %28, 8 : i32
    %30 = arith.index_cast %26 : i32 to index
    %c0_27 = arith.constant 0 : index
    %31 = vector.load %arg12[%30, %c0_27] : memref<16x384xf32, #tpu.memory_space<vmem>>, vector<8x384xf32>
    %32 = arith.index_cast %29 : i32 to index
    %c0_28 = arith.constant 0 : index
    %33 = vector.load %arg13[%32, %c0_28] : memref<16x384xf32, #tpu.memory_space<vmem>>, vector<8x384xf32>
    %cst_29 = arith.constant dense<0.000000e+00> : vector<8x768xf32>
    %34 = tpu.matmul %24, %17, %cst_29 {dimension_numbers = #tpu.dot_dimension_numbers<[1], [0], [0], [1], [0, 0, 1, 1], [], []>} : vector<8x256xf32>, vector<256x768xf32>, vector<8x768xf32> -> vector<8x768xf32>
    %35 = vector.extract_strided_slice %24 {offsets = [0, 0], sizes = [8, 128], strides = [1, 1]} : vector<8x256xf32> to vector<8x128xf32>
    %36 = vector.extract_strided_slice %24 {offsets = [0, 128], sizes = [8, 128], strides = [1, 1]} : vector<8x256xf32> to vector<8x128xf32>
    %37 = vector.extract_strided_slice %34 {offsets = [0, 0], sizes = [8, 384], strides = [1, 1]} : vector<8x768xf32> to vector<8x384xf32>
    %38 = vector.extract_strided_slice %34 {offsets = [0, 384], sizes = [8, 384], strides = [1, 1]} : vector<8x768xf32> to vector<8x384xf32>
    %39 = vector.extract_strided_slice %31 {offsets = [0, 0], sizes = [8, 256], strides = [1, 1]} : vector<8x384xf32> to vector<8x256xf32>
    %40 = vector.extract_strided_slice %37 {offsets = [0, 0], sizes = [8, 256], strides = [1, 1]} : vector<8x384xf32> to vector<8x256xf32>
    %41 = arith.addf %39, %40 : vector<8x256xf32>
    %cst_30 = arith.constant 5.000000e-01 : f32
    %42 = vector.broadcast %cst_30 : f32 to vector<8x256xf32>
    %43 = arith.mulf %42, %41 : vector<8x256xf32>
    %44 = math.tanh %43 : vector<8x256xf32>
    %cst_31 = arith.constant 1.000000e+00 : f32
    %45 = vector.broadcast %cst_31 : f32 to vector<8x256xf32>
    %46 = arith.addf %44, %45 : vector<8x256xf32>
    %cst_32 = arith.constant 5.000000e-01 : f32
    %47 = vector.broadcast %cst_32 : f32 to vector<8x256xf32>
    %48 = arith.mulf %47, %46 : vector<8x256xf32>
    %49 = vector.extract_strided_slice %31 {offsets = [0, 256], sizes = [8, 128], strides = [1, 1]} : vector<8x384xf32> to vector<8x128xf32>
    %50 = vector.extract_strided_slice %48 {offsets = [0, 0], sizes = [8, 128], strides = [1, 1]} : vector<8x256xf32> to vector<8x128xf32>
    %51 = vector.extract_strided_slice %37 {offsets = [0, 256], sizes = [8, 128], strides = [1, 1]} : vector<8x384xf32> to vector<8x128xf32>
    %52 = arith.addf %51, %20 : vector<8x128xf32>
    %53 = arith.mulf %50, %52 : vector<8x128xf32>
    %54 = arith.addf %49, %53 : vector<8x128xf32>
    %55 = math.tanh %54 : vector<8x128xf32>
    %56 = vector.extract_strided_slice %48 {offsets = [0, 128], sizes = [8, 128], strides = [1, 1]} : vector<8x256xf32> to vector<8x128xf32>
    %57 = arith.subf %35, %55 : vector<8x128xf32>
    %58 = arith.mulf %56, %57 : vector<8x128xf32>
    %59 = arith.addf %55, %58 : vector<8x128xf32>
    %60 = vector.extract_strided_slice %33 {offsets = [0, 0], sizes = [8, 256], strides = [1, 1]} : vector<8x384xf32> to vector<8x256xf32>
    %61 = vector.extract_strided_slice %38 {offsets = [0, 0], sizes = [8, 256], strides = [1, 1]} : vector<8x384xf32> to vector<8x256xf32>
    %62 = arith.addf %60, %61 : vector<8x256xf32>
    %cst_33 = arith.constant 5.000000e-01 : f32
    %63 = vector.broadcast %cst_33 : f32 to vector<8x256xf32>
    %64 = arith.mulf %63, %62 : vector<8x256xf32>
    %65 = math.tanh %64 : vector<8x256xf32>
    %cst_34 = arith.constant 1.000000e+00 : f32
    %66 = vector.broadcast %cst_34 : f32 to vector<8x256xf32>
    %67 = arith.addf %65, %66 : vector<8x256xf32>
    %cst_35 = arith.constant 5.000000e-01 : f32
    %68 = vector.broadcast %cst_35 : f32 to vector<8x256xf32>
    %69 = arith.mulf %68, %67 : vector<8x256xf32>
    %70 = vector.extract_strided_slice %33 {offsets = [0, 256], sizes = [8, 128], strides = [1, 1]} : vector<8x384xf32> to vector<8x128xf32>
    %71 = vector.extract_strided_slice %69 {offsets = [0, 0], sizes = [8, 128], strides = [1, 1]} : vector<8x256xf32> to vector<8x128xf32>
    %72 = vector.extract_strided_slice %38 {offsets = [0, 256], sizes = [8, 128], strides = [1, 1]} : vector<8x384xf32> to vector<8x128xf32>
    %73 = arith.addf %72, %23 : vector<8x128xf32>
    %74 = arith.mulf %71, %73 : vector<8x128xf32>
    %75 = arith.addf %70, %74 : vector<8x128xf32>
    %76 = math.tanh %75 : vector<8x128xf32>
    %77 = vector.extract_strided_slice %69 {offsets = [0, 128], sizes = [8, 128], strides = [1, 1]} : vector<8x256xf32> to vector<8x128xf32>
    %78 = arith.subf %36, %76 : vector<8x128xf32>
    %79 = arith.mulf %77, %78 : vector<8x128xf32>
    %80 = arith.addf %76, %79 : vector<8x128xf32>
    %81 = arith.index_cast %26 : i32 to index
    %c0_36 = arith.constant 0 : index
    %82 = vector.load %arg10[%81, %c0_36] : memref<16x128xf32, #tpu.memory_space<vmem>>, vector<8x128xf32>
    tpu.vector_store %arg10[%81, %c0_36], %59 {strides = array<i32>} : memref<16x128xf32, #tpu.memory_space<vmem>>, vector<8x128xf32>,
    %83 = arith.index_cast %29 : i32 to index
    %c0_37 = arith.constant 0 : index
    %84 = vector.load %arg11[%83, %c0_37] : memref<16x128xf32, #tpu.memory_space<vmem>>, vector<8x128xf32>
    tpu.vector_store %arg11[%83, %c0_37], %80 {strides = array<i32>} : memref<16x128xf32, #tpu.memory_space<vmem>>, vector<8x128xf32>,
    %85 = tpu.concatenate %59, %80 in 1 : vector<8x128xf32>, vector<8x128xf32> -> vector<8x256xf32>
    %c1_i32_38 = arith.constant 1 : i32
    %c8_i32_39 = arith.constant 8 : i32
    %86 = arith.muli %c1_i32_38, %c8_i32_39 : i32
    %87 = tpu.assume_multiple %86, 8 : i32
    %c1_i32_40 = arith.constant 1 : i32
    %88 = arith.subi %c1_i32_40, %c1_i32_38 : i32
    %c8_i32_41 = arith.constant 8 : i32
    %89 = arith.muli %88, %c8_i32_41 : i32
    %90 = tpu.assume_multiple %89, 8 : i32
    %91 = arith.index_cast %87 : i32 to index
    %c0_42 = arith.constant 0 : index
    %92 = vector.load %arg12[%91, %c0_42] : memref<16x384xf32, #tpu.memory_space<vmem>>, vector<8x384xf32>
    %93 = arith.index_cast %90 : i32 to index
    %c0_43 = arith.constant 0 : index
    %94 = vector.load %arg13[%93, %c0_43] : memref<16x384xf32, #tpu.memory_space<vmem>>, vector<8x384xf32>
    %cst_44 = arith.constant dense<0.000000e+00> : vector<8x768xf32>
    %95 = tpu.matmul %85, %17, %cst_44 {dimension_numbers = #tpu.dot_dimension_numbers<[1], [0], [0], [1], [0, 0, 1, 1], [], []>} : vector<8x256xf32>, vector<256x768xf32>, vector<8x768xf32> -> vector<8x768xf32>
    %96 = vector.extract_strided_slice %85 {offsets = [0, 0], sizes = [8, 128], strides = [1, 1]} : vector<8x256xf32> to vector<8x128xf32>
    %97 = vector.extract_strided_slice %85 {offsets = [0, 128], sizes = [8, 128], strides = [1, 1]} : vector<8x256xf32> to vector<8x128xf32>
    %98 = vector.extract_strided_slice %95 {offsets = [0, 0], sizes = [8, 384], strides = [1, 1]} : vector<8x768xf32> to vector<8x384xf32>
    %99 = vector.extract_strided_slice %95 {offsets = [0, 384], sizes = [8, 384], strides = [1, 1]} : vector<8x768xf32> to vector<8x384xf32>
    %100 = vector.extract_strided_slice %92 {offsets = [0, 0], sizes = [8, 256], strides = [1, 1]} : vector<8x384xf32> to vector<8x256xf32>
    %101 = vector.extract_strided_slice %98 {offsets = [0, 0], sizes = [8, 256], strides = [1, 1]} : vector<8x384xf32> to vector<8x256xf32>
    %102 = arith.addf %100, %101 : vector<8x256xf32>
    %cst_45 = arith.constant 5.000000e-01 : f32
    %103 = vector.broadcast %cst_45 : f32 to vector<8x256xf32>
    %104 = arith.mulf %103, %102 : vector<8x256xf32>
    %105 = math.tanh %104 : vector<8x256xf32>
    %cst_46 = arith.constant 1.000000e+00 : f32
    %106 = vector.broadcast %cst_46 : f32 to vector<8x256xf32>
    %107 = arith.addf %105, %106 : vector<8x256xf32>
    %cst_47 = arith.constant 5.000000e-01 : f32
    %108 = vector.broadcast %cst_47 : f32 to vector<8x256xf32>
    %109 = arith.mulf %108, %107 : vector<8x256xf32>
    %110 = vector.extract_strided_slice %92 {offsets = [0, 256], sizes = [8, 128], strides = [1, 1]} : vector<8x384xf32> to vector<8x128xf32>
    %111 = vector.extract_strided_slice %109 {offsets = [0, 0], sizes = [8, 128], strides = [1, 1]} : vector<8x256xf32> to vector<8x128xf32>
    %112 = vector.extract_strided_slice %98 {offsets = [0, 256], sizes = [8, 128], strides = [1, 1]} : vector<8x384xf32> to vector<8x128xf32>
    %113 = arith.addf %112, %20 : vector<8x128xf32>
    %114 = arith.mulf %111, %113 : vector<8x128xf32>
    %115 = arith.addf %110, %114 : vector<8x128xf32>
    %116 = math.tanh %115 : vector<8x128xf32>
    %117 = vector.extract_strided_slice %109 {offsets = [0, 128], sizes = [8, 128], strides = [1, 1]} : vector<8x256xf32> to vector<8x128xf32>
    %118 = arith.subf %96, %116 : vector<8x128xf32>
    %119 = arith.mulf %117, %118 : vector<8x128xf32>
    %120 = arith.addf %116, %119 : vector<8x128xf32>
    %121 = vector.extract_strided_slice %94 {offsets = [0, 0], sizes = [8, 256], strides = [1, 1]} : vector<8x384xf32> to vector<8x256xf32>
    %122 = vector.extract_strided_slice %99 {offsets = [0, 0], sizes = [8, 256], strides = [1, 1]} : vector<8x384xf32> to vector<8x256xf32>
    %123 = arith.addf %121, %122 : vector<8x256xf32>
    %cst_48 = arith.constant 5.000000e-01 : f32
    %124 = vector.broadcast %cst_48 : f32 to vector<8x256xf32>
    %125 = arith.mulf %124, %123 : vector<8x256xf32>
    %126 = math.tanh %125 : vector<8x256xf32>
    %cst_49 = arith.constant 1.000000e+00 : f32
    %127 = vector.broadcast %cst_49 : f32 to vector<8x256xf32>
    %128 = arith.addf %126, %127 : vector<8x256xf32>
    %cst_50 = arith.constant 5.000000e-01 : f32
    %129 = vector.broadcast %cst_50 : f32 to vector<8x256xf32>
    %130 = arith.mulf %129, %128 : vector<8x256xf32>
    %131 = vector.extract_strided_slice %94 {offsets = [0, 256], sizes = [8, 128], strides = [1, 1]} : vector<8x384xf32> to vector<8x128xf32>
    %132 = vector.extract_strided_slice %130 {offsets = [0, 0], sizes = [8, 128], strides = [1, 1]} : vector<8x256xf32> to vector<8x128xf32>
    %133 = vector.extract_strided_slice %99 {offsets = [0, 256], sizes = [8, 128], strides = [1, 1]} : vector<8x384xf32> to vector<8x128xf32>
    %134 = arith.addf %133, %23 : vector<8x128xf32>
    %135 = arith.mulf %132, %134 : vector<8x128xf32>
    %136 = arith.addf %131, %135 : vector<8x128xf32>
    %137 = math.tanh %136 : vector<8x128xf32>
    %138 = vector.extract_strided_slice %130 {offsets = [0, 128], sizes = [8, 128], strides = [1, 1]} : vector<8x256xf32> to vector<8x128xf32>
    %139 = arith.subf %97, %137 : vector<8x128xf32>
    %140 = arith.mulf %138, %139 : vector<8x128xf32>
    %141 = arith.addf %137, %140 : vector<8x128xf32>
    %142 = arith.index_cast %87 : i32 to index
    %c0_51 = arith.constant 0 : index
    %143 = vector.load %arg10[%142, %c0_51] : memref<16x128xf32, #tpu.memory_space<vmem>>, vector<8x128xf32>
    tpu.vector_store %arg10[%142, %c0_51], %120 {strides = array<i32>} : memref<16x128xf32, #tpu.memory_space<vmem>>, vector<8x128xf32>,
    %144 = arith.index_cast %90 : i32 to index
    %c0_52 = arith.constant 0 : index
    %145 = vector.load %arg11[%144, %c0_52] : memref<16x128xf32, #tpu.memory_space<vmem>>, vector<8x128xf32>
    tpu.vector_store %arg11[%144, %c0_52], %141 {strides = array<i32>} : memref<16x128xf32, #tpu.memory_space<vmem>>, vector<8x128xf32>,
    %146 = tpu.concatenate %120, %141 in 1 : vector<8x128xf32>, vector<8x128xf32> -> vector<8x256xf32>
    %c2_i32 = arith.constant 2 : i32
    %c0_53 = arith.constant 0 : index
    %c0_54 = arith.constant 0 : index
    %147 = vector.load %arg14[%c0_53, %c0_54] : memref<8x256xf32, #tpu.memory_space<vmem>>, vector<8x256xf32>
    tpu.vector_store %arg14[%c0_53, %c0_54], %146 {strides = array<i32>} : memref<8x256xf32, #tpu.memory_space<vmem>>, vector<8x256xf32>,
    return
  }
  func.func @transform_0(%arg0: i32) -> (i32, i32) {
    %c0_i32 = arith.constant 0 : i32
    %c0_i32_0 = arith.constant 0 : i32
    return %arg0, %c0_i32 : i32, i32
  }
  func.func @transform_1(%arg0: i32) -> (i32, i32) {
    %c3_i32 = arith.constant 3 : i32
    %0 = arith.subi %c3_i32, %arg0 : i32
    %c0_i32 = arith.constant 0 : i32
    %c0_i32_0 = arith.constant 0 : i32
    return %0, %c0_i32 : i32, i32
  }
  func.func @transform_2(%arg0: i32) -> (i32, i32) {
    %c0_i32 = arith.constant 0 : i32
    %c0_i32_0 = arith.constant 0 : i32
    %c0_i32_1 = arith.constant 0 : i32
    return %c0_i32, %c0_i32_0 : i32, i32
  }
  func.func @transform_3(%arg0: i32) -> (i32, i32) {
    %c0_i32 = arith.constant 0 : i32
    %c0_i32_0 = arith.constant 0 : i32
    %c0_i32_1 = arith.constant 0 : i32
    return %c0_i32, %c0_i32_0 : i32, i32
  }
  func.func @transform_4(%arg0: i32) -> (i32, i32) {
    %c0_i32 = arith.constant 0 : i32
    %c0_i32_0 = arith.constant 0 : i32
    %c0_i32_1 = arith.constant 0 : i32
    return %c0_i32, %c0_i32_0 : i32, i32
  }
  func.func @transform_5(%arg0: i32) -> (i32, i32) {
    %c0_i32 = arith.constant 0 : i32
    %c0_i32_0 = arith.constant 0 : i32
    %c0_i32_1 = arith.constant 0 : i32
    return %c0_i32, %c0_i32_0 : i32, i32
  }
  func.func @transform_6(%arg0: i32) -> (i32, i32) {
    %c0_i32 = arith.constant 0 : i32
    %c0_i32_0 = arith.constant 0 : i32
    %c0_i32_1 = arith.constant 0 : i32
    return %c0_i32, %c0_i32_0 : i32, i32
  }
  func.func @transform_7(%arg0: i32) -> (i32, i32) {
    %c0_i32 = arith.constant 0 : i32
    %c0_i32_0 = arith.constant 0 : i32
    %c0_i32_1 = arith.constant 0 : i32
    return %c0_i32, %c0_i32_0 : i32, i32
  }
  func.func @transform_8(%arg0: i32) -> (i32, i32) {
    %c0_i32 = arith.constant 0 : i32
    %c0_i32_0 = arith.constant 0 : i32
    %c0_i32_1 = arith.constant 0 : i32
    return %c0_i32, %c0_i32_0 : i32, i32
  }
  func.func @transform_9(%arg0: i32) -> (i32, i32) {
    %c0_i32 = arith.constant 0 : i32
    %c0_i32_0 = arith.constant 0 : i32
    return %arg0, %c0_i32 : i32, i32
  }
  func.func @transform_10(%arg0: i32) -> (i32, i32) {
    %c3_i32 = arith.constant 3 : i32
    %0 = arith.subi %c3_i32, %arg0 : i32
    %c0_i32 = arith.constant 0 : i32
    %c0_i32_0 = arith.constant 0 : i32
    return %0, %c0_i32 : i32, i32
  }
}

</mosaic_0001>

<llo_original>
// kernel: tpu_custom_call.1
$region0: #{tpu_custom_call.1}
  #allocation0 [shape = 'u32[]', space=smem, size = 0x4, offset = 0x4, fixed_abs, tag = 'smem constant byte address 0x4 - core index']
  #allocation1 [shape = 'u32[144,128]{1,0:T(1,128)}', space=vmem, size = 0x12000, scoped, tag = 'internal scratch']
  #allocation2 [shape = 'f32[16,384]{1,0:T(8,128)}', space=vmem, size = 0x6000, scoped, tag = 'scratch operand']
  #allocation3 [shape = 'f32[16,384]{1,0:T(8,128)}', space=vmem, size = 0x6000, scoped, tag = 'scratch operand']
  #allocation4 [shape = 'f32[8,256]{1,0:T(8,128)}', space=vmem, size = 0x2000, scoped, tag = 'scratch operand']
  %s0 = inlined_call_operand.vmem [shape: f32[64,16], index: 0, kind: input, shape index: {}]
  %s1 = inlined_call_operand.vmem [shape: f32[64,16], index: 1, kind: input, shape index: {}]
  %s2 = inlined_call_operand.vmem [shape: f32[16,384], index: 2, kind: input, shape index: {}]
  %s3 = inlined_call_operand.vmem [shape: f32[16,384], index: 3, kind: input, shape index: {}]
  %s4 = inlined_call_operand.hbm [shape: f32[256,768], index: 4, kind: input, shape index: {}]
  %s5 = inlined_call_operand.vmem [shape: f32[1,384], index: 5, kind: input, shape index: {}]
  %s6 = inlined_call_operand.vmem [shape: f32[1,384], index: 6, kind: input, shape index: {}]
  %s7 = inlined_call_operand.vmem [shape: f32[1,128], index: 7, kind: input, shape index: {}]
  %s8 = inlined_call_operand.vmem [shape: f32[1,128], index: 8, kind: input, shape index: {}]
  %s9 = inlined_call_operand.hbm [shape: f32[64,128], index: 9, kind: output, shape index: {0}]
  %s10 = inlined_call_operand.hbm [shape: f32[64,128], index: 10, kind: output, shape index: {1}]
  %11 = xla_tuple %s9, %s10
  %s12 = sld [smem:[#allocation0]]
  $region85: #{tpu_custom_call.1} parent=0
    _
  %s14 = ssub.s32 1, %s12
  %s15 = scalar_select 0, %s14, %s12
  $region1: #{tpu_custom_call.1} parent=0
    #allocation5 [shape = 'u8[786432]{0}', space=vmem, size = 0xc0000, scoped, tag = 'input window, operand 4, single buffered']
    #allocation6 [shape = 's32[2]{0}', space=sflag, size = 0x8, scoped, tag = 'scoped memory for tpu_custom_call.1']
    #allocation7 [shape = 's32[2]{0}', space=sflag, size = 0x8, scoped, tag = 'scoped memory for tpu_custom_call.1']
    #allocation8 [shape = 'u8[16384]{0}', space=vmem, size = 0x4000, scoped, tag = 'output window, operand 0']
    #allocation9 [shape = 'u8[16384]{0}', space=vmem, size = 0x4000, scoped, tag = 'output window, operand 1']
    #allocation10 [shape = 's32[2]{0}', space=sflag, size = 0x8, scoped, tag = 'scoped memory for tpu_custom_call.1']
    %16 = vsyncpa [#allocation6], 0
    %17 = vsyncpa [#allocation7], 0
    %s18 = scalar_lea.sflag [#allocation7], 1
    %19 = vsyncpa %s18, 0
    %20 = vsyncpa [#allocation10], 0
    %s21 = scalar_lea.sflag [#allocation10], 1
    %22 = vsyncpa %s21, 0
    loop: start=0, step=1, limit=6
    $region2: #{tpu_custom_call.1} parent=1 // loop_pre_header
      _
    $region3: #{tpu_custom_call.1} parent=1 // loop_header
      %s24 = sphi 0, %s28
      %p25 = scmp.ge.s32.totalorder %s24, 6
      %s34 = sphi 0, %s36
      %s37 = sphi 0, %s34
      %s38 = sphi 0, %s37
      %s54 = sphi 0, %s38
      %s62 = sphi 0, %s64
      %s65 = sphi 0, %s62
      %s66 = sphi 0, %s65
      %s82 = sphi 0, %s66
      %s86 = sphi 0, %s86
      %s88 = sphi 0, %s86
      %s89 = sphi 0, %s88
      %s103 = sphi 0, %s89
      %s107 = sphi 0, %s107
      %s109 = sphi 0, %s107
      %s110 = sphi 0, %s109
      %s124 = sphi 0, %s110
      %s128 = sphi 0, %s128
      %s130 = sphi 0, %s128
      %s131 = sphi 0, %s130
      %s145 = sphi 0, %s131
      %s149 = sphi 0, %s149
      %s151 = sphi 0, %s149
      %s152 = sphi 0, %s151
      %s166 = sphi 0, %s152
      %s170 = sphi 0, %s170
      %s172 = sphi 0, %s170
      %s173 = sphi 0, %s172
      %s187 = sphi 0, %s173
      %s191 = sphi 0, %s191
      %s193 = sphi 0, %s191
      %s194 = sphi 0, %s193
      %s208 = sphi 0, %s194
      %s212 = sphi 0, %s212
      %s214 = sphi 0, %s212
      %s215 = sphi 0, %s214
      %s229 = sphi 0, %s215
      %s235 = sphi 0, %s237
      %s238 = sphi 0, %s235
      %s239 = sphi 0, %s238
      %s255 = sphi 0, %s239
      %s263 = sphi 0, %s265
      %s266 = sphi 0, %s263
      %s267 = sphi 0, %s266
      %s283 = sphi 0, %s267
    $region4: #{tpu_custom_call.1} parent=1 // loop_header_branch
      %27 = sbr.rel (%p25) target = $region8
    $region5: #{tpu_custom_call.1} parent=1 // loop_body
      %s29 = ssub.s32 %s24, 1
      %s30 = ssub.s32 %s24, 2
      %s31 = sadd.s32 %s24, 1
      %s32 = ssub.s32 %s24, %s31
      %p33 = scmp.eq.s32.totalorder %s32, 0
      %s35 = sadd.s32 %s34, 1
      %s36 = scalar_select %p33, %s34, %s35
      %p39 = pneg %p33
      %p40 = scmp.eq.s32.totalorder %s24, 3
      %p41 = por %p39, %p40
      %p42 = scmp.ne.s32.totalorder %s34, %s37
      %p43 = scmp.eq.s32.totalorder %s24, 0
      %p44 = por %p42, %p43
      %p45 = scmp.ne.s32.totalorder %s34, %s37
      %p46 = scmp.eq.s32.totalorder %s29, 3
      %p47 = por %p45, %p46
      %p48 = scmp.ne.s32.totalorder %s37, %s38
      %p49 = scmp.eq.s32.totalorder %s29, 0
      %p50 = por %p48, %p49
      %p51 = scmp.ne.s32.totalorder %s37, %s38
      %p52 = scmp.eq.s32.totalorder %s30, 3
      %p53 = por %p51, %p52
      %p55 = scmp.ne.s32.totalorder %s38, %s54
      %p56 = scmp.eq.s32.totalorder %s30, 0
      %p57 = por %p55, %p56
      %s58 = ssub.s32 3, %s24
      %s59 = ssub.s32 3, %s31
      %s60 = ssub.s32 %s58, %s59
      %p61 = scmp.eq.s32.totalorder %s60, 0
      %s63 = sadd.s32 %s62, 1
      %s64 = scalar_select %p61, %s62, %s63
      %p67 = pneg %p61
      %p68 = scmp.eq.s32.totalorder %s24, 3
      %p69 = por %p67, %p68
      %p70 = scmp.ne.s32.totalorder %s62, %s65
      %p71 = scmp.eq.s32.totalorder %s24, 0
      %p72 = por %p70, %p71
      %p73 = scmp.ne.s32.totalorder %s62, %s65
      %p74 = scmp.eq.s32.totalorder %s29, 3
      %p75 = por %p73, %p74
      %p76 = scmp.ne.s32.totalorder %s65, %s66
      %p77 = scmp.eq.s32.totalorder %s29, 0
      %p78 = por %p76, %p77
      %p79 = scmp.ne.s32.totalorder %s65, %s66
      %p80 = scmp.eq.s32.totalorder %s30, 3
      %p81 = por %p79, %p80
      %p83 = scmp.ne.s32.totalorder %s66, %s82
      %p84 = scmp.eq.s32.totalorder %s30, 0
      %p85 = por %p83, %p84
      %s87 = sadd.s32 %s86, 1
      %p90 = scmp.eq.s32.totalorder %s24, 3
      %p91 = scmp.ne.s32.totalorder %s86, %s88
      %p92 = scmp.eq.s32.totalorder %s24, 0
      %p93 = por %p91, %p92
      %p94 = scmp.ne.s32.totalorder %s86, %s88
      %p95 = scmp.eq.s32.totalorder %s29, 3
      %p96 = por %p94, %p95
      %p97 = scmp.ne.s32.totalorder %s88, %s89
      %p98 = scmp.eq.s32.totalorder %s29, 0
      %p99 = por %p97, %p98
      %p100 = scmp.ne.s32.totalorder %s88, %s89
      %p101 = scmp.eq.s32.totalorder %s30, 3
      %p102 = por %p100, %p101
      %p104 = scmp.ne.s32.totalorder %s89, %s103
      %p105 = scmp.eq.s32.totalorder %s30, 0
      %p106 = por %p104, %p105
      %s108 = sadd.s32 %s107, 1
      %p111 = scmp.eq.s32.totalorder %s24, 3
      %p112 = scmp.ne.s32.totalorder %s107, %s109
      %p113 = scmp.eq.s32.totalorder %s24, 0
      %p114 = por %p112, %p113
      %p115 = scmp.ne.s32.totalorder %s107, %s109
      %p116 = scmp.eq.s32.totalorder %s29, 3
      %p117 = por %p115, %p116
      %p118 = scmp.ne.s32.totalorder %s109, %s110
      %p119 = scmp.eq.s32.totalorder %s29, 0
      %p120 = por %p118, %p119
      %p121 = scmp.ne.s32.totalorder %s109, %s110
      %p122 = scmp.eq.s32.totalorder %s30, 3
      %p123 = por %p121, %p122
      %p125 = scmp.ne.s32.totalorder %s110, %s124
      %p126 = scmp.eq.s32.totalorder %s30, 0
      %p127 = por %p125, %p126
      %s129 = sadd.s32 %s128, 1
      %p132 = scmp.eq.s32.totalorder %s24, 3
      %p133 = scmp.ne.s32.totalorder %s128, %s130
      %p134 = scmp.eq.s32.totalorder %s24, 0
      %p135 = por %p133, %p134
      %p136 = scmp.ne.s32.totalorder %s128, %s130
      %p137 = scmp.eq.s32.totalorder %s29, 3
      %p138 = por %p136, %p137
      %p139 = scmp.ne.s32.totalorder %s130, %s131
      %p140 = scmp.eq.s32.totalorder %s29, 0
      %p141 = por %p139, %p140
      %p142 = scmp.ne.s32.totalorder %s130, %s131
      %p143 = scmp.eq.s32.totalorder %s30, 3
      %p144 = por %p142, %p143
      %p146 = scmp.ne.s32.totalorder %s131, %s145
      %p147 = scmp.eq.s32.totalorder %s30, 0
      %p148 = por %p146, %p147
      %s150 = sadd.s32 %s149, 1
      %p153 = scmp.eq.s32.totalorder %s24, 3
      %p154 = scmp.ne.s32.totalorder %s149, %s151
      %p155 = scmp.eq.s32.totalorder %s24, 0
      %p156 = por %p154, %p155
      %p157 = scmp.ne.s32.totalorder %s149, %s151
      %p158 = scmp.eq.s32.totalorder %s29, 3
      %p159 = por %p157, %p158
      %p160 = scmp.ne.s32.totalorder %s151, %s152
      %p161 = scmp.eq.s32.totalorder %s29, 0
      %p162 = por %p160, %p161
      %p163 = scmp.ne.s32.totalorder %s151, %s152
      %p164 = scmp.eq.s32.totalorder %s30, 3
      %p165 = por %p163, %p164
      %p167 = scmp.ne.s32.totalorder %s152, %s166
      %p168 = scmp.eq.s32.totalorder %s30, 0
      %p169 = por %p167, %p168
      %s171 = sadd.s32 %s170, 1
      %p174 = scmp.eq.s32.totalorder %s24, 3
      %p175 = scmp.ne.s32.totalorder %s170, %s172
      %p176 = scmp.eq.s32.totalorder %s24, 0
      %p177 = por %p175, %p176
      %p178 = scmp.ne.s32.totalorder %s170, %s172
      %p179 = scmp.eq.s32.totalorder %s29, 3
      %p180 = por %p178, %p179
      %p181 = scmp.ne.s32.totalorder %s172, %s173
      %p182 = scmp.eq.s32.totalorder %s29, 0
      %p183 = por %p181, %p182
      %p184 = scmp.ne.s32.totalorder %s172, %s173
      %p185 = scmp.eq.s32.totalorder %s30, 3
      %p186 = por %p184, %p185
      %p188 = scmp.ne.s32.totalorder %s173, %s187
      %p189 = scmp.eq.s32.totalorder %s30, 0
      %p190 = por %p188, %p189
      %s192 = sadd.s32 %s191, 1
      %p195 = scmp.eq.s32.totalorder %s24, 3
      %p196 = scmp.ne.s32.totalorder %s191, %s193
      %p197 = scmp.eq.s32.totalorder %s24, 0
      %p198 = por %p196, %p197
      %p199 = scmp.ne.s32.totalorder %s191, %s193
      %p200 = scmp.eq.s32.totalorder %s29, 3
      %p201 = por %p199, %p200
      %p202 = scmp.ne.s32.totalorder %s193, %s194
      %p203 = scmp.eq.s32.totalorder %s29, 0
      %p204 = por %p202, %p203
      %p205 = scmp.ne.s32.totalorder %s193, %s194
      %p206 = scmp.eq.s32.totalorder %s30, 3
      %p207 = por %p205, %p206
      %p209 = scmp.ne.s32.totalorder %s194, %s208
      %p210 = scmp.eq.s32.totalorder %s30, 0
      %p211 = por %p209, %p210
      %s213 = sadd.s32 %s212, 1
      %p216 = scmp.eq.s32.totalorder %s24, 3
      %p217 = scmp.ne.s32.totalorder %s212, %s214
      %p218 = scmp.eq.s32.totalorder %s24, 0
      %p219 = por %p217, %p218
      %p220 = scmp.ne.s32.totalorder %s212, %s214
      %p221 = scmp.eq.s32.totalorder %s29, 3
      %p222 = por %p220, %p221
      %p223 = scmp.ne.s32.totalorder %s214, %s215
      %p224 = scmp.eq.s32.totalorder %s29, 0
      %p225 = por %p223, %p224
      %p226 = scmp.ne.s32.totalorder %s214, %s215
      %p227 = scmp.eq.s32.totalorder %s30, 3
      %p228 = por %p226, %p227
      %p230 = scmp.ne.s32.totalorder %s215, %s229
      %p231 = scmp.eq.s32.totalorder %s30, 0
      %p232 = por %p230, %p231
      %s233 = ssub.s32 %s24, %s31
      %p234 = scmp.eq.s32.totalorder %s233, 0
      %s236 = sadd.s32 %s235, 1
      %s237 = scalar_select %p234, %s235, %s236
      %p240 = pneg %p234
      %p241 = scmp.eq.s32.totalorder %s24, 3
      %p242 = por %p240, %p241
      %p243 = scmp.ne.s32.totalorder %s235, %s238
      %p244 = scmp.eq.s32.totalorder %s24, 0
      %p245 = por %p243, %p244
      %p246 = scmp.ne.s32.totalorder %s235, %s238
      %p247 = scmp.eq.s32.totalorder %s29, 3
      %p248 = por %p246, %p247
      %p249 = scmp.ne.s32.totalorder %s238, %s239
      %p250 = scmp.eq.s32.totalorder %s29, 0
      %p251 = por %p249, %p250
      %p252 = scmp.ne.s32.totalorder %s238, %s239
      %p253 = scmp.eq.s32.totalorder %s30, 3
      %p254 = por %p252, %p253
      %p256 = scmp.ne.s32.totalorder %s239, %s255
      %p257 = scmp.eq.s32.totalorder %s30, 0
      %p258 = por %p256, %p257
      %s259 = ssub.s32 3, %s24
      %s260 = ssub.s32 3, %s31
      %s261 = ssub.s32 %s259, %s260
      %p262 = scmp.eq.s32.totalorder %s261, 0
      %s264 = sadd.s32 %s263, 1
      %s265 = scalar_select %p262, %s263, %s264
      %p268 = pneg %p262
      %p269 = scmp.eq.s32.totalorder %s24, 3
      %p270 = por %p268, %p269
      %p271 = scmp.ne.s32.totalorder %s263, %s266
      %p272 = scmp.eq.s32.totalorder %s24, 0
      %p273 = por %p271, %p272
      %p274 = scmp.ne.s32.totalorder %s263, %s266
      %p275 = scmp.eq.s32.totalorder %s29, 3
      %p276 = por %p274, %p275
      %p277 = scmp.ne.s32.totalorder %s266, %s267
      %p278 = scmp.eq.s32.totalorder %s29, 0
      %p279 = por %p277, %p278
      %p280 = scmp.ne.s32.totalorder %s266, %s267
      %p281 = scmp.eq.s32.totalorder %s30, 3
      %p282 = por %p280, %p281
      %p284 = scmp.ne.s32.totalorder %s267, %s283
      %p285 = scmp.eq.s32.totalorder %s30, 0
      %p286 = por %p284, %p285
      %p287 = scmp.le.s32.totalorder 1, %s24
      %p288 = scmp.lt.s32.totalorder %s24, 5
      %p289 = pnand %p287, %p288
      %p290 = pneg %p289
      // Predicated region
      $region9: #{tpu_custom_call.1} parent=5 // pred_check
        _
      $region10: #{tpu_custom_call.1} parent=5 // pred_check_branch
        %292 = sbr.rel (%p289) target = $region12
      $region11: #{tpu_custom_call.1} parent=5 // pred_region
        %s293 = ssub.s32 %s24, 1
        // Predicated region
        $region13: #{tpu_custom_call.1} parent=11 // pred_check
          %p294 = pneg %p99
        $region14: #{tpu_custom_call.1} parent=11 // pred_check_branch
          %296 = sbr.rel (%p294) target = $region16
        $region15: #{tpu_custom_call.1} parent=11 // pred_region
          _
        $region16: #{tpu_custom_call.1} parent=11 // pred_fallthru
          _
        // Predicated region
        $region17: #{tpu_custom_call.1} parent=11 // pred_check
          %p297 = pneg %p120
        $region18: #{tpu_custom_call.1} parent=11 // pred_check_branch
          %299 = sbr.rel (%p297) target = $region20
        $region19: #{tpu_custom_call.1} parent=11 // pred_region
          _
        $region20: #{tpu_custom_call.1} parent=11 // pred_fallthru
          _
        // Predicated region
        $region21: #{tpu_custom_call.1} parent=11 // pred_check
          %p300 = pneg %p141
        $region22: #{tpu_custom_call.1} parent=11 // pred_check_branch
          %302 = sbr.rel (%p300) target = $region24
        $region23: #{tpu_custom_call.1} parent=11 // pred_region
          %s304 = ssub.s32 24576, 24576
          %305 = vsyncadd [#allocation6], %s304
          %s306 = sshll.u32 [#allocation5], 4
          %s307 = int_to_ptr.vmem [resolvable:$true] %s306
          %312 = dma.hbm_to_vmem [thread:$0]  %s4, 24576, %s307, [#allocation6], 768, 768, 48
        $region24: #{tpu_custom_call.1} parent=11 // pred_fallthru
          _
        // Predicated region
        $region25: #{tpu_custom_call.1} parent=11 // pred_check
          %p313 = pneg %p162
        $region26: #{tpu_custom_call.1} parent=11 // pred_check_branch
          %315 = sbr.rel (%p313) target = $region28
        $region27: #{tpu_custom_call.1} parent=11 // pred_region
          _
        $region28: #{tpu_custom_call.1} parent=11 // pred_fallthru
          _
        // Predicated region
        $region29: #{tpu_custom_call.1} parent=11 // pred_check
          %p316 = pneg %p183
        $region30: #{tpu_custom_call.1} parent=11 // pred_check_branch
          %318 = sbr.rel (%p316) target = $region32
        $region31: #{tpu_custom_call.1} parent=11 // pred_region
          _
        $region32: #{tpu_custom_call.1} parent=11 // pred_fallthru
          _
        // Predicated region
        $region33: #{tpu_custom_call.1} parent=11 // pred_check
          %p319 = pneg %p204
        $region34: #{tpu_custom_call.1} parent=11 // pred_check_branch
          %321 = sbr.rel (%p319) target = $region36
        $region35: #{tpu_custom_call.1} parent=11 // pred_region
          _
        $region36: #{tpu_custom_call.1} parent=11 // pred_fallthru
          _
        // Predicated region
        $region37: #{tpu_custom_call.1} parent=11 // pred_check
          %p322 = pneg %p225
        $region38: #{tpu_custom_call.1} parent=11 // pred_check_branch
          %324 = sbr.rel (%p322) target = $region40
        $region39: #{tpu_custom_call.1} parent=11 // pred_region
          _
        $region40: #{tpu_custom_call.1} parent=11 // pred_fallthru
          _
      $region12: #{tpu_custom_call.1} parent=5 // pred_fallthru
        _
      %p325 = scmp.lt.s32.totalorder %s24, 4
      // Predicated region
      $region41: #{tpu_custom_call.1} parent=5 // pred_check
        %p326 = pneg %p325
      $region42: #{tpu_custom_call.1} parent=5 // pred_check_branch
        %328 = sbr.rel (%p326) target = $region44
      $region43: #{tpu_custom_call.1} parent=5 // pred_region
        // Predicated region
        $region45: #{tpu_custom_call.1} parent=43 // pred_check
          %p329 = pneg %p44
        $region46: #{tpu_custom_call.1} parent=43 // pred_check_branch
          %331 = sbr.rel (%p329) target = $region48
        $region47: #{tpu_custom_call.1} parent=43 // pred_region
          %s332 = smul.u32 2, %s24
          %p333 = scmp.lt.s32.totalorder %s332, 7
          %s334 = scalar_select %p333, %s332, 7
          %s335 = smul.addr %s334, 8
          %s336 = scalar_lea.vmem %s0, %s335
          %s337 = smul.u32 2, %s24
        $region48: #{tpu_custom_call.1} parent=43 // pred_fallthru
          _
        // Predicated region
        $region49: #{tpu_custom_call.1} parent=43 // pred_check
          %p338 = pneg %p72
        $region50: #{tpu_custom_call.1} parent=43 // pred_check_branch
          %340 = sbr.rel (%p338) target = $region52
        $region51: #{tpu_custom_call.1} parent=43 // pred_region
          %s341 = ssub.s32 3, %s24
          %s342 = smul.u32 2, %s341
          %p343 = scmp.lt.s32.totalorder %s342, 7
          %s344 = scalar_select %p343, %s342, 7
          %s345 = smul.addr %s344, 8
          %s346 = scalar_lea.vmem %s1, %s345
          %s347 = ssub.s32 3, %s24
          %s348 = smul.u32 2, %s347
        $region52: #{tpu_custom_call.1} parent=43 // pred_fallthru
          _
      $region44: #{tpu_custom_call.1} parent=5 // pred_fallthru
        _
      %p349 = scmp.le.s32.totalorder 1, %s24
      %p350 = scmp.lt.s32.totalorder %s24, 5
      %p351 = pnand %p349, %p350
      %p352 = pneg %p351
      // Predicated region
      $region53: #{tpu_custom_call.1} parent=5 // pred_check
        _
      $region54: #{tpu_custom_call.1} parent=5 // pred_check_branch
        %354 = sbr.rel (%p351) target = $region56
      $region55: #{tpu_custom_call.1} parent=5 // pred_region
        %s355 = ssub.s32 %s24, 1
        // Predicated region
        $region57: #{tpu_custom_call.1} parent=55 // pred_check
          %p356 = pneg %p141
        $region58: #{tpu_custom_call.1} parent=55 // pred_check_branch
          %358 = sbr.rel (%p356) target = $region60
        $region59: #{tpu_custom_call.1} parent=55 // pred_region
          %359 = dma.done [#allocation6], 24576
        $region60: #{tpu_custom_call.1} parent=55 // pred_fallthru
          _
        %s360 = smul.u32 2, %s29
        %p361 = scmp.lt.s32.totalorder %s360, 7
        %s362 = scalar_select %p361, %s360, 7
        %s363 = smul.addr %s362, 8
        %s364 = scalar_lea.vmem %s0, %s363
        %p365 = pneg %p50
        %p366 = pneg %p47
        %s367 = ssub.s32 3, %s29
        %s368 = smul.u32 2, %s367
        %p369 = scmp.lt.s32.totalorder %s368, 7
        %s370 = scalar_select %p369, %s368, 7
        %s371 = smul.addr %s370, 8
        %s372 = scalar_lea.vmem %s1, %s371
        %p373 = pneg %p78
        %p374 = pneg %p75
        %p375 = pneg %p99
        %p376 = pneg %p96
        %p377 = pneg %p120
        %p378 = pneg %p117
        %p379 = pneg %p141
        %p380 = pneg %p138
        %p381 = pneg %p162
        %p382 = pneg %p159
        %p383 = pneg %p183
        %p384 = pneg %p180
        %p385 = pneg %p204
        %p386 = pneg %p201
        %p387 = pneg %p225
        %p388 = pneg %p222
        %p389 = pneg %p251
        %p390 = pneg %p248
        %s391 = sand.u32 %s238, 1
        %s392 = scalar_lea.sflag [#allocation7], %s391
        %s393 = sand.u32 %s238, 1
        %s394 = smul.addr %s393, 16
        %s395 = scalar_lea.vmem [#allocation8], %s394
        %p396 = pneg %p279
        %p397 = pneg %p276
        %s398 = sand.u32 %s266, 1
        %s399 = scalar_lea.sflag [#allocation10], %s398
        %s400 = sand.u32 %s266, 1
        %s401 = smul.addr %s400, 16
        %s402 = scalar_lea.vmem [#allocation9], %s401
        %s403 = smul.u32 2, %s29
        %p404 = scmp.lt.s32.totalorder %s403, 7
        %s405 = scalar_select %p404, %s403, 7
        %s406 = smul.addr %s405, 8
        %s407 = scalar_lea.vmem %s0, %s406
        %s408 = smul.u32 2, %s29
        %s409 = ssub.s32 3, %s29
        %s410 = smul.u32 2, %s409
        %p411 = scmp.lt.s32.totalorder %s410, 7
        %s412 = scalar_select %p411, %s410, 7
        %s413 = smul.addr %s412, 8
        %s414 = scalar_lea.vmem %s1, %s413
        %s415 = ssub.s32 3, %s29
        %s416 = smul.u32 2, %s415
        %s417 = smul.u32 2, %s29
        %s418 = ssub.s32 3, %s29
        %s419 = smul.u32 2, %s418
        %p420 = scmp.eq.s32.totalorder %s29, 0
        // Predicated region
        $region61: #{tpu_custom_call.1} parent=55 // pred_check
          %p421 = pneg %p420
        $region62: #{tpu_custom_call.1} parent=55 // pred_check_branch
          %423 = sbr.rel (%p421) target = $region64
        $region63: #{tpu_custom_call.1} parent=55 // pred_region
          %424 = vst [vmem:[#allocation4] sm:$0xff] 0.0
          %425 = vst [vmem:[#allocation4 + $0x8] sm:$0xff] 0.0
        $region64: #{tpu_custom_call.1} parent=55 // pred_fallthru
          _
        %v426 = vld [vmem:[%s407] sm:$0xff]
        %v427 = vld [vmem:[%s407 + $0x8] sm:$0xff]
        %v428 = vld [vmem:[%s2] sm:$0xff]
        %v429 = vld [vmem:[%s2 + $0x8] sm:$0xff]
        %v430 = vld [vmem:[%s2 + $0x10] sm:$0xff]
        %v431 = vld [vmem:[%s2 + $0x18] sm:$0xff]
        %v432 = vld [vmem:[%s2 + $0x20] sm:$0xff]
        %v433 = vld [vmem:[%s2 + $0x28] sm:$0xff]
        %v434 = vld [vmem:[%s414] sm:$0xff]
        %v435 = vld [vmem:[%s414 + $0x8] sm:$0xff]
        %v436 = vld [vmem:[%s3] sm:$0xff]
        %v437 = vld [vmem:[%s3 + $0x8] sm:$0xff]
        %v438 = vld [vmem:[%s3 + $0x10] sm:$0xff]
        %v439 = vld [vmem:[%s3 + $0x18] sm:$0xff]
        %v440 = vld [vmem:[%s3 + $0x20] sm:$0xff]
        %v441 = vld [vmem:[%s3 + $0x28] sm:$0xff]
        %v442 = vld [vmem:[%s5] sm:$0x7]
        %v444 = vlaneseq
        %v445 = vshrl.u32 %v444, 7
        %v446 = vsub.s32 0, %v445
        %v447 = vrot.slane %v442, %v446
        %v448 = vlaneseq
        %v449 = vshrl.u32 %v448, 7
        %v450 = vsub.s32 1, %v449
        %v451 = vrot.slane %v442, %v450
        %v452 = vlaneseq
        %v453 = vshrl.u32 %v452, 7
        %v454 = vsub.s32 2, %v453
        %v455 = vrot.slane %v442, %v454
        %vm459 = vcmask 130048
        %v461 = vsel %vm459, %v426, 0
        %v464 = vsel %vm459, %v427, 0
        %466 = vmatprep.subr.mxu0 %v429
        %467 = vmatpush1.msra.mxu0 %v428
        %468 = vmatprep.subr.mxu0 %v432
        %469 = vmatpush1.msra.mxu0 %v431
        %470 = vmatprep.subr.mxu0 0.0
        %471 = vmatpush1.msra.mxu0 0.0
        %472 = vmatprep.subr.mxu0 0.0
        %473 = vmatpush1.msra.mxu0 0.0
        %474 = vmatprep.subr.mxu0 0.0
        %475 = vmatpush1.msra.mxu0 0.0
        %476 = vmatprep.subr.mxu0 0.0
        %477 = vmatpush1.msra.mxu0 0.0
        %478 = vmatprep.subr.mxu0 0.0
        %479 = vmatpush1.msra.mxu0 0.0
        %480 = vmatprep.subr.mxu0 0.0
        %481 = vmatpush1.msra.mxu0 0.0
        %482 = vmatprep.subr.mxu0 0.0
        %483 = vmatpush1.msra.mxu0 0.0
        %484 = vmatprep.subr.mxu0 0.0
        %485 = vmatpush1.msra.mxu0 0.0
        %486 = vmatprep.subr.mxu0 0.0
        %487 = vmatpush1.msra.mxu0 0.0
        %488 = vmatprep.subr.mxu0 0.0
        %489 = vmatpush1.msra.mxu0 0.0
        %490 = vmatprep.subr.mxu0 0.0
        %491 = vmatpush1.msra.mxu0 0.0
        %492 = vmatprep.subr.mxu0 0.0
        %493 = vmatpush1.msra.mxu0 0.0
        %494 = vmatprep.subr.mxu0 0.0
        %495 = vmatpush1.msra.mxu0 0.0
        %496 = vmatprep.subr.mxu0 0.0
        %497 = vmatpush1.msra.mxu0 0.0
        %498 = vmatprep.subr.mxu0 0.0
        %499 = vmatpush1.msra.mxu0 0.0
        %500 = vmatprep.subr.mxu0 0.0
        %501 = vmatpush1.msra.mxu0 0.0
        %502 = vmatprep.subr.mxu0 0.0
        %503 = vmatpush1.msra.mxu0 0.0
        %504 = vmatprep.subr.mxu0 0.0
        %505 = vmatpush1.msra.mxu0 0.0
        %506 = vmatprep.subr.mxu0 0.0
        %507 = vmatpush1.msra.mxu0 0.0
        %508 = vmatprep.subr.mxu0 0.0
        %509 = vmatpush1.msra.mxu0 0.0
        %510 = vmatprep.subr.mxu0 0.0
        %511 = vmatpush1.msra.mxu0 0.0
        %512 = vmatprep.subr.mxu0 0.0
        %513 = vmatpush1.msra.mxu0 0.0
        %514 = vmatprep.subr.mxu0 0.0
        %515 = vmatpush1.msra.mxu0 0.0
        %516 = vmatprep.subr.mxu0 0.0
        %517 = vmatpush1.msra.mxu0 0.0
        %518 = vmatprep.subr.mxu0 0.0
        %519 = vmatpush1.msra.mxu0 0.0
        %520 = vmatprep.subr.mxu0 0.0
        %521 = vmatpush1.msra.mxu0 0.0
        %522 = vmatprep.subr.mxu0 0.0
        %523 = vmatpush1.msra.mxu0 0.0
        %524 = vmatprep.subr.mxu0 0.0
        %525 = vmatpush1.msra.mxu0 0.0
        %526 = vmatprep.subr.mxu0 0.0
        %527 = vmatpush1.msra.mxu0 0.0
        %528 = vmatprep.subr.mxu0 0.0
        %529 = vmatpush1.msra.mxu0 0.0
        %530 = vmatprep.mubr.f32.mxu0 0.0
        %531 = vmatmul.mubr.f32.gmra.mrb[0].mxu0 %v461
        %v532 = vpop.f32.mrb[0].mxu0
        %v533 = vadd.f32 %v447, %v532
        %v534 = vpop.f32.mrb[0].mxu0
        %v535 = vadd.f32 %v451, %v534
        %536 = vmatprep.mubr.f32.mxu0 0.0
        %537 = vmatmul.mubr.f32.gmra.mrb[0].mxu0 %v464
        %v538 = vpop.f32.mrb[0].mxu0
        %v539 = vadd.f32 %v447, %v538
        %v540 = vpop.f32.mrb[0].mxu0
        %v541 = vadd.f32 %v451, %v540
        %542 = vdwg.mxu0
        %543 = vmatprep.subr.mxu0 0.0
        %544 = vmatpush1.msra.mxu0 %v430
        %545 = vmatprep.subr.mxu0 0.0
        %546 = vmatpush1.msra.mxu0 %v433
        %547 = vmatprep.subr.mxu0 0.0
        %548 = vmatpush1.msra.mxu0 0.0
        %549 = vmatprep.subr.mxu0 0.0
        %550 = vmatpush1.msra.mxu0 0.0
        %551 = vmatprep.subr.mxu0 0.0
        %552 = vmatpush1.msra.mxu0 0.0
        %553 = vmatprep.subr.mxu0 0.0
        %554 = vmatpush1.msra.mxu0 0.0
        %555 = vmatprep.subr.mxu0 0.0
        %556 = vmatpush1.msra.mxu0 0.0
        %557 = vmatprep.subr.mxu0 0.0
        %558 = vmatpush1.msra.mxu0 0.0
        %559 = vmatprep.subr.mxu0 0.0
        %560 = vmatpush1.msra.mxu0 0.0
        %561 = vmatprep.subr.mxu0 0.0
        %562 = vmatpush1.msra.mxu0 0.0
        %563 = vmatprep.subr.mxu0 0.0
        %564 = vmatpush1.msra.mxu0 0.0
        %565 = vmatprep.subr.mxu0 0.0
        %566 = vmatpush1.msra.mxu0 0.0
        %567 = vmatprep.subr.mxu0 0.0
        %568 = vmatpush1.msra.mxu0 0.0
        %569 = vmatprep.subr.mxu0 0.0
        %570 = vmatpush1.msra.mxu0 0.0
        %571 = vmatprep.subr.mxu0 0.0
        %572 = vmatpush1.msra.mxu0 0.0
        %573 = vmatprep.subr.mxu0 0.0
        %574 = vmatpush1.msra.mxu0 0.0
        %575 = vmatprep.subr.mxu0 0.0
        %576 = vmatpush1.msra.mxu0 0.0
        %577 = vmatprep.subr.mxu0 0.0
        %578 = vmatpush1.msra.mxu0 0.0
        %579 = vmatprep.subr.mxu0 0.0
        %580 = vmatpush1.msra.mxu0 0.0
        %581 = vmatprep.subr.mxu0 0.0
        %582 = vmatpush1.msra.mxu0 0.0
        %583 = vmatprep.subr.mxu0 0.0
        %584 = vmatpush1.msra.mxu0 0.0
        %585 = vmatprep.subr.mxu0 0.0
        %586 = vmatpush1.msra.mxu0 0.0
        %587 = vmatprep.subr.mxu0 0.0
        %588 = vmatpush1.msra.mxu0 0.0
        %589 = vmatprep.subr.mxu0 0.0
        %590 = vmatpush1.msra.mxu0 0.0
        %591 = vmatprep.subr.mxu0 0.0
        %592 = vmatpush1.msra.mxu0 0.0
        %593 = vmatprep.subr.mxu0 0.0
        %594 = vmatpush1.msra.mxu0 0.0
        %595 = vmatprep.subr.mxu0 0.0
        %596 = vmatpush1.msra.mxu0 0.0
        %597 = vmatprep.subr.mxu0 0.0
        %598 = vmatpush1.msra.mxu0 0.0
        %599 = vmatprep.subr.mxu0 0.0
        %600 = vmatpush1.msra.mxu0 0.0
        %601 = vmatprep.subr.mxu0 0.0
        %602 = vmatpush1.msra.mxu0 0.0
        %603 = vmatprep.subr.mxu0 0.0
        %604 = vmatpush1.msra.mxu0 0.0
        %605 = vmatprep.subr.mxu0 0.0
        %606 = vmatpush1.msra.mxu0 0.0
        %607 = vmatprep.mubr.f32.mxu0 0.0
        %608 = vmatmul.mubr.f32.gmra.mrb[0].mxu0 %v461
        %v609 = vpop.f32.mrb[0].mxu0
        %v610 = vadd.f32 %v455, %v609
        %v611 = vpop.f32.mrb[0].mxu0
        %612 = vmatprep.mubr.f32.mxu0 0.0
        %613 = vmatmul.mubr.f32.gmra.mrb[0].mxu0 %v464
        %v614 = vpop.f32.mrb[0].mxu0
        %v615 = vadd.f32 %v455, %v614
        %v616 = vpop.f32.mrb[0].mxu0
        %617 = vdwg.mxu0
        %618 = vst [vmem:[#allocation2] sm:$0xff] %v533
        %619 = vst [vmem:[#allocation2 + $0x8] sm:$0xff] %v535
        %620 = vst [vmem:[#allocation2 + $0x10] sm:$0xff] %v610
        %621 = vst [vmem:[#allocation2 + $0x18] sm:$0xff] %v539
        %622 = vst [vmem:[#allocation2 + $0x20] sm:$0xff] %v541
        %623 = vst [vmem:[#allocation2 + $0x28] sm:$0xff] %v615
        %v624 = vld [vmem:[%s6] sm:$0x7]
        %v626 = vlaneseq
        %v627 = vshrl.u32 %v626, 7
        %v628 = vsub.s32 0, %v627
        %v629 = vrot.slane %v624, %v628
        %v630 = vlaneseq
        %v631 = vshrl.u32 %v630, 7
        %v632 = vsub.s32 1, %v631
        %v633 = vrot.slane %v624, %v632
        %v634 = vlaneseq
        %v635 = vshrl.u32 %v634, 7
        %v636 = vsub.s32 2, %v635
        %v637 = vrot.slane %v624, %v636
        %v642 = vsel %vm459, %v434, 0
        %v645 = vsel %vm459, %v435, 0
        %647 = vmatprep.subr.mxu0 %v437
        %648 = vmatpush1.msra.mxu0 %v436
        %649 = vmatprep.subr.mxu0 %v440
        %650 = vmatpush1.msra.mxu0 %v439
        %651 = vmatprep.subr.mxu0 0.0
        %652 = vmatpush1.msra.mxu0 0.0
        %653 = vmatprep.subr.mxu0 0.0
        %654 = vmatpush1.msra.mxu0 0.0
        %655 = vmatprep.subr.mxu0 0.0
        %656 = vmatpush1.msra.mxu0 0.0
        %657 = vmatprep.subr.mxu0 0.0
        %658 = vmatpush1.msra.mxu0 0.0
        %659 = vmatprep.subr.mxu0 0.0
        %660 = vmatpush1.msra.mxu0 0.0
        %661 = vmatprep.subr.mxu0 0.0
        %662 = vmatpush1.msra.mxu0 0.0
        %663 = vmatprep.subr.mxu0 0.0
        %664 = vmatpush1.msra.mxu0 0.0
        %665 = vmatprep.subr.mxu0 0.0
        %666 = vmatpush1.msra.mxu0 0.0
        %667 = vmatprep.subr.mxu0 0.0
        %668 = vmatpush1.msra.mxu0 0.0
        %669 = vmatprep.subr.mxu0 0.0
        %670 = vmatpush1.msra.mxu0 0.0
        %671 = vmatprep.subr.mxu0 0.0
        %672 = vmatpush1.msra.mxu0 0.0
        %673 = vmatprep.subr.mxu0 0.0
        %674 = vmatpush1.msra.mxu0 0.0
        %675 = vmatprep.subr.mxu0 0.0
        %676 = vmatpush1.msra.mxu0 0.0
        %677 = vmatprep.subr.mxu0 0.0
        %678 = vmatpush1.msra.mxu0 0.0
        %679 = vmatprep.subr.mxu0 0.0
        %680 = vmatpush1.msra.mxu0 0.0
        %681 = vmatprep.subr.mxu0 0.0
        %682 = vmatpush1.msra.mxu0 0.0
        %683 = vmatprep.subr.mxu0 0.0
        %684 = vmatpush1.msra.mxu0 0.0
        %685 = vmatprep.subr.mxu0 0.0
        %686 = vmatpush1.msra.mxu0 0.0
        %687 = vmatprep.subr.mxu0 0.0
        %688 = vmatpush1.msra.mxu0 0.0
        %689 = vmatprep.subr.mxu0 0.0
        %690 = vmatpush1.msra.mxu0 0.0
        %691 = vmatprep.subr.mxu0 0.0
        %692 = vmatpush1.msra.mxu0 0.0
        %693 = vmatprep.subr.mxu0 0.0
        %694 = vmatpush1.msra.mxu0 0.0
        %695 = vmatprep.subr.mxu0 0.0
        %696 = vmatpush1.msra.mxu0 0.0
        %697 = vmatprep.subr.mxu0 0.0
        %698 = vmatpush1.msra.mxu0 0.0
        %699 = vmatprep.subr.mxu0 0.0
        %700 = vmatpush1.msra.mxu0 0.0
        %701 = vmatprep.subr.mxu0 0.0
        %702 = vmatpush1.msra.mxu0 0.0
        %703 = vmatprep.subr.mxu0 0.0
        %704 = vmatpush1.msra.mxu0 0.0
        %705 = vmatprep.subr.mxu0 0.0
        %706 = vmatpush1.msra.mxu0 0.0
        %707 = vmatprep.subr.mxu0 0.0
        %708 = vmatpush1.msra.mxu0 0.0
        %709 = vmatprep.subr.mxu0 0.0
        %710 = vmatpush1.msra.mxu0 0.0
        %711 = vmatprep.mubr.f32.mxu0 0.0
        %712 = vmatmul.mubr.f32.gmra.mrb[0].mxu0 %v642
        %v713 = vpop.f32.mrb[0].mxu0
        %v714 = vadd.f32 %v629, %v713
        %v715 = vpop.f32.mrb[0].mxu0
        %v716 = vadd.f32 %v633, %v715
        %717 = vmatprep.mubr.f32.mxu0 0.0
        %718 = vmatmul.mubr.f32.gmra.mrb[0].mxu0 %v645
        %v719 = vpop.f32.mrb[0].mxu0
        %v720 = vadd.f32 %v629, %v719
        %v721 = vpop.f32.mrb[0].mxu0
        %v722 = vadd.f32 %v633, %v721
        %723 = vdwg.mxu0
        %724 = vmatprep.subr.mxu0 0.0
        %725 = vmatpush1.msra.mxu0 %v438
        %726 = vmatprep.subr.mxu0 0.0
        %727 = vmatpush1.msra.mxu0 %v441
        %728 = vmatprep.subr.mxu0 0.0
        %729 = vmatpush1.msra.mxu0 0.0
        %730 = vmatprep.subr.mxu0 0.0
        %731 = vmatpush1.msra.mxu0 0.0
        %732 = vmatprep.subr.mxu0 0.0
        %733 = vmatpush1.msra.mxu0 0.0
        %734 = vmatprep.subr.mxu0 0.0
        %735 = vmatpush1.msra.mxu0 0.0
        %736 = vmatprep.subr.mxu0 0.0
        %737 = vmatpush1.msra.mxu0 0.0
        %738 = vmatprep.subr.mxu0 0.0
        %739 = vmatpush1.msra.mxu0 0.0
        %740 = vmatprep.subr.mxu0 0.0
        %741 = vmatpush1.msra.mxu0 0.0
        %742 = vmatprep.subr.mxu0 0.0
        %743 = vmatpush1.msra.mxu0 0.0
        %744 = vmatprep.subr.mxu0 0.0
        %745 = vmatpush1.msra.mxu0 0.0
        %746 = vmatprep.subr.mxu0 0.0
        %747 = vmatpush1.msra.mxu0 0.0
        %748 = vmatprep.subr.mxu0 0.0
        %749 = vmatpush1.msra.mxu0 0.0
        %750 = vmatprep.subr.mxu0 0.0
        %751 = vmatpush1.msra.mxu0 0.0
        %752 = vmatprep.subr.mxu0 0.0
        %753 = vmatpush1.msra.mxu0 0.0
        %754 = vmatprep.subr.mxu0 0.0
        %755 = vmatpush1.msra.mxu0 0.0
        %756 = vmatprep.subr.mxu0 0.0
        %757 = vmatpush1.msra.mxu0 0.0
        %758 = vmatprep.subr.mxu0 0.0
        %759 = vmatpush1.msra.mxu0 0.0
        %760 = vmatprep.subr.mxu0 0.0
        %761 = vmatpush1.msra.mxu0 0.0
        %762 = vmatprep.subr.mxu0 0.0
        %763 = vmatpush1.msra.mxu0 0.0
        %764 = vmatprep.subr.mxu0 0.0
        %765 = vmatpush1.msra.mxu0 0.0
        %766 = vmatprep.subr.mxu0 0.0
        %767 = vmatpush1.msra.mxu0 0.0
        %768 = vmatprep.subr.mxu0 0.0
        %769 = vmatpush1.msra.mxu0 0.0
        %770 = vmatprep.subr.mxu0 0.0
        %771 = vmatpush1.msra.mxu0 0.0
        %772 = vmatprep.subr.mxu0 0.0
        %773 = vmatpush1.msra.mxu0 0.0
        %774 = vmatprep.subr.mxu0 0.0
        %775 = vmatpush1.msra.mxu0 0.0
        %776 = vmatprep.subr.mxu0 0.0
        %777 = vmatpush1.msra.mxu0 0.0
        %778 = vmatprep.subr.mxu0 0.0
        %779 = vmatpush1.msra.mxu0 0.0
        %780 = vmatprep.subr.mxu0 0.0
        %781 = vmatpush1.msra.mxu0 0.0
        %782 = vmatprep.subr.mxu0 0.0
        %783 = vmatpush1.msra.mxu0 0.0
        %784 = vmatprep.subr.mxu0 0.0
        %785 = vmatpush1.msra.mxu0 0.0
        %786 = vmatprep.subr.mxu0 0.0
        %787 = vmatpush1.msra.mxu0 0.0
        %788 = vmatprep.mubr.f32.mxu0 0.0
        %789 = vmatmul.mubr.f32.gmra.mrb[0].mxu0 %v642
        %v790 = vpop.f32.mrb[0].mxu0
        %v791 = vadd.f32 %v637, %v790
        %v792 = vpop.f32.mrb[0].mxu0
        %793 = vmatprep.mubr.f32.mxu0 0.0
        %794 = vmatmul.mubr.f32.gmra.mrb[0].mxu0 %v645
        %v795 = vpop.f32.mrb[0].mxu0
        %v796 = vadd.f32 %v637, %v795
        %v797 = vpop.f32.mrb[0].mxu0
        %798 = vdwg.mxu0
        %799 = vst [vmem:[#allocation3] sm:$0xff] %v714
        %800 = vst [vmem:[#allocation3 + $0x8] sm:$0xff] %v716
        %801 = vst [vmem:[#allocation3 + $0x10] sm:$0xff] %v791
        %802 = vst [vmem:[#allocation3 + $0x18] sm:$0xff] %v720
        %803 = vst [vmem:[#allocation3 + $0x20] sm:$0xff] %v722
        %804 = vst [vmem:[#allocation3 + $0x28] sm:$0xff] %v796
        %v805 = vld [vmem:[#allocation5] sm:$0xff]
        %v806 = vld [vmem:[#allocation5 + $0x8] sm:$0xff]
        %v807 = vld [vmem:[#allocation5 + $0x10] sm:$0xff]
        %v808 = vld [vmem:[#allocation5 + $0x18] sm:$0xff]
        %v809 = vld [vmem:[#allocation5 + $0x20] sm:$0xff]
        %v810 = vld [vmem:[#allocation5 + $0x28] sm:$0xff]
        %v811 = vld [vmem:[#allocation5 + $0x30] sm:$0xff]
        %v812 = vld [vmem:[#allocation5 + $0x38] sm:$0xff]
        %v813 = vld [vmem:[#allocation5 + $0x40] sm:$0xff]
        %v814 = vld [vmem:[#allocation5 + $0x48] sm:$0xff]
        %v815 = vld [vmem:[#allocation5 + $0x50] sm:$0xff]
        %v816 = vld [vmem:[#allocation5 + $0x58] sm:$0xff]
        %v817 = vld [vmem:[#allocation5 + $0x60] sm:$0xff]
        %v818 = vld [vmem:[#allocation5 + $0x68] sm:$0xff]
        %v819 = vld [vmem:[#allocation5 + $0x70] sm:$0xff]
        %v820 = vld [vmem:[#allocation5 + $0x78] sm:$0xff]
        %v821 = vld [vmem:[#allocation5 + $0x80] sm:$0xff]
        %v822 = vld [vmem:[#allocation5 + $0x88] sm:$0xff]
        %v823 = vld [vmem:[#allocation5 + $0x90] sm:$0xff]
        %v824 = vld [vmem:[#allocation5 + $0x98] sm:$0xff]
        %v825 = vld [vmem:[#allocation5 + $0xa0] sm:$0xff]
        %v826 = vld [vmem:[#allocation5 + $0xa8] sm:$0xff]
        %v827 = vld [vmem:[#allocation5 + $0xb0] sm:$0xff]
        %v828 = vld [vmem:[#allocation5 + $0xb8] sm:$0xff]
        %v829 = vld [vmem:[#allocation5 + $0xc0] sm:$0xff]
        %v830 = vld [vmem:[#allocation5 + $0xc8] sm:$0xff]
        %v831 = vld [vmem:[#allocation5 + $0xd0] sm:$0xff]
        %v832 = vld [vmem:[#allocation5 + $0xd8] sm:$0xff]
        %v833 = vld [vmem:[#allocation5 + $0xe0] sm:$0xff]
        %v834 = vld [vmem:[#allocation5 + $0xe8] sm:$0xff]
        %v835 = vld [vmem:[#allocation5 + $0xf0] sm:$0xff]
        %v836 = vld [vmem:[#allocation5 + $0xf8] sm:$0xff]
        %v837 = vld [vmem:[#allocation5 + $0x100] sm:$0xff]
        %v838 = vld [vmem:[#allocation5 + $0x108] sm:$0xff]
        %v839 = vld [vmem:[#allocation5 + $0x110] sm:$0xff]
        %v840 = vld [vmem:[#allocation5 + $0x118] sm:$0xff]
        %v841 = vld [vmem:[#allocation5 + $0x120] sm:$0xff]
        %v842 = vld [vmem:[#allocation5 + $0x128] sm:$0xff]
        %v843 = vld [vmem:[#allocation5 + $0x130] sm:$0xff]
        %v844 = vld [vmem:[#allocation5 + $0x138] sm:$0xff]
        %v845 = vld [vmem:[#allocation5 + $0x140] sm:$0xff]
        %v846 = vld [vmem:[#allocation5 + $0x148] sm:$0xff]
        %v847 = vld [vmem:[#allocation5 + $0x150] sm:$0xff]
        %v848 = vld [vmem:[#allocation5 + $0x158] sm:$0xff]
        %v849 = vld [vmem:[#allocation5 + $0x160] sm:$0xff]
        %v850 = vld [vmem:[#allocation5 + $0x168] sm:$0xff]
        %v851 = vld [vmem:[#allocation5 + $0x170] sm:$0xff]
        %v852 = vld [vmem:[#allocation5 + $0x178] sm:$0xff]
        %v853 = vld [vmem:[#allocation5 + $0x180] sm:$0xff]
        %v854 = vld [vmem:[#allocation5 + $0x188] sm:$0xff]
        %v855 = vld [vmem:[#allocation5 + $0x190] sm:$0xff]
        %v856 = vld [vmem:[#allocation5 + $0x198] sm:$0xff]
        %v857 = vld [vmem:[#allocation5 + $0x1a0] sm:$0xff]
        %v858 = vld [vmem:[#allocation5 + $0x1a8] sm:$0xff]
        %v859 = vld [vmem:[#allocation5 + $0x1b0] sm:$0xff]
        %v860 = vld [vmem:[#allocation5 + $0x1b8] sm:$0xff]
        %v861 = vld [vmem:[#allocation5 + $0x1c0] sm:$0xff]
        %v862 = vld [vmem:[#allocation5 + $0x1c8] sm:$0xff]
        %v863 = vld [vmem:[#allocation5 + $0x1d0] sm:$0xff]
        %v864 = vld [vmem:[#allocation5 + $0x1d8] sm:$0xff]
        %v865 = vld [vmem:[#allocation5 + $0x1e0] sm:$0xff]
        %v866 = vld [vmem:[#allocation5 + $0x1e8] sm:$0xff]
        %v867 = vld [vmem:[#allocation5 + $0x1f0] sm:$0xff]
        %v868 = vld [vmem:[#allocation5 + $0x1f8] sm:$0xff]
        %v869 = vld [vmem:[#allocation5 + $0x200] sm:$0xff]
        %v870 = vld [vmem:[#allocation5 + $0x208] sm:$0xff]
        %v871 = vld [vmem:[#allocation5 + $0x210] sm:$0xff]
        %v872 = vld [vmem:[#allocation5 + $0x218] sm:$0xff]
        %v873 = vld [vmem:[#allocation5 + $0x220] sm:$0xff]
        %v874 = vld [vmem:[#allocation5 + $0x228] sm:$0xff]
        %v875 = vld [vmem:[#allocation5 + $0x230] sm:$0xff]
        %v876 = vld [vmem:[#allocation5 + $0x238] sm:$0xff]
        %v877 = vld [vmem:[#allocation5 + $0x240] sm:$0xff]
        %v878 = vld [vmem:[#allocation5 + $0x248] sm:$0xff]
        %v879 = vld [vmem:[#allocation5 + $0x250] sm:$0xff]
        %v880 = vld [vmem:[#allocation5 + $0x258] sm:$0xff]
        %v881 = vld [vmem:[#allocation5 + $0x260] sm:$0xff]
        %v882 = vld [vmem:[#allocation5 + $0x268] sm:$0xff]
        %v883 = vld [vmem:[#allocation5 + $0x270] sm:$0xff]
        %v884 = vld [vmem:[#allocation5 + $0x278] sm:$0xff]
        %v885 = vld [vmem:[#allocation5 + $0x280] sm:$0xff]
        %v886 = vld [vmem:[#allocation5 + $0x288] sm:$0xff]
        %v887 = vld [vmem:[#allocation5 + $0x290] sm:$0xff]
        %v888 = vld [vmem:[#allocation5 + $0x298] sm:$0xff]
        %v889 = vld [vmem:[#allocation5 + $0x2a0] sm:$0xff]
        %v890 = vld [vmem:[#allocation5 + $0x2a8] sm:$0xff]
        %v891 = vld [vmem:[#allocation5 + $0x2b0] sm:$0xff]
        %v892 = vld [vmem:[#allocation5 + $0x2b8] sm:$0xff]
        %v893 = vld [vmem:[#allocation5 + $0x2c0] sm:$0xff]
        %v894 = vld [vmem:[#allocation5 + $0x2c8] sm:$0xff]
        %v895 = vld [vmem:[#allocation5 + $0x2d0] sm:$0xff]
        %v896 = vld [vmem:[#allocation5 + $0x2d8] sm:$0xff]
        %v897 = vld [vmem:[#allocation5 + $0x2e0] sm:$0xff]
        %v898 = vld [vmem:[#allocation5 + $0x2e8] sm:$0xff]
        %v899 = vld [vmem:[#allocation5 + $0x2f0] sm:$0xff]
        %v900 = vld [vmem:[#allocation5 + $0x2f8] sm:$0xff]
        %v901 = vld [vmem:[#allocation5 + $0x300] sm:$0xff]
        %v902 = vld [vmem:[#allocation5 + $0x308] sm:$0xff]
        %v903 = vld [vmem:[#allocation5 + $0x310] sm:$0xff]
        %v904 = vld [vmem:[#allocation5 + $0x318] sm:$0xff]
        %v905 = vld [vmem:[#allocation5 + $0x320] sm:$0xff]
        %v906 = vld [vmem:[#allocation5 + $0x328] sm:$0xff]
        %v907 = vld [vmem:[#allocation5 + $0x330] sm:$0xff]
        %v908 = vld [vmem:[#allocation5 + $0x338] sm:$0xff]
        %v909 = vld [vmem:[#allocation5 + $0x340] sm:$0xff]
        %v910 = vld [vmem:[#allocation5 + $0x348] sm:$0xff]
        %v911 = vld [vmem:[#allocation5 + $0x350] sm:$0xff]
        %v912 = vld [vmem:[#allocation5 + $0x358] sm:$0xff]
        %v913 = vld [vmem:[#allocation5 + $0x360] sm:$0xff]
        %v914 = vld [vmem:[#allocation5 + $0x368] sm:$0xff]
        %v915 = vld [vmem:[#allocation5 + $0x370] sm:$0xff]
        %v916 = vld [vmem:[#allocation5 + $0x378] sm:$0xff]
        %v917 = vld [vmem:[#allocation5 + $0x380] sm:$0xff]
        %v918 = vld [vmem:[#allocation5 + $0x388] sm:$0xff]
        %v919 = vld [vmem:[#allocation5 + $0x390] sm:$0xff]
        %v920 = vld [vmem:[#allocation5 + $0x398] sm:$0xff]
        %v921 = vld [vmem:[#allocation5 + $0x3a0] sm:$0xff]
        %v922 = vld [vmem:[#allocation5 + $0x3a8] sm:$0xff]
        %v923 = vld [vmem:[#allocation5 + $0x3b0] sm:$0xff]
        %v924 = vld [vmem:[#allocation5 + $0x3b8] sm:$0xff]
        %v925 = vld [vmem:[#allocation5 + $0x3c0] sm:$0xff]
        %v926 = vld [vmem:[#allocation5 + $0x3c8] sm:$0xff]
        %v927 = vld [vmem:[#allocation5 + $0x3d0] sm:$0xff]
        %v928 = vld [vmem:[#allocation5 + $0x3d8] sm:$0xff]
        %v929 = vld [vmem:[#allocation5 + $0x3e0] sm:$0xff]
        %v930 = vld [vmem:[#allocation5 + $0x3e8] sm:$0xff]
        %v931 = vld [vmem:[#allocation5 + $0x3f0] sm:$0xff]
        %v932 = vld [vmem:[#allocation5 + $0x3f8] sm:$0xff]
        %v933 = vld [vmem:[#allocation5 + $0x400] sm:$0xff]
        %v934 = vld [vmem:[#allocation5 + $0x408] sm:$0xff]
        %v935 = vld [vmem:[#allocation5 + $0x410] sm:$0xff]
        %v936 = vld [vmem:[#allocation5 + $0x418] sm:$0xff]
        %v937 = vld [vmem:[#allocation5 + $0x420] sm:$0xff]
        %v938 = vld [vmem:[#allocation5 + $0x428] sm:$0xff]
        %v939 = vld [vmem:[#allocation5 + $0x430] sm:$0xff]
        %v940 = vld [vmem:[#allocation5 + $0x438] sm:$0xff]
        %v941 = vld [vmem:[#allocation5 + $0x440] sm:$0xff]
        %v942 = vld [vmem:[#allocation5 + $0x448] sm:$0xff]
        %v943 = vld [vmem:[#allocation5 + $0x450] sm:$0xff]
        %v944 = vld [vmem:[#allocation5 + $0x458] sm:$0xff]
        %v945 = vld [vmem:[#allocation5 + $0x460] sm:$0xff]
        %v946 = vld [vmem:[#allocation5 + $0x468] sm:$0xff]
        %v947 = vld [vmem:[#allocation5 + $0x470] sm:$0xff]
        %v948 = vld [vmem:[#allocation5 + $0x478] sm:$0xff]
        %v949 = vld [vmem:[#allocation5 + $0x480] sm:$0xff]
        %v950 = vld [vmem:[#allocation5 + $0x488] sm:$0xff]
        %v951 = vld [vmem:[#allocation5 + $0x490] sm:$0xff]
        %v952 = vld [vmem:[#allocation5 + $0x498] sm:$0xff]
        %v953 = vld [vmem:[#allocation5 + $0x4a0] sm:$0xff]
        %v954 = vld [vmem:[#allocation5 + $0x4a8] sm:$0xff]
        %v955 = vld [vmem:[#allocation5 + $0x4b0] sm:$0xff]
        %v956 = vld [vmem:[#allocation5 + $0x4b8] sm:$0xff]
        %v957 = vld [vmem:[#allocation5 + $0x4c0] sm:$0xff]
        %v958 = vld [vmem:[#allocation5 + $0x4c8] sm:$0xff]
        %v959 = vld [vmem:[#allocation5 + $0x4d0] sm:$0xff]
        %v960 = vld [vmem:[#allocation5 + $0x4d8] sm:$0xff]
        %v961 = vld [vmem:[#allocation5 + $0x4e0] sm:$0xff]
        %v962 = vld [vmem:[#allocation5 + $0x4e8] sm:$0xff]
        %v963 = vld [vmem:[#allocation5 + $0x4f0] sm:$0xff]
        %v964 = vld [vmem:[#allocation5 + $0x4f8] sm:$0xff]
        %v965 = vld [vmem:[#allocation5 + $0x500] sm:$0xff]
        %v966 = vld [vmem:[#allocation5 + $0x508] sm:$0xff]
        %v967 = vld [vmem:[#allocation5 + $0x510] sm:$0xff]
        %v968 = vld [vmem:[#allocation5 + $0x518] sm:$0xff]
        %v969 = vld [vmem:[#allocation5 + $0x520] sm:$0xff]
        %v970 = vld [vmem:[#allocation5 + $0x528] sm:$0xff]
        %v971 = vld [vmem:[#allocation5 + $0x530] sm:$0xff]
        %v972 = vld [vmem:[#allocation5 + $0x538] sm:$0xff]
        %v973 = vld [vmem:[#allocation5 + $0x540] sm:$0xff]
        %v974 = vld [vmem:[#allocation5 + $0x548] sm:$0xff]
        %v975 = vld [vmem:[#allocation5 + $0x550] sm:$0xff]
        %v976 = vld [vmem:[#allocation5 + $0x558] sm:$0xff]
        %v977 = vld [vmem:[#allocation5 + $0x560] sm:$0xff]
        %v978 = vld [vmem:[#allocation5 + $0x568] sm:$0xff]
        %v979 = vld [vmem:[#allocation5 + $0x570] sm:$0xff]
        %v980 = vld [vmem:[#allocation5 + $0x578] sm:$0xff]
        %v981 = vld [vmem:[#allocation5 + $0x580] sm:$0xff]
        %v982 = vld [vmem:[#allocation5 + $0x588] sm:$0xff]
        %v983 = vld [vmem:[#allocation5 + $0x590] sm:$0xff]
        %v984 = vld [vmem:[#allocation5 + $0x598] sm:$0xff]
        %v985 = vld [vmem:[#allocation5 + $0x5a0] sm:$0xff]
        %v986 = vld [vmem:[#allocation5 + $0x5a8] sm:$0xff]
        %v987 = vld [vmem:[#allocation5 + $0x5b0] sm:$0xff]
        %v988 = vld [vmem:[#allocation5 + $0x5b8] sm:$0xff]
        %v989 = vld [vmem:[#allocation5 + $0x5c0] sm:$0xff]
        %v990 = vld [vmem:[#allocation5 + $0x5c8] sm:$0xff]
        %v991 = vld [vmem:[#allocation5 + $0x5d0] sm:$0xff]
        %v992 = vld [vmem:[#allocation5 + $0x5d8] sm:$0xff]
        %v993 = vld [vmem:[#allocation5 + $0x5e0] sm:$0xff]
        %v994 = vld [vmem:[#allocation5 + $0x5e8] sm:$0xff]
        %v995 = vld [vmem:[#allocation5 + $0x5f0] sm:$0xff]
        %v996 = vld [vmem:[#allocation5 + $0x5f8] sm:$0xff]
        %v997 = vld [vmem:[%s7] sm:$0x1]
        %v999 = vlaneseq
        %v1000 = vshrl.u32 %v999, 7
        %v1001 = vsub.s32 0, %v1000
        %v1002 = vrot.slane %v997, %v1001
        %v1004 = vld [vmem:[%s8] sm:$0x1]
        %v1006 = vlaneseq
        %v1007 = vshrl.u32 %v1006, 7
        %v1008 = vsub.s32 0, %v1007
        %v1009 = vrot.slane %v1004, %v1008
        %v1011 = vld [vmem:[#allocation4] sm:$0xff]
        %v1012 = vld [vmem:[#allocation4 + $0x8] sm:$0xff]
        %s1013 = smul.u32 0, 3
        %s1014 = smul.addr %s1013, 8
        %s1015 = scalar_lea.vmem [#allocation2], %s1014
        %v1016 = vld [vmem:[%s1015] sm:$0xff]
        %v1017 = vld [vmem:[%s1015 + $0x8] sm:$0xff]
        %v1018 = vld [vmem:[%s1015 + $0x10] sm:$0xff]
        %s1019 = smul.u32 1, 3
        %s1020 = smul.addr %s1019, 8
        %s1021 = scalar_lea.vmem [#allocation3], %s1020
        %v1022 = vld [vmem:[%s1021] sm:$0xff]
        %v1023 = vld [vmem:[%s1021 + $0x8] sm:$0xff]
        %v1024 = vld [vmem:[%s1021 + $0x10] sm:$0xff]
        %1025 = vmatprep.subr.mxu0 %v806
        %1026 = vmatpush1.msra.mxu0 %v805
        %1027 = vmatprep.subr.mxu0 %v812
        %1028 = vmatpush1.msra.mxu0 %v811
        %1029 = vmatprep.subr.mxu0 %v818
        %1030 = vmatpush1.msra.mxu0 %v817
        %1031 = vmatprep.subr.mxu0 %v824
        %1032 = vmatpush1.msra.mxu0 %v823
        %1033 = vmatprep.subr.mxu0 %v830
        %1034 = vmatpush1.msra.mxu0 %v829
        %1035 = vmatprep.subr.mxu0 %v836
        %1036 = vmatpush1.msra.mxu0 %v835
        %1037 = vmatprep.subr.mxu0 %v842
        %1038 = vmatpush1.msra.mxu0 %v841
        %1039 = vmatprep.subr.mxu0 %v848
        %1040 = vmatpush1.msra.mxu0 %v847
        %1041 = vmatprep.subr.mxu0 %v854
        %1042 = vmatpush1.msra.mxu0 %v853
        %1043 = vmatprep.subr.mxu0 %v860
        %1044 = vmatpush1.msra.mxu0 %v859
        %1045 = vmatprep.subr.mxu0 %v866
        %1046 = vmatpush1.msra.mxu0 %v865
        %1047 = vmatprep.subr.mxu0 %v872
        %1048 = vmatpush1.msra.mxu0 %v871
        %1049 = vmatprep.subr.mxu0 %v878
        %1050 = vmatpush1.msra.mxu0 %v877
        %1051 = vmatprep.subr.mxu0 %v884
        %1052 = vmatpush1.msra.mxu0 %v883
        %1053 = vmatprep.subr.mxu0 %v890
        %1054 = vmatpush1.msra.mxu0 %v889
        %1055 = vmatprep.subr.mxu0 %v896
        %1056 = vmatpush1.msra.mxu0 %v895
        %1057 = vmatprep.subr.mxu0 %v902
        %1058 = vmatpush1.msra.mxu0 %v901
        %1059 = vmatprep.subr.mxu0 %v908
        %1060 = vmatpush1.msra.mxu0 %v907
        %1061 = vmatprep.subr.mxu0 %v914
        %1062 = vmatpush1.msra.mxu0 %v913
        %1063 = vmatprep.subr.mxu0 %v920
        %1064 = vmatpush1.msra.mxu0 %v919
        %1065 = vmatprep.subr.mxu0 %v926
        %1066 = vmatpush1.msra.mxu0 %v925
        %1067 = vmatprep.subr.mxu0 %v932
        %1068 = vmatpush1.msra.mxu0 %v931
        %1069 = vmatprep.subr.mxu0 %v938
        %1070 = vmatpush1.msra.mxu0 %v937
        %1071 = vmatprep.subr.mxu0 %v944
        %1072 = vmatpush1.msra.mxu0 %v943
        %1073 = vmatprep.subr.mxu0 %v950
        %1074 = vmatpush1.msra.mxu0 %v949
        %1075 = vmatprep.subr.mxu0 %v956
        %1076 = vmatpush1.msra.mxu0 %v955
        %1077 = vmatprep.subr.mxu0 %v962
        %1078 = vmatpush1.msra.mxu0 %v961
        %1079 = vmatprep.subr.mxu0 %v968
        %1080 = vmatpush1.msra.mxu0 %v967
        %1081 = vmatprep.subr.mxu0 %v974
        %1082 = vmatpush1.msra.mxu0 %v973
        %1083 = vmatprep.subr.mxu0 %v980
        %1084 = vmatpush1.msra.mxu0 %v979
        %1085 = vmatprep.subr.mxu0 %v986
        %1086 = vmatpush1.msra.mxu0 %v985
        %1087 = vmatprep.subr.mxu0 %v992
        %1088 = vmatpush1.msra.mxu0 %v991
        %1089 = vmatprep.mubr.f32.mxu0 %v1012
        %1090 = vmatmul.mubr.f32.gmra.mrb[0].mxu0 %v1011
        %v1091 = vpop.f32.mrb[0].mxu0
        %v1092 = vadd.f32 0.0, %v1091
        %v1093 = vpop.f32.mrb[0].mxu0
        %v1094 = vadd.f32 0.0, %v1093
        %1095 = vdwg.mxu0
        %1096 = vmatprep.subr.mxu0 %v808
        %1097 = vmatpush1.msra.mxu0 %v807
        %1098 = vmatprep.subr.mxu0 %v814
        %1099 = vmatpush1.msra.mxu0 %v813
        %1100 = vmatprep.subr.mxu0 %v820
        %1101 = vmatpush1.msra.mxu0 %v819
        %1102 = vmatprep.subr.mxu0 %v826
        %1103 = vmatpush1.msra.mxu0 %v825
        %1104 = vmatprep.subr.mxu0 %v832
        %1105 = vmatpush1.msra.mxu0 %v831
        %1106 = vmatprep.subr.mxu0 %v838
        %1107 = vmatpush1.msra.mxu0 %v837
        %1108 = vmatprep.subr.mxu0 %v844
        %1109 = vmatpush1.msra.mxu0 %v843
        %1110 = vmatprep.subr.mxu0 %v850
        %1111 = vmatpush1.msra.mxu0 %v849
        %1112 = vmatprep.subr.mxu0 %v856
        %1113 = vmatpush1.msra.mxu0 %v855
        %1114 = vmatprep.subr.mxu0 %v862
        %1115 = vmatpush1.msra.mxu0 %v861
        %1116 = vmatprep.subr.mxu0 %v868
        %1117 = vmatpush1.msra.mxu0 %v867
        %1118 = vmatprep.subr.mxu0 %v874
        %1119 = vmatpush1.msra.mxu0 %v873
        %1120 = vmatprep.subr.mxu0 %v880
        %1121 = vmatpush1.msra.mxu0 %v879
        %1122 = vmatprep.subr.mxu0 %v886
        %1123 = vmatpush1.msra.mxu0 %v885
        %1124 = vmatprep.subr.mxu0 %v892
        %1125 = vmatpush1.msra.mxu0 %v891
        %1126 = vmatprep.subr.mxu0 %v898
        %1127 = vmatpush1.msra.mxu0 %v897
        %1128 = vmatprep.subr.mxu0 %v904
        %1129 = vmatpush1.msra.mxu0 %v903
        %1130 = vmatprep.subr.mxu0 %v910
        %1131 = vmatpush1.msra.mxu0 %v909
        %1132 = vmatprep.subr.mxu0 %v916
        %1133 = vmatpush1.msra.mxu0 %v915
        %1134 = vmatprep.subr.mxu0 %v922
        %1135 = vmatpush1.msra.mxu0 %v921
        %1136 = vmatprep.subr.mxu0 %v928
        %1137 = vmatpush1.msra.mxu0 %v927
        %1138 = vmatprep.subr.mxu0 %v934
        %1139 = vmatpush1.msra.mxu0 %v933
        %1140 = vmatprep.subr.mxu0 %v940
        %1141 = vmatpush1.msra.mxu0 %v939
        %1142 = vmatprep.subr.mxu0 %v946
        %1143 = vmatpush1.msra.mxu0 %v945
        %1144 = vmatprep.subr.mxu0 %v952
        %1145 = vmatpush1.msra.mxu0 %v951
        %1146 = vmatprep.subr.mxu0 %v958
        %1147 = vmatpush1.msra.mxu0 %v957
        %1148 = vmatprep.subr.mxu0 %v964
        %1149 = vmatpush1.msra.mxu0 %v963
        %1150 = vmatprep.subr.mxu0 %v970
        %1151 = vmatpush1.msra.mxu0 %v969
        %1152 = vmatprep.subr.mxu0 %v976
        %1153 = vmatpush1.msra.mxu0 %v975
        %1154 = vmatprep.subr.mxu0 %v982
        %1155 = vmatpush1.msra.mxu0 %v981
        %1156 = vmatprep.subr.mxu0 %v988
        %1157 = vmatpush1.msra.mxu0 %v987
        %1158 = vmatprep.subr.mxu0 %v994
        %1159 = vmatpush1.msra.mxu0 %v993
        %1160 = vmatprep.mubr.f32.mxu0 %v1012
        %1161 = vmatmul.mubr.f32.gmra.mrb[0].mxu0 %v1011
        %v1162 = vpop.f32.mrb[0].mxu0
        %v1163 = vadd.f32 0.0, %v1162
        %v1164 = vpop.f32.mrb[0].mxu0
        %v1165 = vadd.f32 0.0, %v1164
        %1166 = vdwg.mxu0
        %1167 = vmatprep.subr.mxu0 %v810
        %1168 = vmatpush1.msra.mxu0 %v809
        %1169 = vmatprep.subr.mxu0 %v816
        %1170 = vmatpush1.msra.mxu0 %v815
        %1171 = vmatprep.subr.mxu0 %v822
        %1172 = vmatpush1.msra.mxu0 %v821
        %1173 = vmatprep.subr.mxu0 %v828
        %1174 = vmatpush1.msra.mxu0 %v827
        %1175 = vmatprep.subr.mxu0 %v834
        %1176 = vmatpush1.msra.mxu0 %v833
        %1177 = vmatprep.subr.mxu0 %v840
        %1178 = vmatpush1.msra.mxu0 %v839
        %1179 = vmatprep.subr.mxu0 %v846
        %1180 = vmatpush1.msra.mxu0 %v845
        %1181 = vmatprep.subr.mxu0 %v852
        %1182 = vmatpush1.msra.mxu0 %v851
        %1183 = vmatprep.subr.mxu0 %v858
        %1184 = vmatpush1.msra.mxu0 %v857
        %1185 = vmatprep.subr.mxu0 %v864
        %1186 = vmatpush1.msra.mxu0 %v863
        %1187 = vmatprep.subr.mxu0 %v870
        %1188 = vmatpush1.msra.mxu0 %v869
        %1189 = vmatprep.subr.mxu0 %v876
        %1190 = vmatpush1.msra.mxu0 %v875
        %1191 = vmatprep.subr.mxu0 %v882
        %1192 = vmatpush1.msra.mxu0 %v881
        %1193 = vmatprep.subr.mxu0 %v888
        %1194 = vmatpush1.msra.mxu0 %v887
        %1195 = vmatprep.subr.mxu0 %v894
        %1196 = vmatpush1.msra.mxu0 %v893
        %1197 = vmatprep.subr.mxu0 %v900
        %1198 = vmatpush1.msra.mxu0 %v899
        %1199 = vmatprep.subr.mxu0 %v906
        %1200 = vmatpush1.msra.mxu0 %v905
        %1201 = vmatprep.subr.mxu0 %v912
        %1202 = vmatpush1.msra.mxu0 %v911
        %1203 = vmatprep.subr.mxu0 %v918
        %1204 = vmatpush1.msra.mxu0 %v917
        %1205 = vmatprep.subr.mxu0 %v924
        %1206 = vmatpush1.msra.mxu0 %v923
        %1207 = vmatprep.subr.mxu0 %v930
        %1208 = vmatpush1.msra.mxu0 %v929
        %1209 = vmatprep.subr.mxu0 %v936
        %1210 = vmatpush1.msra.mxu0 %v935
        %1211 = vmatprep.subr.mxu0 %v942
        %1212 = vmatpush1.msra.mxu0 %v941
        %1213 = vmatprep.subr.mxu0 %v948
        %1214 = vmatpush1.msra.mxu0 %v947
        %1215 = vmatprep.subr.mxu0 %v954
        %1216 = vmatpush1.msra.mxu0 %v953
        %1217 = vmatprep.subr.mxu0 %v960
        %1218 = vmatpush1.msra.mxu0 %v959
        %1219 = vmatprep.subr.mxu0 %v966
        %1220 = vmatpush1.msra.mxu0 %v965
        %1221 = vmatprep.subr.mxu0 %v972
        %1222 = vmatpush1.msra.mxu0 %v971
        %1223 = vmatprep.subr.mxu0 %v978
        %1224 = vmatpush1.msra.mxu0 %v977
        %1225 = vmatprep.subr.mxu0 %v984
        %1226 = vmatpush1.msra.mxu0 %v983
        %1227 = vmatprep.subr.mxu0 %v990
        %1228 = vmatpush1.msra.mxu0 %v989
        %1229 = vmatprep.subr.mxu0 %v996
        %1230 = vmatpush1.msra.mxu0 %v995
        %1231 = vmatprep.mubr.f32.mxu0 %v1012
        %1232 = vmatmul.mubr.f32.gmra.mrb[0].mxu0 %v1011
        %v1233 = vpop.f32.mrb[0].mxu0
        %v1234 = vadd.f32 0.0, %v1233
        %v1235 = vpop.f32.mrb[0].mxu0
        %v1236 = vadd.f32 0.0, %v1235
        %1237 = vdwg.mxu0
        %v1238 = vadd.f32 %v1016, %v1092
        %v1239 = vadd.f32 %v1017, %v1094
        %v1240 = vmul.f32 %v1238, 0.5
        %v1241 = vmul.f32 %v1239, 0.5
        %v1242 = vtanh.pop %v1240
        %v1243 = vtanh.pop %v1241
        %v1244 = vadd.f32 %v1242, 1.0
        %v1245 = vadd.f32 %v1243, 1.0
        %v1246 = vmul.f32 %v1244, 0.5
        %v1247 = vmul.f32 %v1245, 0.5
        %v1248 = vadd.f32 %v1163, %v1002
        %v1249 = vmul.f32 %v1246, %v1248
        %v1250 = vadd.f32 %v1018, %v1249
        %v1251 = vtanh.pop %v1250
        %v1252 = vsub.f32 %v1011, %v1251
        %v1253 = vmul.f32 %v1247, %v1252
        %v1254 = vadd.f32 %v1251, %v1253
        %v1255 = vadd.f32 %v1022, %v1165
        %v1256 = vadd.f32 %v1023, %v1234
        %v1257 = vmul.f32 %v1255, 0.5
        %v1258 = vmul.f32 %v1256, 0.5
        %v1259 = vtanh.pop %v1257
        %v1260 = vtanh.pop %v1258
        %v1261 = vadd.f32 %v1259, 1.0
        %v1262 = vadd.f32 %v1260, 1.0
        %v1263 = vmul.f32 %v1261, 0.5
        %v1264 = vmul.f32 %v1262, 0.5
        %v1265 = vadd.f32 %v1236, %v1009
        %v1266 = vmul.f32 %v1263, %v1265
        %v1267 = vadd.f32 %v1024, %v1266
        %v1268 = vtanh.pop %v1267
        %v1269 = vsub.f32 %v1012, %v1268
        %v1270 = vmul.f32 %v1264, %v1269
        %v1271 = vadd.f32 %v1268, %v1270
        %1272 = vst [vmem:[%s395] sm:$0xff] %v1254
        %s1273 = scalar_lea.vmem %s402, 8 [#allocation9]
        %1274 = vst [vmem:[%s1273] sm:$0xff] %v1271
        %s1275 = smul.addr %s1019, 8
        %s1276 = scalar_lea.vmem [#allocation2], %s1275
        %v1277 = vld [vmem:[%s1276] sm:$0xff]
        %v1278 = vld [vmem:[%s1276 + $0x8] sm:$0xff]
        %v1279 = vld [vmem:[%s1276 + $0x10] sm:$0xff]
        %s1280 = smul.addr %s1013, 8
        %s1281 = scalar_lea.vmem [#allocation3], %s1280
        %v1282 = vld [vmem:[%s1281] sm:$0xff]
        %v1283 = vld [vmem:[%s1281 + $0x8] sm:$0xff]
        %v1284 = vld [vmem:[%s1281 + $0x10] sm:$0xff]
        %1285 = vmatprep.subr.mxu0 %v806
        %1286 = vmatpush1.msra.mxu0 %v805
        %1287 = vmatprep.subr.mxu0 %v812
        %1288 = vmatpush1.msra.mxu0 %v811
        %1289 = vmatprep.subr.mxu0 %v818
        %1290 = vmatpush1.msra.mxu0 %v817
        %1291 = vmatprep.subr.mxu0 %v824
        %1292 = vmatpush1.msra.mxu0 %v823
        %1293 = vmatprep.subr.mxu0 %v830
        %1294 = vmatpush1.msra.mxu0 %v829
        %1295 = vmatprep.subr.mxu0 %v836
        %1296 = vmatpush1.msra.mxu0 %v835
        %1297 = vmatprep.subr.mxu0 %v842
        %1298 = vmatpush1.msra.mxu0 %v841
        %1299 = vmatprep.subr.mxu0 %v848
        %1300 = vmatpush1.msra.mxu0 %v847
        %1301 = vmatprep.subr.mxu0 %v854
        %1302 = vmatpush1.msra.mxu0 %v853
        %1303 = vmatprep.subr.mxu0 %v860
        %1304 = vmatpush1.msra.mxu0 %v859
        %1305 = vmatprep.subr.mxu0 %v866
        %1306 = vmatpush1.msra.mxu0 %v865
        %1307 = vmatprep.subr.mxu0 %v872
        %1308 = vmatpush1.msra.mxu0 %v871
        %1309 = vmatprep.subr.mxu0 %v878
        %1310 = vmatpush1.msra.mxu0 %v877
        %1311 = vmatprep.subr.mxu0 %v884
        %1312 = vmatpush1.msra.mxu0 %v883
        %1313 = vmatprep.subr.mxu0 %v890
        %1314 = vmatpush1.msra.mxu0 %v889
        %1315 = vmatprep.subr.mxu0 %v896
        %1316 = vmatpush1.msra.mxu0 %v895
        %1317 = vmatprep.subr.mxu0 %v902
        %1318 = vmatpush1.msra.mxu0 %v901
        %1319 = vmatprep.subr.mxu0 %v908
        %1320 = vmatpush1.msra.mxu0 %v907
        %1321 = vmatprep.subr.mxu0 %v914
        %1322 = vmatpush1.msra.mxu0 %v913
        %1323 = vmatprep.subr.mxu0 %v920
        %1324 = vmatpush1.msra.mxu0 %v919
        %1325 = vmatprep.subr.mxu0 %v926
        %1326 = vmatpush1.msra.mxu0 %v925
        %1327 = vmatprep.subr.mxu0 %v932
        %1328 = vmatpush1.msra.mxu0 %v931
        %1329 = vmatprep.subr.mxu0 %v938
        %1330 = vmatpush1.msra.mxu0 %v937
        %1331 = vmatprep.subr.mxu0 %v944
        %1332 = vmatpush1.msra.mxu0 %v943
        %1333 = vmatprep.subr.mxu0 %v950
        %1334 = vmatpush1.msra.mxu0 %v949
        %1335 = vmatprep.subr.mxu0 %v956
        %1336 = vmatpush1.msra.mxu0 %v955
        %1337 = vmatprep.subr.mxu0 %v962
        %1338 = vmatpush1.msra.mxu0 %v961
        %1339 = vmatprep.subr.mxu0 %v968
        %1340 = vmatpush1.msra.mxu0 %v967
        %1341 = vmatprep.subr.mxu0 %v974
        %1342 = vmatpush1.msra.mxu0 %v973
        %1343 = vmatprep.subr.mxu0 %v980
        %1344 = vmatpush1.msra.mxu0 %v979
        %1345 = vmatprep.subr.mxu0 %v986
        %1346 = vmatpush1.msra.mxu0 %v985
        %1347 = vmatprep.subr.mxu0 %v992
        %1348 = vmatpush1.msra.mxu0 %v991
        %1349 = vmatprep.mubr.f32.mxu0 %v1271
        %1350 = vmatmul.mubr.f32.gmra.mrb[0].mxu0 %v1254
        %v1351 = vpop.f32.mrb[0].mxu0
        %v1352 = vadd.f32 0.0, %v1351
        %v1353 = vpop.f32.mrb[0].mxu0
        %v1354 = vadd.f32 0.0, %v1353
        %1355 = vdwg.mxu0
        %1356 = vmatprep.subr.mxu0 %v808
        %1357 = vmatpush1.msra.mxu0 %v807
        %1358 = vmatprep.subr.mxu0 %v814
        %1359 = vmatpush1.msra.mxu0 %v813
        %1360 = vmatprep.subr.mxu0 %v820
        %1361 = vmatpush1.msra.mxu0 %v819
        %1362 = vmatprep.subr.mxu0 %v826
        %1363 = vmatpush1.msra.mxu0 %v825
        %1364 = vmatprep.subr.mxu0 %v832
        %1365 = vmatpush1.msra.mxu0 %v831
        %1366 = vmatprep.subr.mxu0 %v838
        %1367 = vmatpush1.msra.mxu0 %v837
        %1368 = vmatprep.subr.mxu0 %v844
        %1369 = vmatpush1.msra.mxu0 %v843
        %1370 = vmatprep.subr.mxu0 %v850
        %1371 = vmatpush1.msra.mxu0 %v849
        %1372 = vmatprep.subr.mxu0 %v856
        %1373 = vmatpush1.msra.mxu0 %v855
        %1374 = vmatprep.subr.mxu0 %v862
        %1375 = vmatpush1.msra.mxu0 %v861
        %1376 = vmatprep.subr.mxu0 %v868
        %1377 = vmatpush1.msra.mxu0 %v867
        %1378 = vmatprep.subr.mxu0 %v874
        %1379 = vmatpush1.msra.mxu0 %v873
        %1380 = vmatprep.subr.mxu0 %v880
        %1381 = vmatpush1.msra.mxu0 %v879
        %1382 = vmatprep.subr.mxu0 %v886
        %1383 = vmatpush1.msra.mxu0 %v885
        %1384 = vmatprep.subr.mxu0 %v892
        %1385 = vmatpush1.msra.mxu0 %v891
        %1386 = vmatprep.subr.mxu0 %v898
        %1387 = vmatpush1.msra.mxu0 %v897
        %1388 = vmatprep.subr.mxu0 %v904
        %1389 = vmatpush1.msra.mxu0 %v903
        %1390 = vmatprep.subr.mxu0 %v910
        %1391 = vmatpush1.msra.mxu0 %v909
        %1392 = vmatprep.subr.mxu0 %v916
        %1393 = vmatpush1.msra.mxu0 %v915
        %1394 = vmatprep.subr.mxu0 %v922
        %1395 = vmatpush1.msra.mxu0 %v921
        %1396 = vmatprep.subr.mxu0 %v928
        %1397 = vmatpush1.msra.mxu0 %v927
        %1398 = vmatprep.subr.mxu0 %v934
        %1399 = vmatpush1.msra.mxu0 %v933
        %1400 = vmatprep.subr.mxu0 %v940
        %1401 = vmatpush1.msra.mxu0 %v939
        %1402 = vmatprep.subr.mxu0 %v946
        %1403 = vmatpush1.msra.mxu0 %v945
        %1404 = vmatprep.subr.mxu0 %v952
        %1405 = vmatpush1.msra.mxu0 %v951
        %1406 = vmatprep.subr.mxu0 %v958
        %1407 = vmatpush1.msra.mxu0 %v957
        %1408 = vmatprep.subr.mxu0 %v964
        %1409 = vmatpush1.msra.mxu0 %v963
        %1410 = vmatprep.subr.mxu0 %v970
        %1411 = vmatpush1.msra.mxu0 %v969
        %1412 = vmatprep.subr.mxu0 %v976
        %1413 = vmatpush1.msra.mxu0 %v975
        %1414 = vmatprep.subr.mxu0 %v982
        %1415 = vmatpush1.msra.mxu0 %v981
        %1416 = vmatprep.subr.mxu0 %v988
        %1417 = vmatpush1.msra.mxu0 %v987
        %1418 = vmatprep.subr.mxu0 %v994
        %1419 = vmatpush1.msra.mxu0 %v993
        %1420 = vmatprep.mubr.f32.mxu0 %v1271
        %1421 = vmatmul.mubr.f32.gmra.mrb[0].mxu0 %v1254
        %v1422 = vpop.f32.mrb[0].mxu0
        %v1423 = vadd.f32 0.0, %v1422
        %v1424 = vpop.f32.mrb[0].mxu0
        %v1425 = vadd.f32 0.0, %v1424
        %1426 = vdwg.mxu0
        %1427 = vmatprep.subr.mxu0 %v810
        %1428 = vmatpush1.msra.mxu0 %v809
        %1429 = vmatprep.subr.mxu0 %v816
        %1430 = vmatpush1.msra.mxu0 %v815
        %1431 = vmatprep.subr.mxu0 %v822
        %1432 = vmatpush1.msra.mxu0 %v821
        %1433 = vmatprep.subr.mxu0 %v828
        %1434 = vmatpush1.msra.mxu0 %v827
        %1435 = vmatprep.subr.mxu0 %v834
        %1436 = vmatpush1.msra.mxu0 %v833
        %1437 = vmatprep.subr.mxu0 %v840
        %1438 = vmatpush1.msra.mxu0 %v839
        %1439 = vmatprep.subr.mxu0 %v846
        %1440 = vmatpush1.msra.mxu0 %v845
        %1441 = vmatprep.subr.mxu0 %v852
        %1442 = vmatpush1.msra.mxu0 %v851
        %1443 = vmatprep.subr.mxu0 %v858
        %1444 = vmatpush1.msra.mxu0 %v857
        %1445 = vmatprep.subr.mxu0 %v864
        %1446 = vmatpush1.msra.mxu0 %v863
        %1447 = vmatprep.subr.mxu0 %v870
        %1448 = vmatpush1.msra.mxu0 %v869
        %1449 = vmatprep.subr.mxu0 %v876
        %1450 = vmatpush1.msra.mxu0 %v875
        %1451 = vmatprep.subr.mxu0 %v882
        %1452 = vmatpush1.msra.mxu0 %v881
        %1453 = vmatprep.subr.mxu0 %v888
        %1454 = vmatpush1.msra.mxu0 %v887
        %1455 = vmatprep.subr.mxu0 %v894
        %1456 = vmatpush1.msra.mxu0 %v893
        %1457 = vmatprep.subr.mxu0 %v900
        %1458 = vmatpush1.msra.mxu0 %v899
        %1459 = vmatprep.subr.mxu0 %v906
        %1460 = vmatpush1.msra.mxu0 %v905
        %1461 = vmatprep.subr.mxu0 %v912
        %1462 = vmatpush1.msra.mxu0 %v911
        %1463 = vmatprep.subr.mxu0 %v918
        %1464 = vmatpush1.msra.mxu0 %v917
        %1465 = vmatprep.subr.mxu0 %v924
        %1466 = vmatpush1.msra.mxu0 %v923
        %1467 = vmatprep.subr.mxu0 %v930
        %1468 = vmatpush1.msra.mxu0 %v929
        %1469 = vmatprep.subr.mxu0 %v936
        %1470 = vmatpush1.msra.mxu0 %v935
        %1471 = vmatprep.subr.mxu0 %v942
        %1472 = vmatpush1.msra.mxu0 %v941
        %1473 = vmatprep.subr.mxu0 %v948
        %1474 = vmatpush1.msra.mxu0 %v947
        %1475 = vmatprep.subr.mxu0 %v954
        %1476 = vmatpush1.msra.mxu0 %v953
        %1477 = vmatprep.subr.mxu0 %v960
        %1478 = vmatpush1.msra.mxu0 %v959
        %1479 = vmatprep.subr.mxu0 %v966
        %1480 = vmatpush1.msra.mxu0 %v965
        %1481 = vmatprep.subr.mxu0 %v972
        %1482 = vmatpush1.msra.mxu0 %v971
        %1483 = vmatprep.subr.mxu0 %v978
        %1484 = vmatpush1.msra.mxu0 %v977
        %1485 = vmatprep.subr.mxu0 %v984
        %1486 = vmatpush1.msra.mxu0 %v983
        %1487 = vmatprep.subr.mxu0 %v990
        %1488 = vmatpush1.msra.mxu0 %v989
        %1489 = vmatprep.subr.mxu0 %v996
        %1490 = vmatpush1.msra.mxu0 %v995
        %1491 = vmatprep.mubr.f32.mxu0 %v1271
        %1492 = vmatmul.mubr.f32.gmra.mrb[0].mxu0 %v1254
        %v1493 = vpop.f32.mrb[0].mxu0
        %v1494 = vadd.f32 0.0, %v1493
        %v1495 = vpop.f32.mrb[0].mxu0
        %v1496 = vadd.f32 0.0, %v1495
        %1497 = vdwg.mxu0
        %v1498 = vadd.f32 %v1277, %v1352
        %v1499 = vadd.f32 %v1278, %v1354
        %v1500 = vmul.f32 %v1498, 0.5
        %v1501 = vmul.f32 %v1499, 0.5
        %v1502 = vtanh.pop %v1500
        %v1503 = vtanh.pop %v1501
        %v1504 = vadd.f32 %v1502, 1.0
        %v1505 = vadd.f32 %v1503, 1.0
        %v1506 = vmul.f32 %v1504, 0.5
        %v1507 = vmul.f32 %v1505, 0.5
        %v1508 = vadd.f32 %v1423, %v1002
        %v1509 = vmul.f32 %v1506, %v1508
        %v1510 = vadd.f32 %v1279, %v1509
        %v1511 = vtanh.pop %v1510
        %v1512 = vsub.f32 %v1254, %v1511
        %v1513 = vmul.f32 %v1507, %v1512
        %v1514 = vadd.f32 %v1511, %v1513
        %v1515 = vadd.f32 %v1282, %v1425
        %v1516 = vadd.f32 %v1283, %v1494
        %v1517 = vmul.f32 %v1515, 0.5
        %v1518 = vmul.f32 %v1516, 0.5
        %v1519 = vtanh.pop %v1517
        %v1520 = vtanh.pop %v1518
        %v1521 = vadd.f32 %v1519, 1.0
        %v1522 = vadd.f32 %v1520, 1.0
        %v1523 = vmul.f32 %v1521, 0.5
        %v1524 = vmul.f32 %v1522, 0.5
        %v1525 = vadd.f32 %v1496, %v1009
        %v1526 = vmul.f32 %v1523, %v1525
        %v1527 = vadd.f32 %v1284, %v1526
        %v1528 = vtanh.pop %v1527
        %v1529 = vsub.f32 %v1271, %v1528
        %v1530 = vmul.f32 %v1524, %v1529
        %v1531 = vadd.f32 %v1528, %v1530
        %s1532 = scalar_lea.vmem %s395, 8 [#allocation8]
        %1533 = vst [vmem:[%s1532] sm:$0xff] %v1514
        %1534 = vst [vmem:[%s402] sm:$0xff] %v1531
        %1535 = vst [vmem:[#allocation4] sm:$0xff] %v1514
        %1536 = vst [vmem:[#allocation4 + $0x8] sm:$0xff] %v1531
        %s1537 = sand.u32 %s238, 1
        %s1538 = scalar_lea.sflag [#allocation7], %s1537
        %s1539 = sand.u32 %s238, 1
        %s1540 = smul.addr %s1539, 16
        %s1541 = scalar_lea.vmem [#allocation8], %s1540
        %s1542 = sand.u32 %s266, 1
        %s1543 = scalar_lea.sflag [#allocation10], %s1542
        %s1544 = sand.u32 %s266, 1
        %s1545 = smul.addr %s1544, 16
        %s1546 = scalar_lea.vmem [#allocation9], %s1545
        // Predicated region
        $region65: #{tpu_custom_call.1} parent=55 // pred_check
          %p1547 = pneg %p248
        $region66: #{tpu_custom_call.1} parent=55 // pred_check_branch
          %1549 = sbr.rel (%p1547) target = $region68
        $region67: #{tpu_custom_call.1} parent=55 // pred_region
          %s1550 = smul.u32 2, %s29
          %s1552 = ssub.s32 256, 256
          %1553 = vsyncadd %s1538, %s1552
          %s1554 = smul.addr %s1550, 128
          %s1555 = scalar_lea.hbm %s9, %s1554
          %s1556 = sshll.u32 %s1541, 4
          %s1557 = int_to_ptr.vmem [resolvable:$true] %s1556
          %1562 = dma.vmem_to_hbm [thread:$0]  %s1557, 256, %s1555, %s1538, 128, 128, 8
        $region68: #{tpu_custom_call.1} parent=55 // pred_fallthru
          _
        // Predicated region
        $region69: #{tpu_custom_call.1} parent=55 // pred_check
          %p1563 = pneg %p276
        $region70: #{tpu_custom_call.1} parent=55 // pred_check_branch
          %1565 = sbr.rel (%p1563) target = $region72
        $region71: #{tpu_custom_call.1} parent=55 // pred_region
          %s1566 = ssub.s32 3, %s29
          %s1567 = smul.u32 2, %s1566
          %s1569 = ssub.s32 256, 256
          %1570 = vsyncadd %s1543, %s1569
          %s1571 = smul.addr %s1567, 128
          %s1572 = scalar_lea.hbm %s10, %s1571
          %s1573 = sshll.u32 %s1546, 4
          %s1574 = int_to_ptr.vmem [resolvable:$true] %s1573
          %1579 = dma.vmem_to_hbm [thread:$0]  %s1574, 256, %s1572, %s1543, 128, 128, 8
        $region72: #{tpu_custom_call.1} parent=55 // pred_fallthru
          _
      $region56: #{tpu_custom_call.1} parent=5 // pred_fallthru
        _
      %p1580 = scmp.le.s32.totalorder 2, %s24
      // Predicated region
      $region73: #{tpu_custom_call.1} parent=5 // pred_check
        %p1581 = pneg %p1580
      $region74: #{tpu_custom_call.1} parent=5 // pred_check_branch
        %1583 = sbr.rel (%p1581) target = $region76
      $region75: #{tpu_custom_call.1} parent=5 // pred_region
        %s1584 = ssub.s32 %s24, 2
        // Predicated region
        $region77: #{tpu_custom_call.1} parent=75 // pred_check
          %p1585 = pneg %p254
        $region78: #{tpu_custom_call.1} parent=75 // pred_check_branch
          %1587 = sbr.rel (%p1585) target = $region80
        $region79: #{tpu_custom_call.1} parent=75 // pred_region
          %s1588 = sand.u32 %s239, 1
          %s1589 = scalar_lea.sflag [#allocation7], %s1588
          %s1590 = sand.u32 %s239, 1
          %s1591 = smul.addr %s1590, 16
          %s1592 = scalar_lea.vmem [#allocation8], %s1591
          %1593 = dma.done %s1589, 256
        $region80: #{tpu_custom_call.1} parent=75 // pred_fallthru
          _
        // Predicated region
        $region81: #{tpu_custom_call.1} parent=75 // pred_check
          %p1594 = pneg %p282
        $region82: #{tpu_custom_call.1} parent=75 // pred_check_branch
          %1596 = sbr.rel (%p1594) target = $region84
        $region83: #{tpu_custom_call.1} parent=75 // pred_region
          %s1597 = sand.u32 %s267, 1
          %s1598 = scalar_lea.sflag [#allocation10], %s1597
          %s1599 = sand.u32 %s267, 1
          %s1600 = smul.addr %s1599, 16
          %s1601 = scalar_lea.vmem [#allocation9], %s1600
          %1602 = dma.done %s1598, 256
        $region84: #{tpu_custom_call.1} parent=75 // pred_fallthru
          _
      $region76: #{tpu_custom_call.1} parent=5 // pred_fallthru
        _
    $region6: #{tpu_custom_call.1} parent=1 // loop_footer
      %s28 = sadd.s32 1, %s24
    $region7: #{tpu_custom_call.1} parent=1 // loop_footer_branch
      %23 = sbr.rel target = $region3
    $region8: #{tpu_custom_call.1} parent=1 // loop_exit
      _
    %1603 = vsyncpa [#allocation6], 1
    %s1604 = scalar_lea.sflag [#allocation6], 1
    %1605 = vsyncpa %s1604, 1
    %1606 = vsyncpa [#allocation7], 1
    %s1607 = scalar_lea.sflag [#allocation7], 1
    %1608 = vsyncpa %s1607, 1
    %1609 = vsyncpa [#allocation10], 1
    %s1610 = scalar_lea.sflag [#allocation10], 1
    %1611 = vsyncpa %s1610, 1

// kernel: tpu_custom_call.1
$region0: #{tpu_custom_call.1}
  #allocation0 [shape = 'u32[]', space=smem, size = 0x4, offset = 0x4, fixed_abs, tag = 'smem constant byte address 0x4 - core index']
  #allocation1 [shape = 'u32[144,128]{1,0:T(1,128)}', space=vmem, size = 0x12000, scoped, tag = 'internal scratch']
  #allocation2 [shape = 'f32[16,384]{1,0:T(8,128)}', space=vmem, size = 0x6000, scoped, tag = 'scratch operand']
  #allocation3 [shape = 'f32[16,384]{1,0:T(8,128)}', space=vmem, size = 0x6000, scoped, tag = 'scratch operand']
  #allocation4 [shape = 'f32[8,256]{1,0:T(8,128)}', space=vmem, size = 0x2000, scoped, tag = 'scratch operand']
  %s0 = inlined_call_operand.vmem [shape: f32[64,16], index: 0, kind: input, shape index: {}]
  %s1 = inlined_call_operand.vmem [shape: f32[64,16], index: 1, kind: input, shape index: {}]
  %s2 = inlined_call_operand.vmem [shape: f32[16,384], index: 2, kind: input, shape index: {}]
  %s3 = inlined_call_operand.vmem [shape: f32[16,384], index: 3, kind: input, shape index: {}]
  %s4 = inlined_call_operand.hbm [shape: f32[256,768], index: 4, kind: input, shape index: {}]
  %s5 = inlined_call_operand.vmem [shape: f32[1,384], index: 5, kind: input, shape index: {}]
  %s6 = inlined_call_operand.vmem [shape: f32[1,384], index: 6, kind: input, shape index: {}]
  %s7 = inlined_call_operand.vmem [shape: f32[1,128], index: 7, kind: input, shape index: {}]
  %s8 = inlined_call_operand.vmem [shape: f32[1,128], index: 8, kind: input, shape index: {}]
  %s9 = inlined_call_operand.hbm [shape: f32[64,128], index: 9, kind: output, shape index: {0}]
  %s10 = inlined_call_operand.hbm [shape: f32[64,128], index: 10, kind: output, shape index: {1}]
  %11 = xla_tuple %s9, %s10
  %s12 = sld [smem:[#allocation0]]
  $region85: #{tpu_custom_call.1} parent=0
    _
  %s14 = ssub.s32 1, %s12
  %s15 = scalar_select 0, %s14, %s12
  $region1: #{tpu_custom_call.1} parent=0
    #allocation5 [shape = 'u8[786432]{0}', space=vmem, size = 0xc0000, scoped, tag = 'input window, operand 4, single buffered']
    #allocation6 [shape = 's32[2]{0}', space=sflag, size = 0x8, scoped, tag = 'scoped memory for tpu_custom_call.1']
    #allocation7 [shape = 's32[2]{0}', space=sflag, size = 0x8, scoped, tag = 'scoped memory for tpu_custom_call.1']
    #allocation8 [shape = 'u8[16384]{0}', space=vmem, size = 0x4000, scoped, tag = 'output window, operand 0']
    #allocation9 [shape = 'u8[16384]{0}', space=vmem, size = 0x4000, scoped, tag = 'output window, operand 1']
    #allocation10 [shape = 's32[2]{0}', space=sflag, size = 0x8, scoped, tag = 'scoped memory for tpu_custom_call.1']
    %16 = vsyncpa [#allocation6], 0
    %17 = vsyncpa [#allocation7], 0
    %s18 = scalar_lea.sflag [#allocation7], 1
    %19 = vsyncpa %s18, 0
    %20 = vsyncpa [#allocation10], 0
    %s21 = scalar_lea.sflag [#allocation10], 1
    %22 = vsyncpa %s21, 0
    loop: start=0, step=1, limit=6
    $region2: #{tpu_custom_call.1} parent=1 // loop_pre_header
      _
    $region3: #{tpu_custom_call.1} parent=1 // loop_header
      %s24 = sphi 0, %s28
      %p25 = scmp.ge.s32.totalorder %s24, 6
      %s34 = sphi 0, %s36
      %s37 = sphi 0, %s34
      %s38 = sphi 0, %s37
      %s54 = sphi 0, %s38
      %s62 = sphi 0, %s64
      %s65 = sphi 0, %s62
      %s66 = sphi 0, %s65
      %s82 = sphi 0, %s66
      %s86 = sphi 0, %s86
      %s88 = sphi 0, %s86
      %s89 = sphi 0, %s88
      %s103 = sphi 0, %s89
      %s107 = sphi 0, %s107
      %s109 = sphi 0, %s107
      %s110 = sphi 0, %s109
      %s124 = sphi 0, %s110
      %s128 = sphi 0, %s128
      %s130 = sphi 0, %s128
      %s131 = sphi 0, %s130
      %s145 = sphi 0, %s131
      %s149 = sphi 0, %s149
      %s151 = sphi 0, %s149
      %s152 = sphi 0, %s151
      %s166 = sphi 0, %s152
      %s170 = sphi 0, %s170
      %s172 = sphi 0, %s170
      %s173 = sphi 0, %s172
      %s187 = sphi 0, %s173
      %s191 = sphi 0, %s191
      %s193 = sphi 0, %s191
      %s194 = sphi 0, %s193
      %s208 = sphi 0, %s194
      %s212 = sphi 0, %s212
      %s214 = sphi 0, %s212
      %s215 = sphi 0, %s214
      %s229 = sphi 0, %s215
      %s235 = sphi 0, %s237
      %s238 = sphi 0, %s235
      %s239 = sphi 0, %s238
      %s255 = sphi 0, %s239
      %s263 = sphi 0, %s265
      %s266 = sphi 0, %s263
      %s267 = sphi 0, %s266
      %s283 = sphi 0, %s267
    $region4: #{tpu_custom_call.1} parent=1 // loop_header_branch
      %27 = sbr.rel (%p25) target = $region8
    $region5: #{tpu_custom_call.1} parent=1 // loop_body
      %s29 = ssub.s32 %s24, 1
      %s30 = ssub.s32 %s24, 2
      %s31 = sadd.s32 %s24, 1
      %s32 = ssub.s32 %s24, %s31
      %p33 = scmp.eq.s32.totalorder %s32, 0
      %s35 = sadd.s32 %s34, 1
      %s36 = scalar_select %p33, %s34, %s35
      %p39 = pneg %p33
      %p40 = scmp.eq.s32.totalorder %s24, 3
      %p41 = por %p39, %p40
      %p42 = scmp.ne.s32.totalorder %s34, %s37
      %p43 = scmp.eq.s32.totalorder %s24, 0
      %p44 = por %p42, %p43
      %p45 = scmp.ne.s32.totalorder %s34, %s37
      %p46 = scmp.eq.s32.totalorder %s29, 3
      %p47 = por %p45, %p46
      %p48 = scmp.ne.s32.totalorder %s37, %s38
      %p49 = scmp.eq.s32.totalorder %s29, 0
      %p50 = por %p48, %p49
      %p51 = scmp.ne.s32.totalorder %s37, %s38
      %p52 = scmp.eq.s32.totalorder %s30, 3
      %p53 = por %p51, %p52
      %p55 = scmp.ne.s32.totalorder %s38, %s54
      %p56 = scmp.eq.s32.totalorder %s30, 0
      %p57 = por %p55, %p56
      %s58 = ssub.s32 3, %s24
      %s59 = ssub.s32 3, %s31
      %s60 = ssub.s32 %s58, %s59
      %p61 = scmp.eq.s32.totalorder %s60, 0
      %s63 = sadd.s32 %s62, 1
      %s64 = scalar_select %p61, %s62, %s63
      %p67 = pneg %p61
      %p68 = scmp.eq.s32.totalorder %s24, 3
      %p69 = por %p67, %p68
      %p70 = scmp.ne.s32.totalorder %s62, %s65
      %p71 = scmp.eq.s32.totalorder %s24, 0
      %p72 = por %p70, %p71
      %p73 = scmp.ne.s32.totalorder %s62, %s65
      %p74 = scmp.eq.s32.totalorder %s29, 3
      %p75 = por %p73, %p74
      %p76 = scmp.ne.s32.totalorder %s65, %s66
      %p77 = scmp.eq.s32.totalorder %s29, 0
      %p78 = por %p76, %p77
      %p79 = scmp.ne.s32.totalorder %s65, %s66
      %p80 = scmp.eq.s32.totalorder %s30, 3
      %p81 = por %p79, %p80
      %p83 = scmp.ne.s32.totalorder %s66, %s82
      %p84 = scmp.eq.s32.totalorder %s30, 0
      %p85 = por %p83, %p84
      %s87 = sadd.s32 %s86, 1
      %p90 = scmp.eq.s32.totalorder %s24, 3
      %p91 = scmp.ne.s32.totalorder %s86, %s88
      %p92 = scmp.eq.s32.totalorder %s24, 0
      %p93 = por %p91, %p92
      %p94 = scmp.ne.s32.totalorder %s86, %s88
      %p95 = scmp.eq.s32.totalorder %s29, 3
      %p96 = por %p94, %p95
      %p97 = scmp.ne.s32.totalorder %s88, %s89
      %p98 = scmp.eq.s32.totalorder %s29, 0
      %p99 = por %p97, %p98
      %p100 = scmp.ne.s32.totalorder %s88, %s89
      %p101 = scmp.eq.s32.totalorder %s30, 3
      %p102 = por %p100, %p101
      %p104 = scmp.ne.s32.totalorder %s89, %s103
      %p105 = scmp.eq.s32.totalorder %s30, 0
      %p106 = por %p104, %p105
      %s108 = sadd.s32 %s107, 1
      %p111 = scmp.eq.s32.totalorder %s24, 3
      %p112 = scmp.ne.s32.totalorder %s107, %s109
      %p113 = scmp.eq.s32.totalorder %s24, 0
      %p114 = por %p112, %p113
      %p115 = scmp.ne.s32.totalorder %s107, %s109
      %p116 = scmp.eq.s32.totalorder %s29, 3
      %p117 = por %p115, %p116
      %p118 = scmp.ne.s32.totalorder %s109, %s110
      %p119 = scmp.eq.s32.totalorder %s29, 0
      %p120 = por %p118, %p119
      %p121 = scmp.ne.s32.totalorder %s109, %s110
      %p122 = scmp.eq.s32.totalorder %s30, 3
      %p123 = por %p121, %p122
      %p125 = scmp.ne.s32.totalorder %s110, %s124
      %p126 = scmp.eq.s32.totalorder %s30, 0
      %p127 = por %p125, %p126
      %s129 = sadd.s32 %s128, 1
      %p132 = scmp.eq.s32.totalorder %s24, 3
      %p133 = scmp.ne.s32.totalorder %s128, %s130
      %p134 = scmp.eq.s32.totalorder %s24, 0
      %p135 = por %p133, %p134
      %p136 = scmp.ne.s32.totalorder %s128, %s130
      %p137 = scmp.eq.s32.totalorder %s29, 3
      %p138 = por %p136, %p137
      %p139 = scmp.ne.s32.totalorder %s130, %s131
      %p140 = scmp.eq.s32.totalorder %s29, 0
      %p141 = por %p139, %p140
      %p142 = scmp.ne.s32.totalorder %s130, %s131
      %p143 = scmp.eq.s32.totalorder %s30, 3
      %p144 = por %p142, %p143
      %p146 = scmp.ne.s32.totalorder %s131, %s145
      %p147 = scmp.eq.s32.totalorder %s30, 0
      %p148 = por %p146, %p147
      %s150 = sadd.s32 %s149, 1
      %p153 = scmp.eq.s32.totalorder %s24, 3
      %p154 = scmp.ne.s32.totalorder %s149, %s151
      %p155 = scmp.eq.s32.totalorder %s24, 0
      %p156 = por %p154, %p155
      %p157 = scmp.ne.s32.totalorder %s149, %s151
      %p158 = scmp.eq.s32.totalorder %s29, 3
      %p159 = por %p157, %p158
      %p160 = scmp.ne.s32.totalorder %s151, %s152
      %p161 = scmp.eq.s32.totalorder %s29, 0
      %p162 = por %p160, %p161
      %p163 = scmp.ne.s32.totalorder %s151, %s152
      %p164 = scmp.eq.s32.totalorder %s30, 3
      %p165 = por %p163, %p164
      %p167 = scmp.ne.s32.totalorder %s152, %s166
      %p168 = scmp.eq.s32.totalorder %s30, 0
      %p169 = por %p167, %p168
      %s171 = sadd.s32 %s170, 1
      %p174 = scmp.eq.s32.totalorder %s24, 3
      %p175 = scmp.ne.s32.totalorder %s170, %s172
      %p176 = scmp.eq.s32.totalorder %s24, 0
      %p177 = por %p175, %p176
      %p178 = scmp.ne.s32.totalorder %s170, %s172
      %p179 = scmp.eq.s32.totalorder %s29, 3
      %p180 = por %p178, %p179
      %p181 = scmp.ne.s32.totalorder %s172, %s173
      %p182 = scmp.eq.s32.totalorder %s29, 0
      %p183 = por %p181, %p182
      %p184 = scmp.ne.s32.totalorder %s172, %s173
      %p185 = scmp.eq.s32.totalorder %s30, 3
      %p186 = por %p184, %p185
      %p188 = scmp.ne.s32.totalorder %s173, %s187
      %p189 = scmp.eq.s32.totalorder %s30, 0
      %p190 = por %p188, %p189
      %s192 = sadd.s32 %s191, 1
      %p195 = scmp.eq.s32.totalorder %s24, 3
      %p196 = scmp.ne.s32.totalorder %s191, %s193
      %p197 = scmp.eq.s32.totalorder %s24, 0
      %p198 = por %p196, %p197
      %p199 = scmp.ne.s32.totalorder %s191, %s193
      %p200 = scmp.eq.s32.totalorder %s29, 3
      %p201 = por %p199, %p200
      %p202 = scmp.ne.s32.totalorder %s193, %s194
      %p203 = scmp.eq.s32.totalorder %s29, 0
      %p204 = por %p202, %p203
      %p205 = scmp.ne.s32.totalorder %s193, %s194
      %p206 = scmp.eq.s32.totalorder %s30, 3
      %p207 = por %p205, %p206
      %p209 = scmp.ne.s32.totalorder %s194, %s208
      %p210 = scmp.eq.s32.totalorder %s30, 0
      %p211 = por %p209, %p210
      %s213 = sadd.s32 %s212, 1
      %p216 = scmp.eq.s32.totalorder %s24, 3
      %p217 = scmp.ne.s32.totalorder %s212, %s214
      %p218 = scmp.eq.s32.totalorder %s24, 0
      %p219 = por %p217, %p218
      %p220 = scmp.ne.s32.totalorder %s212, %s214
      %p221 = scmp.eq.s32.totalorder %s29, 3
      %p222 = por %p220, %p221
      %p223 = scmp.ne.s32.totalorder %s214, %s215
      %p224 = scmp.eq.s32.totalorder %s29, 0
      %p225 = por %p223, %p224
      %p226 = scmp.ne.s32.totalorder %s214, %s215
      %p227 = scmp.eq.s32.totalorder %s30, 3
      %p228 = por %p226, %p227
      %p230 = scmp.ne.s32.totalorder %s215, %s229
      %p231 = scmp.eq.s32.totalorder %s30, 0
      %p232 = por %p230, %p231
      %s233 = ssub.s32 %s24, %s31
      %p234 = scmp.eq.s32.totalorder %s233, 0
      %s236 = sadd.s32 %s235, 1
      %s237 = scalar_select %p234, %s235, %s236
      %p240 = pneg %p234
      %p241 = scmp.eq.s32.totalorder %s24, 3
      %p242 = por %p240, %p241
      %p243 = scmp.ne.s32.totalorder %s235, %s238
      %p244 = scmp.eq.s32.totalorder %s24, 0
      %p245 = por %p243, %p244
      %p246 = scmp.ne.s32.totalorder %s235, %s238
      %p247 = scmp.eq.s32.totalorder %s29, 3
      %p248 = por %p246, %p247
      %p249 = scmp.ne.s32.totalorder %s238, %s239
      %p250 = scmp.eq.s32.totalorder %s29, 0
      %p251 = por %p249, %p250
      %p252 = scmp.ne.s32.totalorder %s238, %s239
      %p253 = scmp.eq.s32.totalorder %s30, 3
      %p254 = por %p252, %p253
      %p256 = scmp.ne.s32.totalorder %s239, %s255
      %p257 = scmp.eq.s32.totalorder %s30, 0
      %p258 = por %p256, %p257
      %s259 = ssub.s32 3, %s24
      %s260 = ssub.s32 3, %s31
      %s261 = ssub.s32 %s259, %s260
      %p262 = scmp.eq.s32.totalorder %s261, 0
      %s264 = sadd.s32 %s263, 1
      %s265 = scalar_select %p262, %s263, %s264
      %p268 = pneg %p262
      %p269 = scmp.eq.s32.totalorder %s24, 3
      %p270 = por %p268, %p269
      %p271 = scmp.ne.s32.totalorder %s263, %s266
      %p272 = scmp.eq.s32.totalorder %s24, 0
      %p273 = por %p271, %p272
      %p274 = scmp.ne.s32.totalorder %s263, %s266
      %p275 = scmp.eq.s32.totalorder %s29, 3
      %p276 = por %p274, %p275
      %p277 = scmp.ne.s32.totalorder %s266, %s267
      %p278 = scmp.eq.s32.totalorder %s29, 0
      %p279 = por %p277, %p278
      %p280 = scmp.ne.s32.totalorder %s266, %s267
      %p281 = scmp.eq.s32.totalorder %s30, 3
      %p282 = por %p280, %p281
      %p284 = scmp.ne.s32.totalorder %s267, %s283
      %p285 = scmp.eq.s32.totalorder %s30, 0
      %p286 = por %p284, %p285
      %p287 = scmp.le.s32.totalorder 1, %s24
      %p288 = scmp.lt.s32.totalorder %s24, 5
      %p289 = pnand %p287, %p288
      %p290 = pneg %p289
      // Predicated region
      $region9: #{tpu_custom_call.1} parent=5 // pred_check
        _
      $region10: #{tpu_custom_call.1} parent=5 // pred_check_branch
        %292 = sbr.rel (%p289) target = $region12
      $region11: #{tpu_custom_call.1} parent=5 // pred_region
        %s293 = ssub.s32 %s24, 1
        // Predicated region
        $region13: #{tpu_custom_call.1} parent=11 // pred_check
          %p294 = pneg %p99
        $region14: #{tpu_custom_call.1} parent=11 // pred_check_branch
          %296 = sbr.rel (%p294) target = $region16
        $region15: #{tpu_custom_call.1} parent=11 // pred_region
          _
        $region16: #{tpu_custom_call.1} parent=11 // pred_fallthru
          _
        // Predicated region
        $region17: #{tpu_custom_call.1} parent=11 // pred_check
          %p297 = pneg %p120
        $region18: #{tpu_custom_call.1} parent=11 // pred_check_branch
          %299 = sbr.rel (%p297) target = $region20
        $region19: #{tpu_custom_call.1} parent=11 // pred_region
          _
        $region20: #{tpu_custom_call.1} parent=11 // pred_fallthru
          _
        // Predicated region
        $region21: #{tpu_custom_call.1} parent=11 // pred_check
          %p300 = pneg %p141
        $region22: #{tpu_custom_call.1} parent=11 // pred_check_branch
          %302 = sbr.rel (%p300) target = $region24
        $region23: #{tpu_custom_call.1} parent=11 // pred_region
          %s304 = ssub.s32 24576, 24576
          %305 = vsyncadd [#allocation6], %s304
          %s306 = sshll.u32 [#allocation5], 4
          %s307 = int_to_ptr.vmem [resolvable:$true] %s306
          %312 = dma.hbm_to_vmem [thread:$0]  %s4, 24576, %s307, [#allocation6], 768, 768, 48
        $region24: #{tpu_custom_call.1} parent=11 // pred_fallthru
          _
        // Predicated region
        $region25: #{tpu_custom_call.1} parent=11 // pred_check
          %p313 = pneg %p162
        $region26: #{tpu_custom_call.1} parent=11 // pred_check_branch
          %315 = sbr.rel (%p313) target = $region28
        $region27: #{tpu_custom_call.1} parent=11 // pred_region
          _
        $region28: #{tpu_custom_call.1} parent=11 // pred_fallthru
          _
        // Predicated region
        $region29: #{tpu_custom_call.1} parent=11 // pred_check
          %p316 = pneg %p183
        $region30: #{tpu_custom_call.1} parent=11 // pred_check_branch
          %318 = sbr.rel (%p316) target = $region32
        $region31: #{tpu_custom_call.1} parent=11 // pred_region
          _
        $region32: #{tpu_custom_call.1} parent=11 // pred_fallthru
          _
        // Predicated region
        $region33: #{tpu_custom_call.1} parent=11 // pred_check
          %p319 = pneg %p204
        $region34: #{tpu_custom_call.1} parent=11 // pred_check_branch
          %321 = sbr.rel (%p319) target = $region36
        $region35: #{tpu_custom_call.1} parent=11 // pred_region
          _
        $region36: #{tpu_custom_call.1} parent=11 // pred_fallthru
          _
        // Predicated region
        $region37: #{tpu_custom_call.1} parent=11 // pred_check
          %p322 = pneg %p225
        $region38: #{tpu_custom_call.1} parent=11 // pred_check_branch
          %324 = sbr.rel (%p322) target = $region40
        $region39: #{tpu_custom_call.1} parent=11 // pred_region
          _
        $region40: #{tpu_custom_call.1} parent=11 // pred_fallthru
          _
      $region12: #{tpu_custom_call.1} parent=5 // pred_fallthru
        _
      %p325 = scmp.lt.s32.totalorder %s24, 4
      // Predicated region
      $region41: #{tpu_custom_call.1} parent=5 // pred_check
        %p326 = pneg %p325
      $region42: #{tpu_custom_call.1} parent=5 // pred_check_branch
        %328 = sbr.rel (%p326) target = $region44
      $region43: #{tpu_custom_call.1} parent=5 // pred_region
        // Predicated region
        $region45: #{tpu_custom_call.1} parent=43 // pred_check
          %p329 = pneg %p44
        $region46: #{tpu_custom_call.1} parent=43 // pred_check_branch
          %331 = sbr.rel (%p329) target = $region48
        $region47: #{tpu_custom_call.1} parent=43 // pred_region
          %s332 = smul.u32 2, %s24
          %p333 = scmp.lt.s32.totalorder %s332, 7
          %s334 = scalar_select %p333, %s332, 7
          %s335 = smul.addr %s334, 8
          %s336 = scalar_lea.vmem %s0, %s335
          %s337 = smul.u32 2, %s24
        $region48: #{tpu_custom_call.1} parent=43 // pred_fallthru
          _
        // Predicated region
        $region49: #{tpu_custom_call.1} parent=43 // pred_check
          %p338 = pneg %p72
        $region50: #{tpu_custom_call.1} parent=43 // pred_check_branch
          %340 = sbr.rel (%p338) target = $region52
        $region51: #{tpu_custom_call.1} parent=43 // pred_region
          %s341 = ssub.s32 3, %s24
          %s342 = smul.u32 2, %s341
          %p343 = scmp.lt.s32.totalorder %s342, 7
          %s344 = scalar_select %p343, %s342, 7
          %s345 = smul.addr %s344, 8
          %s346 = scalar_lea.vmem %s1, %s345
          %s347 = ssub.s32 3, %s24
          %s348 = smul.u32 2, %s347
        $region52: #{tpu_custom_call.1} parent=43 // pred_fallthru
          _
      $region44: #{tpu_custom_call.1} parent=5 // pred_fallthru
        _
      %p349 = scmp.le.s32.totalorder 1, %s24
      %p350 = scmp.lt.s32.totalorder %s24, 5
      %p351 = pnand %p349, %p350
      %p352 = pneg %p351
      // Predicated region
      $region53: #{tpu_custom_call.1} parent=5 // pred_check
        _
      $region54: #{tpu_custom_call.1} parent=5 // pred_check_branch
        %354 = sbr.rel (%p351) target = $region56
      $region55: #{tpu_custom_call.1} parent=5 // pred_region
        %s355 = ssub.s32 %s24, 1
        // Predicated region
        $region57: #{tpu_custom_call.1} parent=55 // pred_check
          %p356 = pneg %p141
        $region58: #{tpu_custom_call.1} parent=55 // pred_check_branch
          %358 = sbr.rel (%p356) target = $region60
        $region59: #{tpu_custom_call.1} parent=55 // pred_region
          %359 = dma.done [#allocation6], 24576
        $region60: #{tpu_custom_call.1} parent=55 // pred_fallthru
          _
        %s360 = smul.u32 2, %s29
        %p361 = scmp.lt.s32.totalorder %s360, 7
        %s362 = scalar_select %p361, %s360, 7
        %s363 = smul.addr %s362, 8
        %s364 = scalar_lea.vmem %s0, %s363
        %p365 = pneg %p50
        %p366 = pneg %p47
        %s367 = ssub.s32 3, %s29
        %s368 = smul.u32 2, %s367
        %p369 = scmp.lt.s32.totalorder %s368, 7
        %s370 = scalar_select %p369, %s368, 7
        %s371 = smul.addr %s370, 8
        %s372 = scalar_lea.vmem %s1, %s371
        %p373 = pneg %p78
        %p374 = pneg %p75
        %p375 = pneg %p99
        %p376 = pneg %p96
        %p377 = pneg %p120
        %p378 = pneg %p117
        %p379 = pneg %p141
        %p380 = pneg %p138
        %p381 = pneg %p162
        %p382 = pneg %p159
        %p383 = pneg %p183
        %p384 = pneg %p180
        %p385 = pneg %p204
        %p386 = pneg %p201
        %p387 = pneg %p225
        %p388 = pneg %p222
        %p389 = pneg %p251
        %p390 = pneg %p248
        %s391 = sand.u32 %s238, 1
        %s392 = scalar_lea.sflag [#allocation7], %s391
        %s393 = sand.u32 %s238, 1
        %s394 = smul.addr %s393, 16
        %s395 = scalar_lea.vmem [#allocation8], %s394
        %p396 = pneg %p279
        %p397 = pneg %p276
        %s398 = sand.u32 %s266, 1
        %s399 = scalar_lea.sflag [#allocation10], %s398
        %s400 = sand.u32 %s266, 1
        %s401 = smul.addr %s400, 16
        %s402 = scalar_lea.vmem [#allocation9], %s401
        %s403 = smul.u32 2, %s29
        %p404 = scmp.lt.s32.totalorder %s403, 7
        %s405 = scalar_select %p404, %s403, 7
        %s406 = smul.addr %s405, 8
        %s407 = scalar_lea.vmem %s0, %s406
        %s408 = smul.u32 2, %s29
        %s409 = ssub.s32 3, %s29
        %s410 = smul.u32 2, %s409
        %p411 = scmp.lt.s32.totalorder %s410, 7
        %s412 = scalar_select %p411, %s410, 7
        %s413 = smul.addr %s412, 8
        %s414 = scalar_lea.vmem %s1, %s413
        %s415 = ssub.s32 3, %s29
        %s416 = smul.u32 2, %s415
        %s417 = smul.u32 2, %s29
        %s418 = ssub.s32 3, %s29
        %s419 = smul.u32 2, %s418
        %p420 = scmp.eq.s32.totalorder %s29, 0
        // Predicated region
        $region61: #{tpu_custom_call.1} parent=55 // pred_check
          %p421 = pneg %p420
        $region62: #{tpu_custom_call.1} parent=55 // pred_check_branch
          %423 = sbr.rel (%p421) target = $region64
        $region63: #{tpu_custom_call.1} parent=55 // pred_region
          %424 = vst [vmem:[#allocation4] sm:$0xff] 0.0
          %425 = vst [vmem:[#allocation4 + $0x8] sm:$0xff] 0.0
        $region64: #{tpu_custom_call.1} parent=55 // pred_fallthru
          _
        %v426 = vld [vmem:[%s407] sm:$0xff]
        %v427 = vld [vmem:[%s407 + $0x8] sm:$0xff]
        %v428 = vld [vmem:[%s2] sm:$0xff]
        %v429 = vld [vmem:[%s2 + $0x8] sm:$0xff]
        %v430 = vld [vmem:[%s2 + $0x10] sm:$0xff]
        %v431 = vld [vmem:[%s2 + $0x18] sm:$0xff]
        %v432 = vld [vmem:[%s2 + $0x20] sm:$0xff]
        %v433 = vld [vmem:[%s2 + $0x28] sm:$0xff]
        %v434 = vld [vmem:[%s414] sm:$0xff]
        %v435 = vld [vmem:[%s414 + $0x8] sm:$0xff]
        %v436 = vld [vmem:[%s3] sm:$0xff]
        %v437 = vld [vmem:[%s3 + $0x8] sm:$0xff]
        %v438 = vld [vmem:[%s3 + $0x10] sm:$0xff]
        %v439 = vld [vmem:[%s3 + $0x18] sm:$0xff]
        %v440 = vld [vmem:[%s3 + $0x20] sm:$0xff]
        %v441 = vld [vmem:[%s3 + $0x28] sm:$0xff]
        %v442 = vld [vmem:[%s5] sm:$0x7]
        %v444 = vlaneseq
        %v445 = vshrl.u32 %v444, 7
        %v446 = vsub.s32 0, %v445
        %v447 = vrot.slane %v442, %v446
        %v448 = vlaneseq
        %v449 = vshrl.u32 %v448, 7
        %v450 = vsub.s32 1, %v449
        %v451 = vrot.slane %v442, %v450
        %v452 = vlaneseq
        %v453 = vshrl.u32 %v452, 7
        %v454 = vsub.s32 2, %v453
        %v455 = vrot.slane %v442, %v454
        %vm459 = vcmask 130048
        %v461 = vsel %vm459, %v426, 0
        %v464 = vsel %vm459, %v427, 0
        %466 = vmatprep.subr.mxu0 %v429
        %467 = vmatpush1.msra.mxu0 %v428
        %468 = vmatprep.subr.mxu0 %v432
        %469 = vmatpush1.msra.mxu0 %v431
        %470 = vmatprep.subr.mxu0 0.0
        %471 = vmatpush1.msra.mxu0 0.0
        %472 = vmatprep.subr.mxu0 0.0
        %473 = vmatpush1.msra.mxu0 0.0
        %474 = vmatprep.subr.mxu0 0.0
        %475 = vmatpush1.msra.mxu0 0.0
        %476 = vmatprep.subr.mxu0 0.0
        %477 = vmatpush1.msra.mxu0 0.0
        %478 = vmatprep.subr.mxu0 0.0
        %479 = vmatpush1.msra.mxu0 0.0
        %480 = vmatprep.subr.mxu0 0.0
        %481 = vmatpush1.msra.mxu0 0.0
        %482 = vmatprep.subr.mxu0 0.0
        %483 = vmatpush1.msra.mxu0 0.0
        %484 = vmatprep.subr.mxu0 0.0
        %485 = vmatpush1.msra.mxu0 0.0
        %486 = vmatprep.subr.mxu0 0.0
        %487 = vmatpush1.msra.mxu0 0.0
        %488 = vmatprep.subr.mxu0 0.0
        %489 = vmatpush1.msra.mxu0 0.0
        %490 = vmatprep.subr.mxu0 0.0
        %491 = vmatpush1.msra.mxu0 0.0
        %492 = vmatprep.subr.mxu0 0.0
        %493 = vmatpush1.msra.mxu0 0.0
        %494 = vmatprep.subr.mxu0 0.0
        %495 = vmatpush1.msra.mxu0 0.0
        %496 = vmatprep.subr.mxu0 0.0
        %497 = vmatpush1.msra.mxu0 0.0
        %498 = vmatprep.subr.mxu0 0.0
        %499 = vmatpush1.msra.mxu0 0.0
        %500 = vmatprep.subr.mxu0 0.0
        %501 = vmatpush1.msra.mxu0 0.0
        %502 = vmatprep.subr.mxu0 0.0
        %503 = vmatpush1.msra.mxu0 0.0
        %504 = vmatprep.subr.mxu0 0.0
        %505 = vmatpush1.msra.mxu0 0.0
        %506 = vmatprep.subr.mxu0 0.0
        %507 = vmatpush1.msra.mxu0 0.0
        %508 = vmatprep.subr.mxu0 0.0
        %509 = vmatpush1.msra.mxu0 0.0
        %510 = vmatprep.subr.mxu0 0.0
        %511 = vmatpush1.msra.mxu0 0.0
        %512 = vmatprep.subr.mxu0 0.0
        %513 = vmatpush1.msra.mxu0 0.0
        %514 = vmatprep.subr.mxu0 0.0
        %515 = vmatpush1.msra.mxu0 0.0
        %516 = vmatprep.subr.mxu0 0.0
        %517 = vmatpush1.msra.mxu0 0.0
        %518 = vmatprep.subr.mxu0 0.0
        %519 = vmatpush1.msra.mxu0 0.0
        %520 = vmatprep.subr.mxu0 0.0
        %521 = vmatpush1.msra.mxu0 0.0
        %522 = vmatprep.subr.mxu0 0.0
        %523 = vmatpush1.msra.mxu0 0.0
        %524 = vmatprep.subr.mxu0 0.0
        %525 = vmatpush1.msra.mxu0 0.0
        %526 = vmatprep.subr.mxu0 0.0
        %527 = vmatpush1.msra.mxu0 0.0
        %528 = vmatprep.subr.mxu0 0.0
        %529 = vmatpush1.msra.mxu0 0.0
        %530 = vmatprep.mubr.f32.mxu0 0.0
        %531 = vmatmul.mubr.f32.gmra.mrb[0].mxu0 %v461
        %v532 = vpop.f32.mrb[0].mxu0
        %v533 = vadd.f32 %v447, %v532
        %v534 = vpop.f32.mrb[0].mxu0
        %v535 = vadd.f32 %v451, %v534
        %536 = vmatprep.mubr.f32.mxu0 0.0
        %537 = vmatmul.mubr.f32.gmra.mrb[0].mxu0 %v464
        %v538 = vpop.f32.mrb[0].mxu0
        %v539 = vadd.f32 %v447, %v538
        %v540 = vpop.f32.mrb[0].mxu0
        %v541 = vadd.f32 %v451, %v540
        %542 = vdwg.mxu0
        %543 = vmatprep.subr.mxu0 0.0
        %544 = vmatpush1.msra.mxu0 %v430
        %545 = vmatprep.subr.mxu0 0.0
        %546 = vmatpush1.msra.mxu0 %v433
        %547 = vmatprep.subr.mxu0 0.0
        %548 = vmatpush1.msra.mxu0 0.0
        %549 = vmatprep.subr.mxu0 0.0
        %550 = vmatpush1.msra.mxu0 0.0
        %551 = vmatprep.subr.mxu0 0.0
        %552 = vmatpush1.msra.mxu0 0.0
        %553 = vmatprep.subr.mxu0 0.0
        %554 = vmatpush1.msra.mxu0 0.0
        %555 = vmatprep.subr.mxu0 0.0
        %556 = vmatpush1.msra.mxu0 0.0
        %557 = vmatprep.subr.mxu0 0.0
        %558 = vmatpush1.msra.mxu0 0.0
        %559 = vmatprep.subr.mxu0 0.0
        %560 = vmatpush1.msra.mxu0 0.0
        %561 = vmatprep.subr.mxu0 0.0
        %562 = vmatpush1.msra.mxu0 0.0
        %563 = vmatprep.subr.mxu0 0.0
        %564 = vmatpush1.msra.mxu0 0.0
        %565 = vmatprep.subr.mxu0 0.0
        %566 = vmatpush1.msra.mxu0 0.0
        %567 = vmatprep.subr.mxu0 0.0
        %568 = vmatpush1.msra.mxu0 0.0
        %569 = vmatprep.subr.mxu0 0.0
        %570 = vmatpush1.msra.mxu0 0.0
        %571 = vmatprep.subr.mxu0 0.0
        %572 = vmatpush1.msra.mxu0 0.0
        %573 = vmatprep.subr.mxu0 0.0
        %574 = vmatpush1.msra.mxu0 0.0
        %575 = vmatprep.subr.mxu0 0.0
        %576 = vmatpush1.msra.mxu0 0.0
        %577 = vmatprep.subr.mxu0 0.0
        %578 = vmatpush1.msra.mxu0 0.0
        %579 = vmatprep.subr.mxu0 0.0
        %580 = vmatpush1.msra.mxu0 0.0
        %581 = vmatprep.subr.mxu0 0.0
        %582 = vmatpush1.msra.mxu0 0.0
        %583 = vmatprep.subr.mxu0 0.0
        %584 = vmatpush1.msra.mxu0 0.0
        %585 = vmatprep.subr.mxu0 0.0
        %586 = vmatpush1.msra.mxu0 0.0
        %587 = vmatprep.subr.mxu0 0.0
        %588 = vmatpush1.msra.mxu0 0.0
        %589 = vmatprep.subr.mxu0 0.0
        %590 = vmatpush1.msra.mxu0 0.0
        %591 = vmatprep.subr.mxu0 0.0
        %592 = vmatpush1.msra.mxu0 0.0
        %593 = vmatprep.subr.mxu0 0.0
        %594 = vmatpush1.msra.mxu0 0.0
        %595 = vmatprep.subr.mxu0 0.0
        %596 = vmatpush1.msra.mxu0 0.0
        %597 = vmatprep.subr.mxu0 0.0
        %598 = vmatpush1.msra.mxu0 0.0
        %599 = vmatprep.subr.mxu0 0.0
        %600 = vmatpush1.msra.mxu0 0.0
        %601 = vmatprep.subr.mxu0 0.0
        %602 = vmatpush1.msra.mxu0 0.0
        %603 = vmatprep.subr.mxu0 0.0
        %604 = vmatpush1.msra.mxu0 0.0
        %605 = vmatprep.subr.mxu0 0.0
        %606 = vmatpush1.msra.mxu0 0.0
        %607 = vmatprep.mubr.f32.mxu0 0.0
        %608 = vmatmul.mubr.f32.gmra.mrb[0].mxu0 %v461
        %v609 = vpop.f32.mrb[0].mxu0
        %v610 = vadd.f32 %v455, %v609
        %v611 = vpop.f32.mrb[0].mxu0
        %612 = vmatprep.mubr.f32.mxu0 0.0
        %613 = vmatmul.mubr.f32.gmra.mrb[0].mxu0 %v464
        %v614 = vpop.f32.mrb[0].mxu0
        %v615 = vadd.f32 %v455, %v614
        %v616 = vpop.f32.mrb[0].mxu0
        %617 = vdwg.mxu0
        %618 = vst [vmem:[#allocation2] sm:$0xff] %v533
        %619 = vst [vmem:[#allocation2 + $0x8] sm:$0xff] %v535
        %620 = vst [vmem:[#allocation2 + $0x10] sm:$0xff] %v610
        %621 = vst [vmem:[#allocation2 + $0x18] sm:$0xff] %v539
        %622 = vst [vmem:[#allocation2 + $0x20] sm:$0xff] %v541
        %623 = vst [vmem:[#allocation2 + $0x28] sm:$0xff] %v615
        %v624 = vld [vmem:[%s6] sm:$0x7]
        %v626 = vlaneseq
        %v627 = vshrl.u32 %v626, 7
        %v628 = vsub.s32 0, %v627
        %v629 = vrot.slane %v624, %v628
        %v630 = vlaneseq
        %v631 = vshrl.u32 %v630, 7
        %v632 = vsub.s32 1, %v631
        %v633 = vrot.slane %v624, %v632
        %v634 = vlaneseq
        %v635 = vshrl.u32 %v634, 7
        %v636 = vsub.s32 2, %v635
        %v637 = vrot.slane %v624, %v636
        %v642 = vsel %vm459, %v434, 0
        %v645 = vsel %vm459, %v435, 0
        %647 = vmatprep.subr.mxu0 %v437
        %648 = vmatpush1.msra.mxu0 %v436
        %649 = vmatprep.subr.mxu0 %v440
        %650 = vmatpush1.msra.mxu0 %v439
        %651 = vmatprep.subr.mxu0 0.0
        %652 = vmatpush1.msra.mxu0 0.0
        %653 = vmatprep.subr.mxu0 0.0
        %654 = vmatpush1.msra.mxu0 0.0
        %655 = vmatprep.subr.mxu0 0.0
        %656 = vmatpush1.msra.mxu0 0.0
        %657 = vmatprep.subr.mxu0 0.0
        %658 = vmatpush1.msra.mxu0 0.0
        %659 = vmatprep.subr.mxu0 0.0
        %660 = vmatpush1.msra.mxu0 0.0
        %661 = vmatprep.subr.mxu0 0.0
        %662 = vmatpush1.msra.mxu0 0.0
        %663 = vmatprep.subr.mxu0 0.0
        %664 = vmatpush1.msra.mxu0 0.0
        %665 = vmatprep.subr.mxu0 0.0
        %666 = vmatpush1.msra.mxu0 0.0
        %667 = vmatprep.subr.mxu0 0.0
        %668 = vmatpush1.msra.mxu0 0.0
        %669 = vmatprep.subr.mxu0 0.0
        %670 = vmatpush1.msra.mxu0 0.0
        %671 = vmatprep.subr.mxu0 0.0
        %672 = vmatpush1.msra.mxu0 0.0
        %673 = vmatprep.subr.mxu0 0.0
        %674 = vmatpush1.msra.mxu0 0.0
        %675 = vmatprep.subr.mxu0 0.0
        %676 = vmatpush1.msra.mxu0 0.0
        %677 = vmatprep.subr.mxu0 0.0
        %678 = vmatpush1.msra.mxu0 0.0
        %679 = vmatprep.subr.mxu0 0.0
        %680 = vmatpush1.msra.mxu0 0.0
        %681 = vmatprep.subr.mxu0 0.0
        %682 = vmatpush1.msra.mxu0 0.0
        %683 = vmatprep.subr.mxu0 0.0
        %684 = vmatpush1.msra.mxu0 0.0
        %685 = vmatprep.subr.mxu0 0.0
        %686 = vmatpush1.msra.mxu0 0.0
        %687 = vmatprep.subr.mxu0 0.0
        %688 = vmatpush1.msra.mxu0 0.0
        %689 = vmatprep.subr.mxu0 0.0
        %690 = vmatpush1.msra.mxu0 0.0
        %691 = vmatprep.subr.mxu0 0.0
        %692 = vmatpush1.msra.mxu0 0.0
        %693 = vmatprep.subr.mxu0 0.0
        %694 = vmatpush1.msra.mxu0 0.0
        %695 = vmatprep.subr.mxu0 0.0
        %696 = vmatpush1.msra.mxu0 0.0
        %697 = vmatprep.subr.mxu0 0.0
        %698 = vmatpush1.msra.mxu0 0.0
        %699 = vmatprep.subr.mxu0 0.0
        %700 = vmatpush1.msra.mxu0 0.0
        %701 = vmatprep.subr.mxu0 0.0
        %702 = vmatpush1.msra.mxu0 0.0
        %703 = vmatprep.subr.mxu0 0.0
        %704 = vmatpush1.msra.mxu0 0.0
        %705 = vmatprep.subr.mxu0 0.0
        %706 = vmatpush1.msra.mxu0 0.0
        %707 = vmatprep.subr.mxu0 0.0
        %708 = vmatpush1.msra.mxu0 0.0
        %709 = vmatprep.subr.mxu0 0.0
        %710 = vmatpush1.msra.mxu0 0.0
        %711 = vmatprep.mubr.f32.mxu0 0.0
        %712 = vmatmul.mubr.f32.gmra.mrb[0].mxu0 %v642
        %v713 = vpop.f32.mrb[0].mxu0
        %v714 = vadd.f32 %v629, %v713
        %v715 = vpop.f32.mrb[0].mxu0
        %v716 = vadd.f32 %v633, %v715
        %717 = vmatprep.mubr.f32.mxu0 0.0
        %718 = vmatmul.mubr.f32.gmra.mrb[0].mxu0 %v645
        %v719 = vpop.f32.mrb[0].mxu0
        %v720 = vadd.f32 %v629, %v719
        %v721 = vpop.f32.mrb[0].mxu0
        %v722 = vadd.f32 %v633, %v721
        %723 = vdwg.mxu0
        %724 = vmatprep.subr.mxu0 0.0
        %725 = vmatpush1.msra.mxu0 %v438
        %726 = vmatprep.subr.mxu0 0.0
        %727 = vmatpush1.msra.mxu0 %v441
        %728 = vmatprep.subr.mxu0 0.0
        %729 = vmatpush1.msra.mxu0 0.0
        %730 = vmatprep.subr.mxu0 0.0
        %731 = vmatpush1.msra.mxu0 0.0
        %732 = vmatprep.subr.mxu0 0.0
        %733 = vmatpush1.msra.mxu0 0.0
        %734 = vmatprep.subr.mxu0 0.0
        %735 = vmatpush1.msra.mxu0 0.0
        %736 = vmatprep.subr.mxu0 0.0
        %737 = vmatpush1.msra.mxu0 0.0
        %738 = vmatprep.subr.mxu0 0.0
        %739 = vmatpush1.msra.mxu0 0.0
        %740 = vmatprep.subr.mxu0 0.0
        %741 = vmatpush1.msra.mxu0 0.0
        %742 = vmatprep.subr.mxu0 0.0
        %743 = vmatpush1.msra.mxu0 0.0
        %744 = vmatprep.subr.mxu0 0.0
        %745 = vmatpush1.msra.mxu0 0.0
        %746 = vmatprep.subr.mxu0 0.0
        %747 = vmatpush1.msra.mxu0 0.0
        %748 = vmatprep.subr.mxu0 0.0
        %749 = vmatpush1.msra.mxu0 0.0
        %750 = vmatprep.subr.mxu0 0.0
        %751 = vmatpush1.msra.mxu0 0.0
        %752 = vmatprep.subr.mxu0 0.0
        %753 = vmatpush1.msra.mxu0 0.0
        %754 = vmatprep.subr.mxu0 0.0
        %755 = vmatpush1.msra.mxu0 0.0
        %756 = vmatprep.subr.mxu0 0.0
        %757 = vmatpush1.msra.mxu0 0.0
        %758 = vmatprep.subr.mxu0 0.0
        %759 = vmatpush1.msra.mxu0 0.0
        %760 = vmatprep.subr.mxu0 0.0
        %761 = vmatpush1.msra.mxu0 0.0
        %762 = vmatprep.subr.mxu0 0.0
        %763 = vmatpush1.msra.mxu0 0.0
        %764 = vmatprep.subr.mxu0 0.0
        %765 = vmatpush1.msra.mxu0 0.0
        %766 = vmatprep.subr.mxu0 0.0
        %767 = vmatpush1.msra.mxu0 0.0
        %768 = vmatprep.subr.mxu0 0.0
        %769 = vmatpush1.msra.mxu0 0.0
        %770 = vmatprep.subr.mxu0 0.0
        %771 = vmatpush1.msra.mxu0 0.0
        %772 = vmatprep.subr.mxu0 0.0
        %773 = vmatpush1.msra.mxu0 0.0
        %774 = vmatprep.subr.mxu0 0.0
        %775 = vmatpush1.msra.mxu0 0.0
        %776 = vmatprep.subr.mxu0 0.0
        %777 = vmatpush1.msra.mxu0 0.0
        %778 = vmatprep.subr.mxu0 0.0
        %779 = vmatpush1.msra.mxu0 0.0
        %780 = vmatprep.subr.mxu0 0.0
        %781 = vmatpush1.msra.mxu0 0.0
        %782 = vmatprep.subr.mxu0 0.0
        %783 = vmatpush1.msra.mxu0 0.0
        %784 = vmatprep.subr.mxu0 0.0
        %785 = vmatpush1.msra.mxu0 0.0
        %786 = vmatprep.subr.mxu0 0.0
        %787 = vmatpush1.msra.mxu0 0.0
        %788 = vmatprep.mubr.f32.mxu0 0.0
        %789 = vmatmul.mubr.f32.gmra.mrb[0].mxu0 %v642
        %v790 = vpop.f32.mrb[0].mxu0
        %v791 = vadd.f32 %v637, %v790
        %v792 = vpop.f32.mrb[0].mxu0
        %793 = vmatprep.mubr.f32.mxu0 0.0
        %794 = vmatmul.mubr.f32.gmra.mrb[0].mxu0 %v645
        %v795 = vpop.f32.mrb[0].mxu0
        %v796 = vadd.f32 %v637, %v795
        %v797 = vpop.f32.mrb[0].mxu0
        %798 = vdwg.mxu0
        %799 = vst [vmem:[#allocation3] sm:$0xff] %v714
        %800 = vst [vmem:[#allocation3 + $0x8] sm:$0xff] %v716
        %801 = vst [vmem:[#allocation3 + $0x10] sm:$0xff] %v791
        %802 = vst [vmem:[#allocation3 + $0x18] sm:$0xff] %v720
        %803 = vst [vmem:[#allocation3 + $0x20] sm:$0xff] %v722
        %804 = vst [vmem:[#allocation3 + $0x28] sm:$0xff] %v796
        %v805 = vld [vmem:[#allocation5] sm:$0xff]
        %v806 = vld [vmem:[#allocation5 + $0x8] sm:$0xff]
        %v807 = vld [vmem:[#allocation5 + $0x10] sm:$0xff]
        %v808 = vld [vmem:[#allocation5 + $0x18] sm:$0xff]
        %v809 = vld [vmem:[#allocation5 + $0x20] sm:$0xff]
        %v810 = vld [vmem:[#allocation5 + $0x28] sm:$0xff]
        %v811 = vld [vmem:[#allocation5 + $0x30] sm:$0xff]
        %v812 = vld [vmem:[#allocation5 + $0x38] sm:$0xff]
        %v813 = vld [vmem:[#allocation5 + $0x40] sm:$0xff]
        %v814 = vld [vmem:[#allocation5 + $0x48] sm:$0xff]
        %v815 = vld [vmem:[#allocation5 + $0x50] sm:$0xff]
        %v816 = vld [vmem:[#allocation5 + $0x58] sm:$0xff]
        %v817 = vld [vmem:[#allocation5 + $0x60] sm:$0xff]
        %v818 = vld [vmem:[#allocation5 + $0x68] sm:$0xff]
        %v819 = vld [vmem:[#allocation5 + $0x70] sm:$0xff]
        %v820 = vld [vmem:[#allocation5 + $0x78] sm:$0xff]
        %v821 = vld [vmem:[#allocation5 + $0x80] sm:$0xff]
        %v822 = vld [vmem:[#allocation5 + $0x88] sm:$0xff]
        %v823 = vld [vmem:[#allocation5 + $0x90] sm:$0xff]
        %v824 = vld [vmem:[#allocation5 + $0x98] sm:$0xff]
        %v825 = vld [vmem:[#allocation5 + $0xa0] sm:$0xff]
        %v826 = vld [vmem:[#allocation5 + $0xa8] sm:$0xff]
        %v827 = vld [vmem:[#allocation5 + $0xb0] sm:$0xff]
        %v828 = vld [vmem:[#allocation5 + $0xb8] sm:$0xff]
        %v829 = vld [vmem:[#allocation5 + $0xc0] sm:$0xff]
        %v830 = vld [vmem:[#allocation5 + $0xc8] sm:$0xff]
        %v831 = vld [vmem:[#allocation5 + $0xd0] sm:$0xff]
        %v832 = vld [vmem:[#allocation5 + $0xd8] sm:$0xff]
        %v833 = vld [vmem:[#allocation5 + $0xe0] sm:$0xff]
        %v834 = vld [vmem:[#allocation5 + $0xe8] sm:$0xff]
        %v835 = vld [vmem:[#allocation5 + $0xf0] sm:$0xff]
        %v836 = vld [vmem:[#allocation5 + $0xf8] sm:$0xff]
        %v837 = vld [vmem:[#allocation5 + $0x100] sm:$0xff]
        %v838 = vld [vmem:[#allocation5 + $0x108] sm:$0xff]
        %v839 = vld [vmem:[#allocation5 + $0x110] sm:$0xff]
        %v840 = vld [vmem:[#allocation5 + $0x118] sm:$0xff]
        %v841 = vld [vmem:[#allocation5 + $0x120] sm:$0xff]
        %v842 = vld [vmem:[#allocation5 + $0x128] sm:$0xff]
        %v843 = vld [vmem:[#allocation5 + $0x130] sm:$0xff]
        %v844 = vld [vmem:[#allocation5 + $0x138] sm:$0xff]
        %v845 = vld [vmem:[#allocation5 + $0x140] sm:$0xff]
        %v846 = vld [vmem:[#allocation5 + $0x148] sm:$0xff]
        %v847 = vld [vmem:[#allocation5 + $0x150] sm:$0xff]
        %v848 = vld [vmem:[#allocation5 + $0x158] sm:$0xff]
        %v849 = vld [vmem:[#allocation5 + $0x160] sm:$0xff]
        %v850 = vld [vmem:[#allocation5 + $0x168] sm:$0xff]
        %v851 = vld [vmem:[#allocation5 + $0x170] sm:$0xff]
        %v852 = vld [vmem:[#allocation5 + $0x178] sm:$0xff]
        %v853 = vld [vmem:[#allocation5 + $0x180] sm:$0xff]
        %v854 = vld [vmem:[#allocation5 + $0x188] sm:$0xff]
        %v855 = vld [vmem:[#allocation5 + $0x190] sm:$0xff]
        %v856 = vld [vmem:[#allocation5 + $0x198] sm:$0xff]
        %v857 = vld [vmem:[#allocation5 + $0x1a0] sm:$0xff]
        %v858 = vld [vmem:[#allocation5 + $0x1a8] sm:$0xff]
        %v859 = vld [vmem:[#allocation5 + $0x1b0] sm:$0xff]
        %v860 = vld [vmem:[#allocation5 + $0x1b8] sm:$0xff]
        %v861 = vld [vmem:[#allocation5 + $0x1c0] sm:$0xff]
        %v862 = vld [vmem:[#allocation5 + $0x1c8] sm:$0xff]
        %v863 = vld [vmem:[#allocation5 + $0x1d0] sm:$0xff]
        %v864 = vld [vmem:[#allocation5 + $0x1d8] sm:$0xff]
        %v865 = vld [vmem:[#allocation5 + $0x1e0] sm:$0xff]
        %v866 = vld [vmem:[#allocation5 + $0x1e8] sm:$0xff]
        %v867 = vld [vmem:[#allocation5 + $0x1f0] sm:$0xff]
        %v868 = vld [vmem:[#allocation5 + $0x1f8] sm:$0xff]
        %v869 = vld [vmem:[#allocation5 + $0x200] sm:$0xff]
        %v870 = vld [vmem:[#allocation5 + $0x208] sm:$0xff]
        %v871 = vld [vmem:[#allocation5 + $0x210] sm:$0xff]
        %v872 = vld [vmem:[#allocation5 + $0x218] sm:$0xff]
        %v873 = vld [vmem:[#allocation5 + $0x220] sm:$0xff]
        %v874 = vld [vmem:[#allocation5 + $0x228] sm:$0xff]
        %v875 = vld [vmem:[#allocation5 + $0x230] sm:$0xff]
        %v876 = vld [vmem:[#allocation5 + $0x238] sm:$0xff]
        %v877 = vld [vmem:[#allocation5 + $0x240] sm:$0xff]
        %v878 = vld [vmem:[#allocation5 + $0x248] sm:$0xff]
        %v879 = vld [vmem:[#allocation5 + $0x250] sm:$0xff]
        %v880 = vld [vmem:[#allocation5 + $0x258] sm:$0xff]
        %v881 = vld [vmem:[#allocation5 + $0x260] sm:$0xff]
        %v882 = vld [vmem:[#allocation5 + $0x268] sm:$0xff]
        %v883 = vld [vmem:[#allocation5 + $0x270] sm:$0xff]
        %v884 = vld [vmem:[#allocation5 + $0x278] sm:$0xff]
        %v885 = vld [vmem:[#allocation5 + $0x280] sm:$0xff]
        %v886 = vld [vmem:[#allocation5 + $0x288] sm:$0xff]
        %v887 = vld [vmem:[#allocation5 + $0x290] sm:$0xff]
        %v888 = vld [vmem:[#allocation5 + $0x298] sm:$0xff]
        %v889 = vld [vmem:[#allocation5 + $0x2a0] sm:$0xff]
        %v890 = vld [vmem:[#allocation5 + $0x2a8] sm:$0xff]
        %v891 = vld [vmem:[#allocation5 + $0x2b0] sm:$0xff]
        %v892 = vld [vmem:[#allocation5 + $0x2b8] sm:$0xff]
        %v893 = vld [vmem:[#allocation5 + $0x2c0] sm:$0xff]
        %v894 = vld [vmem:[#allocation5 + $0x2c8] sm:$0xff]
        %v895 = vld [vmem:[#allocation5 + $0x2d0] sm:$0xff]
        %v896 = vld [vmem:[#allocation5 + $0x2d8] sm:$0xff]
        %v897 = vld [vmem:[#allocation5 + $0x2e0] sm:$0xff]
        %v898 = vld [vmem:[#allocation5 + $0x2e8] sm:$0xff]
        %v899 = vld [vmem:[#allocation5 + $0x2f0] sm:$0xff]
        %v900 = vld [vmem:[#allocation5 + $0x2f8] sm:$0xff]
        %v901 = vld [vmem:[#allocation5 + $0x300] sm:$0xff]
        %v902 = vld [vmem:[#allocation5 + $0x308] sm:$0xff]
        %v903 = vld [vmem:[#allocation5 + $0x310] sm:$0xff]
        %v904 = vld [vmem:[#allocation5 + $0x318] sm:$0xff]
        %v905 = vld [vmem:[#allocation5 + $0x320] sm:$0xff]
        %v906 = vld [vmem:[#allocation5 + $0x328] sm:$0xff]
        %v907 = vld [vmem:[#allocation5 + $0x330] sm:$0xff]
        %v908 = vld [vmem:[#allocation5 + $0x338] sm:$0xff]
        %v909 = vld [vmem:[#allocation5 + $0x340] sm:$0xff]
        %v910 = vld [vmem:[#allocation5 + $0x348] sm:$0xff]
        %v911 = vld [vmem:[#allocation5 + $0x350] sm:$0xff]
        %v912 = vld [vmem:[#allocation5 + $0x358] sm:$0xff]
        %v913 = vld [vmem:[#allocation5 + $0x360] sm:$0xff]
        %v914 = vld [vmem:[#allocation5 + $0x368] sm:$0xff]
        %v915 = vld [vmem:[#allocation5 + $0x370] sm:$0xff]
        %v916 = vld [vmem:[#allocation5 + $0x378] sm:$0xff]
        %v917 = vld [vmem:[#allocation5 + $0x380] sm:$0xff]
        %v918 = vld [vmem:[#allocation5 + $0x388] sm:$0xff]
        %v919 = vld [vmem:[#allocation5 + $0x390] sm:$0xff]
        %v920 = vld [vmem:[#allocation5 + $0x398] sm:$0xff]
        %v921 = vld [vmem:[#allocation5 + $0x3a0] sm:$0xff]
        %v922 = vld [vmem:[#allocation5 + $0x3a8] sm:$0xff]
        %v923 = vld [vmem:[#allocation5 + $0x3b0] sm:$0xff]
        %v924 = vld [vmem:[#allocation5 + $0x3b8] sm:$0xff]
        %v925 = vld [vmem:[#allocation5 + $0x3c0] sm:$0xff]
        %v926 = vld [vmem:[#allocation5 + $0x3c8] sm:$0xff]
        %v927 = vld [vmem:[#allocation5 + $0x3d0] sm:$0xff]
        %v928 = vld [vmem:[#allocation5 + $0x3d8] sm:$0xff]
        %v929 = vld [vmem:[#allocation5 + $0x3e0] sm:$0xff]
        %v930 = vld [vmem:[#allocation5 + $0x3e8] sm:$0xff]
        %v931 = vld [vmem:[#allocation5 + $0x3f0] sm:$0xff]
        %v932 = vld [vmem:[#allocation5 + $0x3f8] sm:$0xff]
        %v933 = vld [vmem:[#allocation5 + $0x400] sm:$0xff]
        %v934 = vld [vmem:[#allocation5 + $0x408] sm:$0xff]
        %v935 = vld [vmem:[#allocation5 + $0x410] sm:$0xff]
        %v936 = vld [vmem:[#allocation5 + $0x418] sm:$0xff]
        %v937 = vld [vmem:[#allocation5 + $0x420] sm:$0xff]
        %v938 = vld [vmem:[#allocation5 + $0x428] sm:$0xff]
        %v939 = vld [vmem:[#allocation5 + $0x430] sm:$0xff]
        %v940 = vld [vmem:[#allocation5 + $0x438] sm:$0xff]
        %v941 = vld [vmem:[#allocation5 + $0x440] sm:$0xff]
        %v942 = vld [vmem:[#allocation5 + $0x448] sm:$0xff]
        %v943 = vld [vmem:[#allocation5 + $0x450] sm:$0xff]
        %v944 = vld [vmem:[#allocation5 + $0x458] sm:$0xff]
        %v945 = vld [vmem:[#allocation5 + $0x460] sm:$0xff]
        %v946 = vld [vmem:[#allocation5 + $0x468] sm:$0xff]
        %v947 = vld [vmem:[#allocation5 + $0x470] sm:$0xff]
        %v948 = vld [vmem:[#allocation5 + $0x478] sm:$0xff]
        %v949 = vld [vmem:[#allocation5 + $0x480] sm:$0xff]
        %v950 = vld [vmem:[#allocation5 + $0x488] sm:$0xff]
        %v951 = vld [vmem:[#allocation5 + $0x490] sm:$0xff]
        %v952 = vld [vmem:[#allocation5 + $0x498] sm:$0xff]
        %v953 = vld [vmem:[#allocation5 + $0x4a0] sm:$0xff]
        %v954 = vld [vmem:[#allocation5 + $0x4a8] sm:$0xff]
        %v955 = vld [vmem:[#allocation5 + $0x4b0] sm:$0xff]
        %v956 = vld [vmem:[#allocation5 + $0x4b8] sm:$0xff]
        %v957 = vld [vmem:[#allocation5 + $0x4c0] sm:$0xff]
        %v958 = vld [vmem:[#allocation5 + $0x4c8] sm:$0xff]
        %v959 = vld [vmem:[#allocation5 + $0x4d0] sm:$0xff]
        %v960 = vld [vmem:[#allocation5 + $0x4d8] sm:$0xff]
        %v961 = vld [vmem:[#allocation5 + $0x4e0] sm:$0xff]
        %v962 = vld [vmem:[#allocation5 + $0x4e8] sm:$0xff]
        %v963 = vld [vmem:[#allocation5 + $0x4f0] sm:$0xff]
        %v964 = vld [vmem:[#allocation5 + $0x4f8] sm:$0xff]
        %v965 = vld [vmem:[#allocation5 + $0x500] sm:$0xff]
        %v966 = vld [vmem:[#allocation5 + $0x508] sm:$0xff]
        %v967 = vld [vmem:[#allocation5 + $0x510] sm:$0xff]
        %v968 = vld [vmem:[#allocation5 + $0x518] sm:$0xff]
        %v969 = vld [vmem:[#allocation5 + $0x520] sm:$0xff]
        %v970 = vld [vmem:[#allocation5 + $0x528] sm:$0xff]
        %v971 = vld [vmem:[#allocation5 + $0x530] sm:$0xff]
        %v972 = vld [vmem:[#allocation5 + $0x538] sm:$0xff]
        %v973 = vld [vmem:[#allocation5 + $0x540] sm:$0xff]
        %v974 = vld [vmem:[#allocation5 + $0x548] sm:$0xff]
        %v975 = vld [vmem:[#allocation5 + $0x550] sm:$0xff]
        %v976 = vld [vmem:[#allocation5 + $0x558] sm:$0xff]
        %v977 = vld [vmem:[#allocation5 + $0x560] sm:$0xff]
        %v978 = vld [vmem:[#allocation5 + $0x568] sm:$0xff]
        %v979 = vld [vmem:[#allocation5 + $0x570] sm:$0xff]
        %v980 = vld [vmem:[#allocation5 + $0x578] sm:$0xff]
        %v981 = vld [vmem:[#allocation5 + $0x580] sm:$0xff]
        %v982 = vld [vmem:[#allocation5 + $0x588] sm:$0xff]
        %v983 = vld [vmem:[#allocation5 + $0x590] sm:$0xff]
        %v984 = vld [vmem:[#allocation5 + $0x598] sm:$0xff]
        %v985 = vld [vmem:[#allocation5 + $0x5a0] sm:$0xff]
        %v986 = vld [vmem:[#allocation5 + $0x5a8] sm:$0xff]
        %v987 = vld [vmem:[#allocation5 + $0x5b0] sm:$0xff]
        %v988 = vld [vmem:[#allocation5 + $0x5b8] sm:$0xff]
        %v989 = vld [vmem:[#allocation5 + $0x5c0] sm:$0xff]
        %v990 = vld [vmem:[#allocation5 + $0x5c8] sm:$0xff]
        %v991 = vld [vmem:[#allocation5 + $0x5d0] sm:$0xff]
        %v992 = vld [vmem:[#allocation5 + $0x5d8] sm:$0xff]
        %v993 = vld [vmem:[#allocation5 + $0x5e0] sm:$0xff]
        %v994 = vld [vmem:[#allocation5 + $0x5e8] sm:$0xff]
        %v995 = vld [vmem:[#allocation5 + $0x5f0] sm:$0xff]
        %v996 = vld [vmem:[#allocation5 + $0x5f8] sm:$0xff]
        %v997 = vld [vmem:[%s7] sm:$0x1]
        %v999 = vlaneseq
        %v1000 = vshrl.u32 %v999, 7
        %v1001 = vsub.s32 0, %v1000
        %v1002 = vrot.slane %v997, %v1001
        %v1004 = vld [vmem:[%s8] sm:$0x1]
        %v1006 = vlaneseq
        %v1007 = vshrl.u32 %v1006, 7
        %v1008 = vsub.s32 0, %v1007
        %v1009 = vrot.slane %v1004, %v1008
        %v1011 = vld [vmem:[#allocation4] sm:$0xff]
        %v1012 = vld [vmem:[#allocation4 + $0x8] sm:$0xff]
        %s1013 = smul.u32 0, 3
        %s1014 = smul.addr %s1013, 8
        %s1015 = scalar_lea.vmem [#allocation2], %s1014
        %v1016 = vld [vmem:[%s1015] sm:$0xff]
        %v1017 = vld [vmem:[%s1015 + $0x8] sm:$0xff]
        %v1018 = vld [vmem:[%s1015 + $0x10] sm:$0xff]
        %s1019 = smul.u32 1, 3
        %s1020 = smul.addr %s1019, 8
        %s1021 = scalar_lea.vmem [#allocation3], %s1020
        %v1022 = vld [vmem:[%s1021] sm:$0xff]
        %v1023 = vld [vmem:[%s1021 + $0x8] sm:$0xff]
        %v1024 = vld [vmem:[%s1021 + $0x10] sm:$0xff]
        %1025 = vmatprep.subr.mxu0 %v806
        %1026 = vmatpush1.msra.mxu0 %v805
        %1027 = vmatprep.subr.mxu0 %v812
        %1028 = vmatpush1.msra.mxu0 %v811
        %1029 = vmatprep.subr.mxu0 %v818
        %1030 = vmatpush1.msra.mxu0 %v817
        %1031 = vmatprep.subr.mxu0 %v824
        %1032 = vmatpush1.msra.mxu0 %v823
        %1033 = vmatprep.subr.mxu0 %v830
        %1034 = vmatpush1.msra.mxu0 %v829
        %1035 = vmatprep.subr.mxu0 %v836
        %1036 = vmatpush1.msra.mxu0 %v835
        %1037 = vmatprep.subr.mxu0 %v842
        %1038 = vmatpush1.msra.mxu0 %v841
        %1039 = vmatprep.subr.mxu0 %v848
        %1040 = vmatpush1.msra.mxu0 %v847
        %1041 = vmatprep.subr.mxu0 %v854
        %1042 = vmatpush1.msra.mxu0 %v853
        %1043 = vmatprep.subr.mxu0 %v860
        %1044 = vmatpush1.msra.mxu0 %v859
        %1045 = vmatprep.subr.mxu0 %v866
        %1046 = vmatpush1.msra.mxu0 %v865
        %1047 = vmatprep.subr.mxu0 %v872
        %1048 = vmatpush1.msra.mxu0 %v871
        %1049 = vmatprep.subr.mxu0 %v878
        %1050 = vmatpush1.msra.mxu0 %v877
        %1051 = vmatprep.subr.mxu0 %v884
        %1052 = vmatpush1.msra.mxu0 %v883
        %1053 = vmatprep.subr.mxu0 %v890
        %1054 = vmatpush1.msra.mxu0 %v889
        %1055 = vmatprep.subr.mxu0 %v896
        %1056 = vmatpush1.msra.mxu0 %v895
        %1057 = vmatprep.subr.mxu0 %v902
        %1058 = vmatpush1.msra.mxu0 %v901
        %1059 = vmatprep.subr.mxu0 %v908
        %1060 = vmatpush1.msra.mxu0 %v907
        %1061 = vmatprep.subr.mxu0 %v914
        %1062 = vmatpush1.msra.mxu0 %v913
        %1063 = vmatprep.subr.mxu0 %v920
        %1064 = vmatpush1.msra.mxu0 %v919
        %1065 = vmatprep.subr.mxu0 %v926
        %1066 = vmatpush1.msra.mxu0 %v925
        %1067 = vmatprep.subr.mxu0 %v932
        %1068 = vmatpush1.msra.mxu0 %v931
        %1069 = vmatprep.subr.mxu0 %v938
        %1070 = vmatpush1.msra.mxu0 %v937
        %1071 = vmatprep.subr.mxu0 %v944
        %1072 = vmatpush1.msra.mxu0 %v943
        %1073 = vmatprep.subr.mxu0 %v950
        %1074 = vmatpush1.msra.mxu0 %v949
        %1075 = vmatprep.subr.mxu0 %v956
        %1076 = vmatpush1.msra.mxu0 %v955
        %1077 = vmatprep.subr.mxu0 %v962
        %1078 = vmatpush1.msra.mxu0 %v961
        %1079 = vmatprep.subr.mxu0 %v968
        %1080 = vmatpush1.msra.mxu0 %v967
        %1081 = vmatprep.subr.mxu0 %v974
        %1082 = vmatpush1.msra.mxu0 %v973
        %1083 = vmatprep.subr.mxu0 %v980
        %1084 = vmatpush1.msra.mxu0 %v979
        %1085 = vmatprep.subr.mxu0 %v986
        %1086 = vmatpush1.msra.mxu0 %v985
        %1087 = vmatprep.subr.mxu0 %v992
        %1088 = vmatpush1.msra.mxu0 %v991
        %1089 = vmatprep.mubr.f32.mxu0 %v1012
        %1090 = vmatmul.mubr.f32.gmra.mrb[0].mxu0 %v1011
        %v1091 = vpop.f32.mrb[0].mxu0
        %v1092 = vadd.f32 0.0, %v1091
        %v1093 = vpop.f32.mrb[0].mxu0
        %v1094 = vadd.f32 0.0, %v1093
        %1095 = vdwg.mxu0
        %1096 = vmatprep.subr.mxu0 %v808
        %1097 = vmatpush1.msra.mxu0 %v807
        %1098 = vmatprep.subr.mxu0 %v814
        %1099 = vmatpush1.msra.mxu0 %v813
        %1100 = vmatprep.subr.mxu0 %v820
        %1101 = vmatpush1.msra.mxu0 %v819
        %1102 = vmatprep.subr.mxu0 %v826
        %1103 = vmatpush1.msra.mxu0 %v825
        %1104 = vmatprep.subr.mxu0 %v832
        %1105 = vmatpush1.msra.mxu0 %v831
        %1106 = vmatprep.subr.mxu0 %v838
        %1107 = vmatpush1.msra.mxu0 %v837
        %1108 = vmatprep.subr.mxu0 %v844
        %1109 = vmatpush1.msra.mxu0 %v843
        %1110 = vmatprep.subr.mxu0 %v850
        %1111 = vmatpush1.msra.mxu0 %v849
        %1112 = vmatprep.subr.mxu0 %v856
        %1113 = vmatpush1.msra.mxu0 %v855
        %1114 = vmatprep.subr.mxu0 %v862
        %1115 = vmatpush1.msra.mxu0 %v861
        %1116 = vmatprep.subr.mxu0 %v868
        %1117 = vmatpush1.msra.mxu0 %v867
        %1118 = vmatprep.subr.mxu0 %v874
        %1119 = vmatpush1.msra.mxu0 %v873
        %1120 = vmatprep.subr.mxu0 %v880
        %1121 = vmatpush1.msra.mxu0 %v879
        %1122 = vmatprep.subr.mxu0 %v886
        %1123 = vmatpush1.msra.mxu0 %v885
        %1124 = vmatprep.subr.mxu0 %v892
        %1125 = vmatpush1.msra.mxu0 %v891
        %1126 = vmatprep.subr.mxu0 %v898
        %1127 = vmatpush1.msra.mxu0 %v897
        %1128 = vmatprep.subr.mxu0 %v904
        %1129 = vmatpush1.msra.mxu0 %v903
        %1130 = vmatprep.subr.mxu0 %v910
        %1131 = vmatpush1.msra.mxu0 %v909
        %1132 = vmatprep.subr.mxu0 %v916
        %1133 = vmatpush1.msra.mxu0 %v915
        %1134 = vmatprep.subr.mxu0 %v922
        %1135 = vmatpush1.msra.mxu0 %v921
        %1136 = vmatprep.subr.mxu0 %v928
        %1137 = vmatpush1.msra.mxu0 %v927
        %1138 = vmatprep.subr.mxu0 %v934
        %1139 = vmatpush1.msra.mxu0 %v933
        %1140 = vmatprep.subr.mxu0 %v940
        %1141 = vmatpush1.msra.mxu0 %v939
        %1142 = vmatprep.subr.mxu0 %v946
        %1143 = vmatpush1.msra.mxu0 %v945
        %1144 = vmatprep.subr.mxu0 %v952
        %1145 = vmatpush1.msra.mxu0 %v951
        %1146 = vmatprep.subr.mxu0 %v958
        %1147 = vmatpush1.msra.mxu0 %v957
        %1148 = vmatprep.subr.mxu0 %v964
        %1149 = vmatpush1.msra.mxu0 %v963
        %1150 = vmatprep.subr.mxu0 %v970
        %1151 = vmatpush1.msra.mxu0 %v969
        %1152 = vmatprep.subr.mxu0 %v976
        %1153 = vmatpush1.msra.mxu0 %v975
        %1154 = vmatprep.subr.mxu0 %v982
        %1155 = vmatpush1.msra.mxu0 %v981
        %1156 = vmatprep.subr.mxu0 %v988
        %1157 = vmatpush1.msra.mxu0 %v987
        %1158 = vmatprep.subr.mxu0 %v994
        %1159 = vmatpush1.msra.mxu0 %v993
        %1160 = vmatprep.mubr.f32.mxu0 %v1012
        %1161 = vmatmul.mubr.f32.gmra.mrb[0].mxu0 %v1011
        %v1162 = vpop.f32.mrb[0].mxu0
        %v1163 = vadd.f32 0.0, %v1162
        %v1164 = vpop.f32.mrb[0].mxu0
        %v1165 = vadd.f32 0.0, %v1164
        %1166 = vdwg.mxu0
        %1167 = vmatprep.subr.mxu0 %v810
        %1168 = vmatpush1.msra.mxu0 %v809
        %1169 = vmatprep.subr.mxu0 %v816
        %1170 = vmatpush1.msra.mxu0 %v815
        %1171 = vmatprep.subr.mxu0 %v822
        %1172 = vmatpush1.msra.mxu0 %v821
        %1173 = vmatprep.subr.mxu0 %v828
        %1174 = vmatpush1.msra.mxu0 %v827
        %1175 = vmatprep.subr.mxu0 %v834
        %1176 = vmatpush1.msra.mxu0 %v833
        %1177 = vmatprep.subr.mxu0 %v840
        %1178 = vmatpush1.msra.mxu0 %v839
        %1179 = vmatprep.subr.mxu0 %v846
        %1180 = vmatpush1.msra.mxu0 %v845
        %1181 = vmatprep.subr.mxu0 %v852
        %1182 = vmatpush1.msra.mxu0 %v851
        %1183 = vmatprep.subr.mxu0 %v858
        %1184 = vmatpush1.msra.mxu0 %v857
        %1185 = vmatprep.subr.mxu0 %v864
        %1186 = vmatpush1.msra.mxu0 %v863
        %1187 = vmatprep.subr.mxu0 %v870
        %1188 = vmatpush1.msra.mxu0 %v869
        %1189 = vmatprep.subr.mxu0 %v876
        %1190 = vmatpush1.msra.mxu0 %v875
        %1191 = vmatprep.subr.mxu0 %v882
        %1192 = vmatpush1.msra.mxu0 %v881
        %1193 = vmatprep.subr.mxu0 %v888
        %1194 = vmatpush1.msra.mxu0 %v887
        %1195 = vmatprep.subr.mxu0 %v894
        %1196 = vmatpush1.msra.mxu0 %v893
        %1197 = vmatprep.subr.mxu0 %v900
        %1198 = vmatpush1.msra.mxu0 %v899
        %1199 = vmatprep.subr.mxu0 %v906
        %1200 = vmatpush1.msra.mxu0 %v905
        %1201 = vmatprep.subr.mxu0 %v912
        %1202 = vmatpush1.msra.mxu0 %v911
        %1203 = vmatprep.subr.mxu0 %v918
        %1204 = vmatpush1.msra.mxu0 %v917
        %1205 = vmatprep.subr.mxu0 %v924
        %1206 = vmatpush1.msra.mxu0 %v923
        %1207 = vmatprep.subr.mxu0 %v930
        %1208 = vmatpush1.msra.mxu0 %v929
        %1209 = vmatprep.subr.mxu0 %v936
        %1210 = vmatpush1.msra.mxu0 %v935
        %1211 = vmatprep.subr.mxu0 %v942
        %1212 = vmatpush1.msra.mxu0 %v941
        %1213 = vmatprep.subr.mxu0 %v948
        %1214 = vmatpush1.msra.mxu0 %v947
        %1215 = vmatprep.subr.mxu0 %v954
        %1216 = vmatpush1.msra.mxu0 %v953
        %1217 = vmatprep.subr.mxu0 %v960
        %1218 = vmatpush1.msra.mxu0 %v959
        %1219 = vmatprep.subr.mxu0 %v966
        %1220 = vmatpush1.msra.mxu0 %v965
        %1221 = vmatprep.subr.mxu0 %v972
        %1222 = vmatpush1.msra.mxu0 %v971
        %1223 = vmatprep.subr.mxu0 %v978
        %1224 = vmatpush1.msra.mxu0 %v977
        %1225 = vmatprep.subr.mxu0 %v984
        %1226 = vmatpush1.msra.mxu0 %v983
        %1227 = vmatprep.subr.mxu0 %v990
        %1228 = vmatpush1.msra.mxu0 %v989
        %1229 = vmatprep.subr.mxu0 %v996
        %1230 = vmatpush1.msra.mxu0 %v995
        %1231 = vmatprep.mubr.f32.mxu0 %v1012
        %1232 = vmatmul.mubr.f32.gmra.mrb[0].mxu0 %v1011
        %v1233 = vpop.f32.mrb[0].mxu0
        %v1234 = vadd.f32 0.0, %v1233
        %v1235 = vpop.f32.mrb[0].mxu0
        %v1236 = vadd.f32 0.0, %v1235
        %1237 = vdwg.mxu0
        %v1238 = vadd.f32 %v1016, %v1092
        %v1239 = vadd.f32 %v1017, %v1094
        %v1240 = vmul.f32 %v1238, 0.5
        %v1241 = vmul.f32 %v1239, 0.5
        %v1242 = vtanh.pop %v1240
        %v1243 = vtanh.pop %v1241
        %v1244 = vadd.f32 %v1242, 1.0
        %v1245 = vadd.f32 %v1243, 1.0
        %v1246 = vmul.f32 %v1244, 0.5
        %v1247 = vmul.f32 %v1245, 0.5
        %v1248 = vadd.f32 %v1163, %v1002
        %v1249 = vmul.f32 %v1246, %v1248
        %v1250 = vadd.f32 %v1018, %v1249
        %v1251 = vtanh.pop %v1250
        %v1252 = vsub.f32 %v1011, %v1251
        %v1253 = vmul.f32 %v1247, %v1252
        %v1254 = vadd.f32 %v1251, %v1253
        %v1255 = vadd.f32 %v1022, %v1165
        %v1256 = vadd.f32 %v1023, %v1234
        %v1257 = vmul.f32 %v1255, 0.5
        %v1258 = vmul.f32 %v1256, 0.5
        %v1259 = vtanh.pop %v1257
        %v1260 = vtanh.pop %v1258
        %v1261 = vadd.f32 %v1259, 1.0
        %v1262 = vadd.f32 %v1260, 1.0
        %v1263 = vmul.f32 %v1261, 0.5
        %v1264 = vmul.f32 %v1262, 0.5
        %v1265 = vadd.f32 %v1236, %v1009
        %v1266 = vmul.f32 %v1263, %v1265
        %v1267 = vadd.f32 %v1024, %v1266
        %v1268 = vtanh.pop %v1267
        %v1269 = vsub.f32 %v1012, %v1268
        %v1270 = vmul.f32 %v1264, %v1269
        %v1271 = vadd.f32 %v1268, %v1270
        %1272 = vst [vmem:[%s395] sm:$0xff] %v1254
        %s1273 = scalar_lea.vmem %s402, 8 [#allocation9]
        %1274 = vst [vmem:[%s1273] sm:$0xff] %v1271
        %s1275 = smul.addr %s1019, 8
        %s1276 = scalar_lea.vmem [#allocation2], %s1275
        %v1277 = vld [vmem:[%s1276] sm:$0xff]
        %v1278 = vld [vmem:[%s1276 + $0x8] sm:$0xff]
        %v1279 = vld [vmem:[%s1276 + $0x10] sm:$0xff]
        %s1280 = smul.addr %s1013, 8
        %s1281 = scalar_lea.vmem [#allocation3], %s1280
        %v1282 = vld [vmem:[%s1281] sm:$0xff]
        %v1283 = vld [vmem:[%s1281 + $0x8] sm:$0xff]
        %v1284 = vld [vmem:[%s1281 + $0x10] sm:$0xff]
        %1285 = vmatprep.subr.mxu0 %v806
        %1286 = vmatpush1.msra.mxu0 %v805
        %1287 = vmatprep.subr.mxu0 %v812
        %1288 = vmatpush1.msra.mxu0 %v811
        %1289 = vmatprep.subr.mxu0 %v818
        %1290 = vmatpush1.msra.mxu0 %v817
        %1291 = vmatprep.subr.mxu0 %v824
        %1292 = vmatpush1.msra.mxu0 %v823
        %1293 = vmatprep.subr.mxu0 %v830
        %1294 = vmatpush1.msra.mxu0 %v829
        %1295 = vmatprep.subr.mxu0 %v836
        %1296 = vmatpush1.msra.mxu0 %v835
        %1297 = vmatprep.subr.mxu0 %v842
        %1298 = vmatpush1.msra.mxu0 %v841
        %1299 = vmatprep.subr.mxu0 %v848
        %1300 = vmatpush1.msra.mxu0 %v847
        %1301 = vmatprep.subr.mxu0 %v854
        %1302 = vmatpush1.msra.mxu0 %v853
        %1303 = vmatprep.subr.mxu0 %v860
        %1304 = vmatpush1.msra.mxu0 %v859
        %1305 = vmatprep.subr.mxu0 %v866
        %1306 = vmatpush1.msra.mxu0 %v865
        %1307 = vmatprep.subr.mxu0 %v872
        %1308 = vmatpush1.msra.mxu0 %v871
        %1309 = vmatprep.subr.mxu0 %v878
        %1310 = vmatpush1.msra.mxu0 %v877
        %1311 = vmatprep.subr.mxu0 %v884
        %1312 = vmatpush1.msra.mxu0 %v883
        %1313 = vmatprep.subr.mxu0 %v890
        %1314 = vmatpush1.msra.mxu0 %v889
        %1315 = vmatprep.subr.mxu0 %v896
        %1316 = vmatpush1.msra.mxu0 %v895
        %1317 = vmatprep.subr.mxu0 %v902
        %1318 = vmatpush1.msra.mxu0 %v901
        %1319 = vmatprep.subr.mxu0 %v908
        %1320 = vmatpush1.msra.mxu0 %v907
        %1321 = vmatprep.subr.mxu0 %v914
        %1322 = vmatpush1.msra.mxu0 %v913
        %1323 = vmatprep.subr.mxu0 %v920
        %1324 = vmatpush1.msra.mxu0 %v919
        %1325 = vmatprep.subr.mxu0 %v926
        %1326 = vmatpush1.msra.mxu0 %v925
        %1327 = vmatprep.subr.mxu0 %v932
        %1328 = vmatpush1.msra.mxu0 %v931
        %1329 = vmatprep.subr.mxu0 %v938
        %1330 = vmatpush1.msra.mxu0 %v937
        %1331 = vmatprep.subr.mxu0 %v944
        %1332 = vmatpush1.msra.mxu0 %v943
        %1333 = vmatprep.subr.mxu0 %v950
        %1334 = vmatpush1.msra.mxu0 %v949
        %1335 = vmatprep.subr.mxu0 %v956
        %1336 = vmatpush1.msra.mxu0 %v955
        %1337 = vmatprep.subr.mxu0 %v962
        %1338 = vmatpush1.msra.mxu0 %v961
        %1339 = vmatprep.subr.mxu0 %v968
        %1340 = vmatpush1.msra.mxu0 %v967
        %1341 = vmatprep.subr.mxu0 %v974
        %1342 = vmatpush1.msra.mxu0 %v973
        %1343 = vmatprep.subr.mxu0 %v980
        %1344 = vmatpush1.msra.mxu0 %v979
        %1345 = vmatprep.subr.mxu0 %v986
        %1346 = vmatpush1.msra.mxu0 %v985
        %1347 = vmatprep.subr.mxu0 %v992
        %1348 = vmatpush1.msra.mxu0 %v991
        %1349 = vmatprep.mubr.f32.mxu0 %v1271
        %1350 = vmatmul.mubr.f32.gmra.mrb[0].mxu0 %v1254
        %v1351 = vpop.f32.mrb[0].mxu0
        %v1352 = vadd.f32 0.0, %v1351
        %v1353 = vpop.f32.mrb[0].mxu0
        %v1354 = vadd.f32 0.0, %v1353
        %1355 = vdwg.mxu0
        %1356 = vmatprep.subr.mxu0 %v808
        %1357 = vmatpush1.msra.mxu0 %v807
        %1358 = vmatprep.subr.mxu0 %v814
        %1359 = vmatpush1.msra.mxu0 %v813
        %1360 = vmatprep.subr.mxu0 %v820
        %1361 = vmatpush1.msra.mxu0 %v819
        %1362 = vmatprep.subr.mxu0 %v826
        %1363 = vmatpush1.msra.mxu0 %v825
        %1364 = vmatprep.subr.mxu0 %v832
        %1365 = vmatpush1.msra.mxu0 %v831
        %1366 = vmatprep.subr.mxu0 %v838
        %1367 = vmatpush1.msra.mxu0 %v837
        %1368 = vmatprep.subr.mxu0 %v844
        %1369 = vmatpush1.msra.mxu0 %v843
        %1370 = vmatprep.subr.mxu0 %v850
        %1371 = vmatpush1.msra.mxu0 %v849
        %1372 = vmatprep.subr.mxu0 %v856
        %1373 = vmatpush1.msra.mxu0 %v855
        %1374 = vmatprep.subr.mxu0 %v862
        %1375 = vmatpush1.msra.mxu0 %v861
        %1376 = vmatprep.subr.mxu0 %v868
        %1377 = vmatpush1.msra.mxu0 %v867
        %1378 = vmatprep.subr.mxu0 %v874
        %1379 = vmatpush1.msra.mxu0 %v873
        %1380 = vmatprep.subr.mxu0 %v880
        %1381 = vmatpush1.msra.mxu0 %v879
        %1382 = vmatprep.subr.mxu0 %v886
        %1383 = vmatpush1.msra.mxu0 %v885
        %1384 = vmatprep.subr.mxu0 %v892
        %1385 = vmatpush1.msra.mxu0 %v891
        %1386 = vmatprep.subr.mxu0 %v898
        %1387 = vmatpush1.msra.mxu0 %v897
        %1388 = vmatprep.subr.mxu0 %v904
        %1389 = vmatpush1.msra.mxu0 %v903
        %1390 = vmatprep.subr.mxu0 %v910
        %1391 = vmatpush1.msra.mxu0 %v909
        %1392 = vmatprep.subr.mxu0 %v916
        %1393 = vmatpush1.msra.mxu0 %v915
        %1394 = vmatprep.subr.mxu0 %v922
        %1395 = vmatpush1.msra.mxu0 %v921
        %1396 = vmatprep.subr.mxu0 %v928
        %1397 = vmatpush1.msra.mxu0 %v927
        %1398 = vmatprep.subr.mxu0 %v934
        %1399 = vmatpush1.msra.mxu0 %v933
        %1400 = vmatprep.subr.mxu0 %v940
        %1401 = vmatpush1.msra.mxu0 %v939
        %1402 = vmatprep.subr.mxu0 %v946
        %1403 = vmatpush1.msra.mxu0 %v945
        %1404 = vmatprep.subr.mxu0 %v952
        %1405 = vmatpush1.msra.mxu0 %v951
        %1406 = vmatprep.subr.mxu0 %v958
        %1407 = vmatpush1.msra.mxu0 %v957
        %1408 = vmatprep.subr.mxu0 %v964
        %1409 = vmatpush1.msra.mxu0 %v963
        %1410 = vmatprep.subr.mxu0 %v970
        %1411 = vmatpush1.msra.mxu0 %v969
        %1412 = vmatprep.subr.mxu0 %v976
        %1413 = vmatpush1.msra.mxu0 %v975
        %1414 = vmatprep.subr.mxu0 %v982
        %1415 = vmatpush1.msra.mxu0 %v981
        %1416 = vmatprep.subr.mxu0 %v988
        %1417 = vmatpush1.msra.mxu0 %v987
        %1418 = vmatprep.subr.mxu0 %v994
        %1419 = vmatpush1.msra.mxu0 %v993
        %1420 = vmatprep.mubr.f32.mxu0 %v1271
        %1421 = vmatmul.mubr.f32.gmra.mrb[0].mxu0 %v1254
        %v1422 = vpop.f32.mrb[0].mxu0
        %v1423 = vadd.f32 0.0, %v1422
        %v1424 = vpop.f32.mrb[0].mxu0
        %v1425 = vadd.f32 0.0, %v1424
        %1426 = vdwg.mxu0
        %1427 = vmatprep.subr.mxu0 %v810
        %1428 = vmatpush1.msra.mxu0 %v809
        %1429 = vmatprep.subr.mxu0 %v816
        %1430 = vmatpush1.msra.mxu0 %v815
        %1431 = vmatprep.subr.mxu0 %v822
        %1432 = vmatpush1.msra.mxu0 %v821
        %1433 = vmatprep.subr.mxu0 %v828
        %1434 = vmatpush1.msra.mxu0 %v827
        %1435 = vmatprep.subr.mxu0 %v834
        %1436 = vmatpush1.msra.mxu0 %v833
        %1437 = vmatprep.subr.mxu0 %v840
        %1438 = vmatpush1.msra.mxu0 %v839
        %1439 = vmatprep.subr.mxu0 %v846
        %1440 = vmatpush1.msra.mxu0 %v845
        %1441 = vmatprep.subr.mxu0 %v852
        %1442 = vmatpush1.msra.mxu0 %v851
        %1443 = vmatprep.subr.mxu0 %v858
        %1444 = vmatpush1.msra.mxu0 %v857
        %1445 = vmatprep.subr.mxu0 %v864
        %1446 = vmatpush1.msra.mxu0 %v863
        %1447 = vmatprep.subr.mxu0 %v870
        %1448 = vmatpush1.msra.mxu0 %v869
        %1449 = vmatprep.subr.mxu0 %v876
        %1450 = vmatpush1.msra.mxu0 %v875
        %1451 = vmatprep.subr.mxu0 %v882
        %1452 = vmatpush1.msra.mxu0 %v881
        %1453 = vmatprep.subr.mxu0 %v888
        %1454 = vmatpush1.msra.mxu0 %v887
        %1455 = vmatprep.subr.mxu0 %v894
        %1456 = vmatpush1.msra.mxu0 %v893
        %1457 = vmatprep.subr.mxu0 %v900
        %1458 = vmatpush1.msra.mxu0 %v899
        %1459 = vmatprep.subr.mxu0 %v906
        %1460 = vmatpush1.msra.mxu0 %v905
        %1461 = vmatprep.subr.mxu0 %v912
        %1462 = vmatpush1.msra.mxu0 %v911
        %1463 = vmatprep.subr.mxu0 %v918
        %1464 = vmatpush1.msra.mxu0 %v917
        %1465 = vmatprep.subr.mxu0 %v924
        %1466 = vmatpush1.msra.mxu0 %v923
        %1467 = vmatprep.subr.mxu0 %v930
        %1468 = vmatpush1.msra.mxu0 %v929
        %1469 = vmatprep.subr.mxu0 %v936
        %1470 = vmatpush1.msra.mxu0 %v935
        %1471 = vmatprep.subr.mxu0 %v942
        %1472 = vmatpush1.msra.mxu0 %v941
        %1473 = vmatprep.subr.mxu0 %v948
        %1474 = vmatpush1.msra.mxu0 %v947
        %1475 = vmatprep.subr.mxu0 %v954
        %1476 = vmatpush1.msra.mxu0 %v953
        %1477 = vmatprep.subr.mxu0 %v960
        %1478 = vmatpush1.msra.mxu0 %v959
        %1479 = vmatprep.subr.mxu0 %v966
        %1480 = vmatpush1.msra.mxu0 %v965
        %1481 = vmatprep.subr.mxu0 %v972
        %1482 = vmatpush1.msra.mxu0 %v971
        %1483 = vmatprep.subr.mxu0 %v978
        %1484 = vmatpush1.msra.mxu0 %v977
        %1485 = vmatprep.subr.mxu0 %v984
        %1486 = vmatpush1.msra.mxu0 %v983
        %1487 = vmatprep.subr.mxu0 %v990
        %1488 = vmatpush1.msra.mxu0 %v989
        %1489 = vmatprep.subr.mxu0 %v996
        %1490 = vmatpush1.msra.mxu0 %v995
        %1491 = vmatprep.mubr.f32.mxu0 %v1271
        %1492 = vmatmul.mubr.f32.gmra.mrb[0].mxu0 %v1254
        %v1493 = vpop.f32.mrb[0].mxu0
        %v1494 = vadd.f32 0.0, %v1493
        %v1495 = vpop.f32.mrb[0].mxu0
        %v1496 = vadd.f32 0.0, %v1495
        %1497 = vdwg.mxu0
        %v1498 = vadd.f32 %v1277, %v1352
        %v1499 = vadd.f32 %v1278, %v1354
        %v1500 = vmul.f32 %v1498, 0.5
        %v1501 = vmul.f32 %v1499, 0.5
        %v1502 = vtanh.pop %v1500
        %v1503 = vtanh.pop %v1501
        %v1504 = vadd.f32 %v1502, 1.0
        %v1505 = vadd.f32 %v1503, 1.0
        %v1506 = vmul.f32 %v1504, 0.5
        %v1507 = vmul.f32 %v1505, 0.5
        %v1508 = vadd.f32 %v1423, %v1002
        %v1509 = vmul.f32 %v1506, %v1508
        %v1510 = vadd.f32 %v1279, %v1509
        %v1511 = vtanh.pop %v1510
        %v1512 = vsub.f32 %v1254, %v1511
        %v1513 = vmul.f32 %v1507, %v1512
        %v1514 = vadd.f32 %v1511, %v1513
        %v1515 = vadd.f32 %v1282, %v1425
        %v1516 = vadd.f32 %v1283, %v1494
        %v1517 = vmul.f32 %v1515, 0.5
        %v1518 = vmul.f32 %v1516, 0.5
        %v1519 = vtanh.pop %v1517
        %v1520 = vtanh.pop %v1518
        %v1521 = vadd.f32 %v1519, 1.0
        %v1522 = vadd.f32 %v1520, 1.0
        %v1523 = vmul.f32 %v1521, 0.5
        %v1524 = vmul.f32 %v1522, 0.5
        %v1525 = vadd.f32 %v1496, %v1009
        %v1526 = vmul.f32 %v1523, %v1525
        %v1527 = vadd.f32 %v1284, %v1526
        %v1528 = vtanh.pop %v1527
        %v1529 = vsub.f32 %v1271, %v1528
        %v1530 = vmul.f32 %v1524, %v1529
        %v1531 = vadd.f32 %v1528, %v1530
        %s1532 = scalar_lea.vmem %s395, 8 [#allocation8]
        %1533 = vst [vmem:[%s1532] sm:$0xff] %v1514
        %1534 = vst [vmem:[%s402] sm:$0xff] %v1531
        %1535 = vst [vmem:[#allocation4] sm:$0xff] %v1514
        %1536 = vst [vmem:[#allocation4 + $0x8] sm:$0xff] %v1531
        %s1537 = sand.u32 %s238, 1
        %s1538 = scalar_lea.sflag [#allocation7], %s1537
        %s1539 = sand.u32 %s238, 1
        %s1540 = smul.addr %s1539, 16
        %s1541 = scalar_lea.vmem [#allocation8], %s1540
        %s1542 = sand.u32 %s266, 1
        %s1543 = scalar_lea.sflag [#allocation10], %s1542
        %s1544 = sand.u32 %s266, 1
        %s1545 = smul.addr %s1544, 16
        %s1546 = scalar_lea.vmem [#allocation9], %s1545
        // Predicated region
        $region65: #{tpu_custom_call.1} parent=55 // pred_check
          %p1547 = pneg %p248
        $region66: #{tpu_custom_call.1} parent=55 // pred_check_branch
          %1549 = sbr.rel (%p1547) target = $region68
        $region67: #{tpu_custom_call.1} parent=55 // pred_region
          %s1550 = smul.u32 2, %s29
          %s1552 = ssub.s32 256, 256
          %1553 = vsyncadd %s1538, %s1552
          %s1554 = smul.addr %s1550, 128
          %s1555 = scalar_lea.hbm %s9, %s1554
          %s1556 = sshll.u32 %s1541, 4
          %s1557 = int_to_ptr.vmem [resolvable:$true] %s1556
          %1562 = dma.vmem_to_hbm [thread:$0]  %s1557, 256, %s1555, %s1538, 128, 128, 8
        $region68: #{tpu_custom_call.1} parent=55 // pred_fallthru
          _
        // Predicated region
        $region69: #{tpu_custom_call.1} parent=55 // pred_check
          %p1563 = pneg %p276
        $region70: #{tpu_custom_call.1} parent=55 // pred_check_branch
          %1565 = sbr.rel (%p1563) target = $region72
        $region71: #{tpu_custom_call.1} parent=55 // pred_region
          %s1566 = ssub.s32 3, %s29
          %s1567 = smul.u32 2, %s1566
          %s1569 = ssub.s32 256, 256
          %1570 = vsyncadd %s1543, %s1569
          %s1571 = smul.addr %s1567, 128
          %s1572 = scalar_lea.hbm %s10, %s1571
          %s1573 = sshll.u32 %s1546, 4
          %s1574 = int_to_ptr.vmem [resolvable:$true] %s1573
          %1579 = dma.vmem_to_hbm [thread:$0]  %s1574, 256, %s1572, %s1543, 128, 128, 8
        $region72: #{tpu_custom_call.1} parent=55 // pred_fallthru
          _
      $region56: #{tpu_custom_call.1} parent=5 // pred_fallthru
        _
      %p1580 = scmp.le.s32.totalorder 2, %s24
      // Predicated region
      $region73: #{tpu_custom_call.1} parent=5 // pred_check
        %p1581 = pneg %p1580
      $region74: #{tpu_custom_call.1} parent=5 // pred_check_branch
        %1583 = sbr.rel (%p1581) target = $region76
      $region75: #{tpu_custom_call.1} parent=5 // pred_region
        %s1584 = ssub.s32 %s24, 2
        // Predicated region
        $region77: #{tpu_custom_call.1} parent=75 // pred_check
          %p1585 = pneg %p254
        $region78: #{tpu_custom_call.1} parent=75 // pred_check_branch
          %1587 = sbr.rel (%p1585) target = $region80
        $region79: #{tpu_custom_call.1} parent=75 // pred_region
          %s1588 = sand.u32 %s239, 1
          %s1589 = scalar_lea.sflag [#allocation7], %s1588
          %s1590 = sand.u32 %s239, 1
          %s1591 = smul.addr %s1590, 16
          %s1592 = scalar_lea.vmem [#allocation8], %s1591
          %1593 = dma.done %s1589, 256
        $region80: #{tpu_custom_call.1} parent=75 // pred_fallthru
          _
        // Predicated region
        $region81: #{tpu_custom_call.1} parent=75 // pred_check
          %p1594 = pneg %p282
        $region82: #{tpu_custom_call.1} parent=75 // pred_check_branch
          %1596 = sbr.rel (%p1594) target = $region84
        $region83: #{tpu_custom_call.1} parent=75 // pred_region
          %s1597 = sand.u32 %s267, 1
          %s1598 = scalar_lea.sflag [#allocation10], %s1597
          %s1599 = sand.u32 %s267, 1
          %s1600 = smul.addr %s1599, 16
          %s1601 = scalar_lea.vmem [#allocation9], %s1600
          %1602 = dma.done %s1598, 256
        $region84: #{tpu_custom_call.1} parent=75 // pred_fallthru
          _
      $region76: #{tpu_custom_call.1} parent=5 // pred_fallthru
        _
    $region6: #{tpu_custom_call.1} parent=1 // loop_footer
      %s28 = sadd.s32 1, %s24
    $region7: #{tpu_custom_call.1} parent=1 // loop_footer_branch
      %23 = sbr.rel target = $region3
    $region8: #{tpu_custom_call.1} parent=1 // loop_exit
      _
    %1603 = vsyncpa [#allocation6], 1
    %s1604 = scalar_lea.sflag [#allocation6], 1
    %1605 = vsyncpa %s1604, 1
    %1606 = vsyncpa [#allocation7], 1
    %s1607 = scalar_lea.sflag [#allocation7], 1
    %1608 = vsyncpa %s1607, 1
    %1609 = vsyncpa [#allocation10], 1
    %s1610 = scalar_lea.sflag [#allocation10], 1
    %1611 = vsyncpa %s1610, 1

</llo_original>
